<compile_context>
chip_gen: v7x
topology: tpu7x:2x2x1
jax: 0.10.0
libtpu: 0.0.40
codegen_flags: <defaults>
</compile_context>

<pallas_src>
import functools

import jax
import jax.numpy as jnp
from jax.experimental import pallas as pl
from jax.experimental.pallas import tpu as pltpu

K = 5  # Conv1d kernel size (padding = 2 -> "same")


def _model_kernel(x_ref,                       # (Bb, T, E)    bf16
                  w13_ref, b13_ref,            # (K*E, 2H) bf16, (1, 2H) f32
                  w2_ref, b2_ref,              # (K*H, H) bf16,  (1, H) f32
                  w4_ref, b4_ref,              # (K*H, H) bf16,  (1, H) f32
                  emo_emb_ref,                 # (Bb, T, H)  f32
                  emo_mean_ref,                # (Bb, H)     f32
                  spkr_mean_ref,               # (Bb, H)     f32
                  pad_e, col_e, pad_h, col_h): # bf16 scratch
    Bb, T, E = x_ref.shape
    H = w2_ref.shape[-1]

    # Zero only the 4 halo rows (2 top / 2 bottom) of each pad scratch.  Done
    # every iteration so it is correct under megacore sharding of the batch
    # grid axis (each core owns its own scratch instance).
    zeros_e = jnp.zeros((Bb, 2, E), jnp.bfloat16)
    zeros_h = jnp.zeros((Bb, 2, H), jnp.bfloat16)
    pad_e[:, 0:2, :] = zeros_e
    pad_e[:, T + 2:T + 4, :] = zeros_e
    pad_h[:, 0:2, :] = zeros_h
    pad_h[:, T + 2:T + 4, :] = zeros_h

    def conv_relu(pad_ref, col_ref, x_btc_bf16, w_ref, b_ref):
        """'same' conv (kernel=5, pad=2) + ReLU via im2col + one MXU matmul."""
        C = pad_ref.shape[-1]
        pad_ref[:, 2:2 + T, :] = x_btc_bf16            # interior rows only
        for k in range(K):                             # static unroll (K=5)
            # destination lane offset k*C is 128-aligned; sublane shift of the
            # source goes through the XLU (free slot vs. the MXU).
            col_ref[:, :, k * C:(k + 1) * C] = pad_ref[:, k:k + T, :]
        y = jnp.dot(col_ref[...].reshape(Bb * T, K * C), w_ref[...],
                    preferred_element_type=jnp.float32)
        return jnp.maximum(y + b_ref[...], 0.0)        # (Bb*T, C_out) f32

    # ---- fused layer 1: conv1 | conv3 share the same input ---------------
    y1 = conv_relu(pad_e, col_e, x_ref[...], w13_ref, b13_ref)   # (Bb*T, 2H)

    # ---- emotion branch: conv2 -> relu -> mean over time -----------------
    h = conv_relu(pad_h, col_h,
                  y1[:, :H].reshape(Bb, T, H).astype(jnp.bfloat16),
                  w2_ref, b2_ref)                                # (Bb*T, H)
    h3 = h.reshape(Bb, T, H)
    emo_emb_ref[...] = h3                                        # lane-dense
    emo_mean_ref[...] = jnp.mean(h3, axis=1)

    # ---- speaker branch (gradient reversal == identity in forward) -------
    s = conv_relu(pad_h, col_h,
                  y1[:, H:].reshape(Bb, T, H).astype(jnp.bfloat16),
                  w4_ref, b4_ref)                                # (Bb*T, H)
    spkr_mean_ref[...] = jnp.mean(s.reshape(Bb, T, H), axis=1)


@functools.partial(jax.jit, static_argnames=("block_batch",))
def wav2vec_model_pallas(embedded, params, block_batch=8):
    """embedded: (B, T, E) float32 = sum of wav2vec hidden states."""
    B, T, E = embedded.shape
    H = params["b2"].shape[-1]

    # largest divisor of B that is <= block_batch
    Bb = max(bb for bb in range(1, min(B, block_batch) + 1) if B % bb == 0)

    # Fuse layer-1 weights (conv1 | conv3) and pre-reshape all conv weights to
    # im2col 2-D form (K*C_in, C_out); cast MXU operands to bf16.
    w13 = jnp.concatenate([params["w1"], params["w3"]], axis=-1)     # (K,E,2H)
    w13 = w13.reshape(K * E, 2 * H).astype(jnp.bfloat16)
    b13 = jnp.concatenate([params["b1"], params["b3"]], axis=-1)     # (1,2H)
    w2 = params["w2"].reshape(K * H, H).astype(jnp.bfloat16)
    w4 = params["w4"].reshape(K * H, H).astype(jnp.bfloat16)
    b2, b4 = params["b2"], params["b4"]

    x_bf16 = embedded.astype(jnp.bfloat16)

    grid_spec = pltpu.PrefetchScalarGridSpec(
        num_scalar_prefetch=0,
        grid=(B // Bb,),
        in_specs=[
            pl.BlockSpec((Bb, T, E), lambda b: (b, 0, 0)),    # embedded (bf16)
            pl.BlockSpec((K * E, 2 * H), lambda b: (0, 0)),   # w13
            pl.BlockSpec((1, 2 * H), lambda b: (0, 0)),       # b13
            pl.BlockSpec((K * H, H), lambda b: (0, 0)),       # w2
            pl.BlockSpec((1, H), lambda b: (0, 0)),           # b2
            pl.BlockSpec((K * H, H), lambda b: (0, 0)),       # w4
            pl.BlockSpec((1, H), lambda b: (0, 0)),           # b4
        ],
        out_specs=[
            pl.BlockSpec((Bb, T, H), lambda b: (b, 0, 0)),    # emo_embedded
            pl.BlockSpec((Bb, H), lambda b: (b, 0)),          # emo mean
            pl.BlockSpec((Bb, H), lambda b: (b, 0)),          # spkr mean
        ],
        scratch_shapes=[
            pltpu.VMEM((Bb, T + K - 1, E), jnp.bfloat16),     # pad_e
            pltpu.VMEM((Bb, T, K * E), jnp.bfloat16),         # col_e
            pltpu.VMEM((Bb, T + K - 1, H), jnp.bfloat16),     # pad_h
            pltpu.VMEM((Bb, T, K * H), jnp.bfloat16),         # col_h
        ],
    )

    emo_emb, emo_mean, spkr_mean = pl.pallas_call(
        _model_kernel,
        grid_spec=grid_spec,
        out_shape=[
            jax.ShapeDtypeStruct((B, T, H), jnp.float32),
            jax.ShapeDtypeStruct((B, H), jnp.float32),
            jax.ShapeDtypeStruct((B, H), jnp.float32),
        ],
        compiler_params=pltpu.CompilerParams(
            dimension_semantics=("parallel",)),               # v7x: 2 TCs
    )(x_bf16, w13, b13, w2, b2, w4, b4)

    # Tiny M=B head linears: done in plain XLA (keeps M=1 MXU pushes and
    # sub-128-lane masked writebacks out of the kernel; fuses under this jit).
    out_emo = emo_mean @ params["w_out"] + params["b_out"]
    out_spkr = spkr_mean @ params["w_spkr"] + params["b_spkr"]
    emo_hidden = emo_mean
    return out_emo, out_spkr, emo_hidden, emo_emb


# -------------------------- plain-JAX reference --------------------------
def _bf16(x):
    # mirror the kernel's bf16 MXU inputs (f32 accumulation)
    return x.astype(jnp.bfloat16).astype(jnp.float32)


def _conv1d_same_relu_ref(x_btc, w_kio, b):
    T = x_btc.shape[1]
    xp = jnp.pad(_bf16(x_btc), ((0, 0), (2, 2), (0, 0)))
    w = _bf16(w_kio)
    out = sum(jnp.einsum("btc,co->bto", xp[:, k:k + T, :], w[k],
                         preferred_element_type=jnp.float32)
              for k in range(K))
    return jnp.maximum(out + b, 0.0)


def wav2vec_model_ref(embedded, p):
    h = _conv1d_same_relu_ref(embedded, p["w1"], p["b1"])
    h = _conv1d_same_relu_ref(h, p["w2"], p["b2"])
    emo_emb = h
    emo_hidden = jnp.mean(h, axis=1)
    out_emo = emo_hidden @ p["w_out"] + p["b_out"]
    s = _conv1d_same_relu_ref(embedded, p["w3"], p["b3"])
    s = _conv1d_same_relu_ref(s, p["w4"], p["b4"])
    hidden_spkr = jnp.mean(s, axis=1)
    out_spkr = hidden_spkr @ p["w_spkr"] + p["b_spkr"]
    return out_emo, out_spkr, emo_hidden, emo_emb


if __name__ == "__main__":
    # Small, forward-consistent shapes (lane-aligned channel dims).
    B, T, FRAME = 16, 16, 8           # batch, wav2vec frames, samples/frame
    E, H = 128, 128                   # wav2vec hidden_size, hidden_dim_emo
    DOUT, NSPK = 8, 10                # output_dim, speaker classes
    N_LAYERS = 3                      # stand-in wav2vec hidden_states layers

    key = jax.random.PRNGKey(0)
    ks = jax.random.split(key, 16)

    # raw audio, shaped (1, B, S) so that .squeeze(0) semantics apply
    aud = jax.random.normal(ks[0], (1, B, T * FRAME), dtype=jnp.float32)
    alpha = 0.5  # only used by the (backward-only) gradient reversal layer

    # stand-in wav2vec parameters (glue)
    w2v_w = jax.random.normal(ks[1], (N_LAYERS, FRAME, E), jnp.float32) * 0.2
    w2v_b = jax.random.normal(ks[2], (N_LAYERS, 1, 1, E), jnp.float32) * 0.1

    params = {
        "w1": jax.random.normal(ks[3], (K, E, H), jnp.float32) * 0.1,
        "b1": jax.random.normal(ks[4], (1, H), jnp.float32) * 0.1,
        "w2": jax.random.normal(ks[5], (K, H, H), jnp.float32) * 0.1,
        "b2": jax.random.normal(ks[6], (1, H), jnp.float32) * 0.1,
        "w3": jax.random.normal(ks[7], (K, E, H), jnp.float32) * 0.1,
        "b3": jax.random.normal(ks[8], (1, H), jnp.float32) * 0.1,
        "w4": jax.random.normal(ks[9], (K, H, H), jnp.float32) * 0.1,
        "b4": jax.random.normal(ks[10], (1, H), jnp.float32) * 0.1,
        "w_out": jax.random.normal(ks[11], (H, DOUT), jnp.float32) * 0.1,
        "b_out": jax.random.normal(ks[12], (1, DOUT), jnp.float32) * 0.1,
        "w_spkr": jax.random.normal(ks[13], (H, NSPK), jnp.float32) * 0.1,
        "b_spkr": jax.random.normal(ks[14], (1, NSPK), jnp.float32) * 0.1,
    }

    # ---- glue: aud.squeeze(0); stand-in wav2vec; sum(hidden_states) -----
    aud_sq = aud[0]                                   # (B, S)
    frames = aud_sq.reshape(B, T, FRAME)              # (B, T, FRAME)
    hidden_all = [jnp.tanh(frames @ w2v_w[l] + w2v_b[l]) for l in range(N_LAYERS)]
    embedded = sum(hidden_all)                        # (B, T, E)

    # ---- Pallas kernel ---------------------------------------------------
    out_emo, out_spkr, emo_hidden, emo_emb = jax.block_until_ready(
        wav2vec_model_pallas(embedded, params, block_batch=8))

    # ---- sanity check against plain-JAX reference ------------------------
    r_emo, r_spkr, r_hidden, r_emb = wav2vec_model_ref(embedded, params)
    assert out_emo.shape == (B, DOUT)
    assert out_spkr.shape == (B, NSPK)
    assert emo_hidden.shape == (B, H)
    assert emo_emb.shape == (B, T, H)
    for a, b in ((out_emo, r_emo), (out_spkr, r_spkr),
                 (emo_hidden, r_hidden), (emo_emb, r_emb)):
        assert jnp.allclose(a, b, atol=5e-3, rtol=5e-3)

    print("KERNEL_OK")
</pallas_src>

<mosaic_0001>
module attributes {stable_mosaic.version = 11 : i64} {
  func.func @_model_kernel(%arg0: i32, %arg1: memref<8x16x128xbf16, #tpu.memory_space<vmem>>, %arg2: memref<640x256xbf16, #tpu.memory_space<vmem>>, %arg3: memref<1x256xf32, #tpu.memory_space<vmem>>, %arg4: memref<640x128xbf16, #tpu.memory_space<vmem>>, %arg5: memref<1x128xf32, #tpu.memory_space<vmem>>, %arg6: memref<640x128xbf16, #tpu.memory_space<vmem>>, %arg7: memref<1x128xf32, #tpu.memory_space<vmem>>, %arg8: memref<8x16x128xf32, #tpu.memory_space<vmem>>, %arg9: memref<8x128xf32, #tpu.memory_space<vmem>>, %arg10: memref<8x128xf32, #tpu.memory_space<vmem>>, %arg11: memref<8x20x128xbf16, #tpu.memory_space<vmem>>, %arg12: memref<8x16x640xbf16, #tpu.memory_space<vmem>>, %arg13: memref<8x20x128xbf16, #tpu.memory_space<vmem>>, %arg14: memref<8x16x640xbf16, #tpu.memory_space<vmem>>) attributes {dimension_semantics = [#tpu.dimension_semantics<parallel>], iteration_bounds = array<i64: 2>, scalar_prefetch = 0 : i64, scratch_operands = 4 : i64, tpu.core_type = #tpu.core_type<tc>, window_params = [{transform_indices = @transform_0, window_bounds = array<i64: 8, 16, 128>}, {pipeline_mode = #tpu.pipeline_mode<synchronous>, transform_indices = @transform_1, window_bounds = array<i64: 640, 256>}, {pipeline_mode = #tpu.pipeline_mode<synchronous>, transform_indices = @transform_2, window_bounds = array<i64: 1, 256>}, {pipeline_mode = #tpu.pipeline_mode<synchronous>, transform_indices = @transform_3, window_bounds = array<i64: 640, 128>}, {pipeline_mode = #tpu.pipeline_mode<synchronous>, transform_indices = @transform_4, window_bounds = array<i64: 1, 128>}, {pipeline_mode = #tpu.pipeline_mode<synchronous>, transform_indices = @transform_5, window_bounds = array<i64: 640, 128>}, {pipeline_mode = #tpu.pipeline_mode<synchronous>, transform_indices = @transform_6, window_bounds = array<i64: 1, 128>}, {transform_indices = @transform_7, window_bounds = array<i64: 8, 16, 128>}, {transform_indices = @transform_8, window_bounds = array<i64: 8, 128>}, {transform_indices = @transform_9, window_bounds = array<i64: 8, 128>}]} {
    %cst = arith.constant 0.000000e+00 : bf16
    %0 = vector.broadcast %cst : bf16 to vector<8x2x128xbf16>
    %cst_0 = arith.constant 0.000000e+00 : bf16
    %1 = vector.broadcast %cst_0 : bf16 to vector<8x2x128xbf16>
    %c0 = arith.constant 0 : index
    %c0_1 = arith.constant 0 : index
    %c0_2 = arith.constant 0 : index
    %2 = vector.load %arg11[%c0, %c0_1, %c0_2] : memref<8x20x128xbf16, #tpu.memory_space<vmem>>, vector<8x2x128xbf16>
    tpu.vector_store %arg11[%c0, %c0_1, %c0_2], %0 {strides = array<i32>} : memref<8x20x128xbf16, #tpu.memory_space<vmem>>, vector<8x2x128xbf16>,
    %c0_3 = arith.constant 0 : index
    %c18 = arith.constant 18 : index
    %c0_4 = arith.constant 0 : index
    %3 = vector.load %arg11[%c0_3, %c18, %c0_4] : memref<8x20x128xbf16, #tpu.memory_space<vmem>>, vector<8x2x128xbf16>
    tpu.vector_store %arg11[%c0_3, %c18, %c0_4], %0 {strides = array<i32>} : memref<8x20x128xbf16, #tpu.memory_space<vmem>>, vector<8x2x128xbf16>,
    %c0_5 = arith.constant 0 : index
    %c0_6 = arith.constant 0 : index
    %c0_7 = arith.constant 0 : index
    %4 = vector.load %arg13[%c0_5, %c0_6, %c0_7] : memref<8x20x128xbf16, #tpu.memory_space<vmem>>, vector<8x2x128xbf16>
    tpu.vector_store %arg13[%c0_5, %c0_6, %c0_7], %1 {strides = array<i32>} : memref<8x20x128xbf16, #tpu.memory_space<vmem>>, vector<8x2x128xbf16>,
    %c0_8 = arith.constant 0 : index
    %c18_9 = arith.constant 18 : index
    %c0_10 = arith.constant 0 : index
    %5 = vector.load %arg13[%c0_8, %c18_9, %c0_10] : memref<8x20x128xbf16, #tpu.memory_space<vmem>>, vector<8x2x128xbf16>
    tpu.vector_store %arg13[%c0_8, %c18_9, %c0_10], %1 {strides = array<i32>} : memref<8x20x128xbf16, #tpu.memory_space<vmem>>, vector<8x2x128xbf16>,
    %c0_11 = arith.constant 0 : index
    %c0_12 = arith.constant 0 : index
    %c0_13 = arith.constant 0 : index
    %6 = vector.load %arg1[%c0_11, %c0_12, %c0_13] : memref<8x16x128xbf16, #tpu.memory_space<vmem>>, vector<8x16x128xbf16>
    %c0_14 = arith.constant 0 : index
    %c2 = arith.constant 2 : index
    %c0_15 = arith.constant 0 : index
    %7 = vector.load %arg11[%c0_14, %c2, %c0_15] : memref<8x20x128xbf16, #tpu.memory_space<vmem>>, vector<8x16x128xbf16>
    tpu.vector_store %arg11[%c0_14, %c2, %c0_15], %6 {strides = array<i32>} : memref<8x20x128xbf16, #tpu.memory_space<vmem>>, vector<8x16x128xbf16>,
    %c0_16 = arith.constant 0 : index
    %c0_17 = arith.constant 0 : index
    %c0_18 = arith.constant 0 : index
    %8 = vector.load %arg11[%c0_16, %c0_17, %c0_18] : memref<8x20x128xbf16, #tpu.memory_space<vmem>>, vector<8x16x128xbf16>
    %c0_19 = arith.constant 0 : index
    %c0_20 = arith.constant 0 : index
    %c0_21 = arith.constant 0 : index
    %9 = vector.load %arg12[%c0_19, %c0_20, %c0_21] : memref<8x16x640xbf16, #tpu.memory_space<vmem>>, vector<8x16x128xbf16>
    tpu.vector_store %arg12[%c0_19, %c0_20, %c0_21], %8 {strides = array<i32>} : memref<8x16x640xbf16, #tpu.memory_space<vmem>>, vector<8x16x128xbf16>,
    %c0_22 = arith.constant 0 : index
    %c1 = arith.constant 1 : index
    %c0_23 = arith.constant 0 : index
    %10 = vector.load %arg11[%c0_22, %c1, %c0_23] : memref<8x20x128xbf16, #tpu.memory_space<vmem>>, vector<8x16x128xbf16>
    %c0_24 = arith.constant 0 : index
    %c0_25 = arith.constant 0 : index
    %c128 = arith.constant 128 : index
    %11 = vector.load %arg12[%c0_24, %c0_25, %c128] : memref<8x16x640xbf16, #tpu.memory_space<vmem>>, vector<8x16x128xbf16>
    tpu.vector_store %arg12[%c0_24, %c0_25, %c128], %10 {strides = array<i32>} : memref<8x16x640xbf16, #tpu.memory_space<vmem>>, vector<8x16x128xbf16>,
    %c0_26 = arith.constant 0 : index
    %c2_27 = arith.constant 2 : index
    %c0_28 = arith.constant 0 : index
    %12 = vector.load %arg11[%c0_26, %c2_27, %c0_28] : memref<8x20x128xbf16, #tpu.memory_space<vmem>>, vector<8x16x128xbf16>
    %c0_29 = arith.constant 0 : index
    %c0_30 = arith.constant 0 : index
    %c256 = arith.constant 256 : index
    %13 = vector.load %arg12[%c0_29, %c0_30, %c256] : memref<8x16x640xbf16, #tpu.memory_space<vmem>>, vector<8x16x128xbf16>
    tpu.vector_store %arg12[%c0_29, %c0_30, %c256], %12 {strides = array<i32>} : memref<8x16x640xbf16, #tpu.memory_space<vmem>>, vector<8x16x128xbf16>,
    %c0_31 = arith.constant 0 : index
    %c3 = arith.constant 3 : index
    %c0_32 = arith.constant 0 : index
    %14 = vector.load %arg11[%c0_31, %c3, %c0_32] : memref<8x20x128xbf16, #tpu.memory_space<vmem>>, vector<8x16x128xbf16>
    %c0_33 = arith.constant 0 : index
    %c0_34 = arith.constant 0 : index
    %c384 = arith.constant 384 : index
    %15 = vector.load %arg12[%c0_33, %c0_34, %c384] : memref<8x16x640xbf16, #tpu.memory_space<vmem>>, vector<8x16x128xbf16>
    tpu.vector_store %arg12[%c0_33, %c0_34, %c384], %14 {strides = array<i32>} : memref<8x16x640xbf16, #tpu.memory_space<vmem>>, vector<8x16x128xbf16>,
    %c0_35 = arith.constant 0 : index
    %c4 = arith.constant 4 : index
    %c0_36 = arith.constant 0 : index
    %16 = vector.load %arg11[%c0_35, %c4, %c0_36] : memref<8x20x128xbf16, #tpu.memory_space<vmem>>, vector<8x16x128xbf16>
    %c0_37 = arith.constant 0 : index
    %c0_38 = arith.constant 0 : index
    %c512 = arith.constant 512 : index
    %17 = vector.load %arg12[%c0_37, %c0_38, %c512] : memref<8x16x640xbf16, #tpu.memory_space<vmem>>, vector<8x16x128xbf16>
    tpu.vector_store %arg12[%c0_37, %c0_38, %c512], %16 {strides = array<i32>} : memref<8x16x640xbf16, #tpu.memory_space<vmem>>, vector<8x16x128xbf16>,
    %c0_39 = arith.constant 0 : index
    %c0_40 = arith.constant 0 : index
    %c0_41 = arith.constant 0 : index
    %18 = vector.load %arg12[%c0_39, %c0_40, %c0_41] : memref<8x16x640xbf16, #tpu.memory_space<vmem>>, vector<8x16x640xbf16>
    %19 = vector.shape_cast %18 : vector<8x16x640xbf16> to vector<128x640xbf16>
    %c0_42 = arith.constant 0 : index
    %c0_43 = arith.constant 0 : index
    %20 = vector.load %arg2[%c0_42, %c0_43] : memref<640x256xbf16, #tpu.memory_space<vmem>>, vector<640x256xbf16>
    %cst_44 = arith.constant dense<0.000000e+00> : vector<128x256xf32>
    %21 = tpu.matmul %19, %20, %cst_44 {dimension_numbers = #tpu.dot_dimension_numbers<[1], [0], [0], [1], [0, 0, 1, 1], [], []>} : vector<128x640xbf16>, vector<640x256xbf16>, vector<128x256xf32> -> vector<128x256xf32>
    %c0_45 = arith.constant 0 : index
    %c0_46 = arith.constant 0 : index
    %22 = vector.load %arg3[%c0_45, %c0_46] : memref<1x256xf32, #tpu.memory_space<vmem>>, vector<1x256xf32>
    %23 = vector.broadcast %22 : vector<1x256xf32> to vector<128x256xf32>
    %24 = arith.addf %21, %23 : vector<128x256xf32>
    %cst_47 = arith.constant 0.000000e+00 : f32
    %25 = vector.broadcast %cst_47 : f32 to vector<128x256xf32>
    %26 = arith.maximumf %24, %25 : vector<128x256xf32>
    %27 = vector.extract_strided_slice %26 {offsets = [0, 0], sizes = [128, 128], strides = [1, 1]} : vector<128x256xf32> to vector<128x128xf32>
    %28 = vector.shape_cast %27 : vector<128x128xf32> to vector<8x16x128xf32>
    %29 = arith.truncf %28 : vector<8x16x128xf32> to vector<8x16x128xbf16>
    %c0_48 = arith.constant 0 : index
    %c2_49 = arith.constant 2 : index
    %c0_50 = arith.constant 0 : index
    %30 = vector.load %arg13[%c0_48, %c2_49, %c0_50] : memref<8x20x128xbf16, #tpu.memory_space<vmem>>, vector<8x16x128xbf16>
    tpu.vector_store %arg13[%c0_48, %c2_49, %c0_50], %29 {strides = array<i32>} : memref<8x20x128xbf16, #tpu.memory_space<vmem>>, vector<8x16x128xbf16>,
    %c0_51 = arith.constant 0 : index
    %c0_52 = arith.constant 0 : index
    %c0_53 = arith.constant 0 : index
    %31 = vector.load %arg13[%c0_51, %c0_52, %c0_53] : memref<8x20x128xbf16, #tpu.memory_space<vmem>>, vector<8x16x128xbf16>
    %c0_54 = arith.constant 0 : index
    %c0_55 = arith.constant 0 : index
    %c0_56 = arith.constant 0 : index
    %32 = vector.load %arg14[%c0_54, %c0_55, %c0_56] : memref<8x16x640xbf16, #tpu.memory_space<vmem>>, vector<8x16x128xbf16>
    tpu.vector_store %arg14[%c0_54, %c0_55, %c0_56], %31 {strides = array<i32>} : memref<8x16x640xbf16, #tpu.memory_space<vmem>>, vector<8x16x128xbf16>,
    %c0_57 = arith.constant 0 : index
    %c1_58 = arith.constant 1 : index
    %c0_59 = arith.constant 0 : index
    %33 = vector.load %arg13[%c0_57, %c1_58, %c0_59] : memref<8x20x128xbf16, #tpu.memory_space<vmem>>, vector<8x16x128xbf16>
    %c0_60 = arith.constant 0 : index
    %c0_61 = arith.constant 0 : index
    %c128_62 = arith.constant 128 : index
    %34 = vector.load %arg14[%c0_60, %c0_61, %c128_62] : memref<8x16x640xbf16, #tpu.memory_space<vmem>>, vector<8x16x128xbf16>
    tpu.vector_store %arg14[%c0_60, %c0_61, %c128_62], %33 {strides = array<i32>} : memref<8x16x640xbf16, #tpu.memory_space<vmem>>, vector<8x16x128xbf16>,
    %c0_63 = arith.constant 0 : index
    %c2_64 = arith.constant 2 : index
    %c0_65 = arith.constant 0 : index
    %35 = vector.load %arg13[%c0_63, %c2_64, %c0_65] : memref<8x20x128xbf16, #tpu.memory_space<vmem>>, vector<8x16x128xbf16>
    %c0_66 = arith.constant 0 : index
    %c0_67 = arith.constant 0 : index
    %c256_68 = arith.constant 256 : index
    %36 = vector.load %arg14[%c0_66, %c0_67, %c256_68] : memref<8x16x640xbf16, #tpu.memory_space<vmem>>, vector<8x16x128xbf16>
    tpu.vector_store %arg14[%c0_66, %c0_67, %c256_68], %35 {strides = array<i32>} : memref<8x16x640xbf16, #tpu.memory_space<vmem>>, vector<8x16x128xbf16>,
    %c0_69 = arith.constant 0 : index
    %c3_70 = arith.constant 3 : index
    %c0_71 = arith.constant 0 : index
    %37 = vector.load %arg13[%c0_69, %c3_70, %c0_71] : memref<8x20x128xbf16, #tpu.memory_space<vmem>>, vector<8x16x128xbf16>
    %c0_72 = arith.constant 0 : index
    %c0_73 = arith.constant 0 : index
    %c384_74 = arith.constant 384 : index
    %38 = vector.load %arg14[%c0_72, %c0_73, %c384_74] : memref<8x16x640xbf16, #tpu.memory_space<vmem>>, vector<8x16x128xbf16>
    tpu.vector_store %arg14[%c0_72, %c0_73, %c384_74], %37 {strides = array<i32>} : memref<8x16x640xbf16, #tpu.memory_space<vmem>>, vector<8x16x128xbf16>,
    %c0_75 = arith.constant 0 : index
    %c4_76 = arith.constant 4 : index
    %c0_77 = arith.constant 0 : index
    %39 = vector.load %arg13[%c0_75, %c4_76, %c0_77] : memref<8x20x128xbf16, #tpu.memory_space<vmem>>, vector<8x16x128xbf16>
    %c0_78 = arith.constant 0 : index
    %c0_79 = arith.constant 0 : index
    %c512_80 = arith.constant 512 : index
    %40 = vector.load %arg14[%c0_78, %c0_79, %c512_80] : memref<8x16x640xbf16, #tpu.memory_space<vmem>>, vector<8x16x128xbf16>
    tpu.vector_store %arg14[%c0_78, %c0_79, %c512_80], %39 {strides = array<i32>} : memref<8x16x640xbf16, #tpu.memory_space<vmem>>, vector<8x16x128xbf16>,
    %c0_81 = arith.constant 0 : index
    %c0_82 = arith.constant 0 : index
    %c0_83 = arith.constant 0 : index
    %41 = vector.load %arg14[%c0_81, %c0_82, %c0_83] : memref<8x16x640xbf16, #tpu.memory_space<vmem>>, vector<8x16x640xbf16>
    %42 = vector.shape_cast %41 : vector<8x16x640xbf16> to vector<128x640xbf16>
    %c0_84 = arith.constant 0 : index
    %c0_85 = arith.constant 0 : index
    %43 = vector.load %arg4[%c0_84, %c0_85] : memref<640x128xbf16, #tpu.memory_space<vmem>>, vector<640x128xbf16>
    %cst_86 = arith.constant dense<0.000000e+00> : vector<128x128xf32>
    %44 = tpu.matmul %42, %43, %cst_86 {dimension_numbers = #tpu.dot_dimension_numbers<[1], [0], [0], [1], [0, 0, 1, 1], [], []>} : vector<128x640xbf16>, vector<640x128xbf16>, vector<128x128xf32> -> vector<128x128xf32>
    %c0_87 = arith.constant 0 : index
    %c0_88 = arith.constant 0 : index
    %45 = vector.load %arg5[%c0_87, %c0_88] : memref<1x128xf32, #tpu.memory_space<vmem>>, vector<1x128xf32>
    %46 = vector.broadcast %45 : vector<1x128xf32> to vector<128x128xf32>
    %47 = arith.addf %44, %46 : vector<128x128xf32>
    %cst_89 = arith.constant 0.000000e+00 : f32
    %48 = vector.broadcast %cst_89 : f32 to vector<128x128xf32>
    %49 = arith.maximumf %47, %48 : vector<128x128xf32>
    %50 = vector.shape_cast %49 : vector<128x128xf32> to vector<8x16x128xf32>
    %c0_90 = arith.constant 0 : index
    %c0_91 = arith.constant 0 : index
    %c0_92 = arith.constant 0 : index
    %51 = vector.load %arg8[%c0_90, %c0_91, %c0_92] : memref<8x16x128xf32, #tpu.memory_space<vmem>>, vector<8x16x128xf32>
    tpu.vector_store %arg8[%c0_90, %c0_91, %c0_92], %50 {strides = array<i32>} : memref<8x16x128xf32, #tpu.memory_space<vmem>>, vector<8x16x128xf32>,
    %cst_93 = arith.constant dense<0.000000e+00> : vector<8x128xf32>
    %52 = vector.multi_reduction <add>, %50, %cst_93 [1] : vector<8x16x128xf32> to vector<8x128xf32>
    %cst_94 = arith.constant 1.600000e+01 : f32
    %53 = vector.broadcast %cst_94 : f32 to vector<8x128xf32>
    %54 = arith.divf %52, %53 : vector<8x128xf32>
    %c0_95 = arith.constant 0 : index
    %c0_96 = arith.constant 0 : index
    %55 = vector.load %arg9[%c0_95, %c0_96] : memref<8x128xf32, #tpu.memory_space<vmem>>, vector<8x128xf32>
    tpu.vector_store %arg9[%c0_95, %c0_96], %54 {strides = array<i32>} : memref<8x128xf32, #tpu.memory_space<vmem>>, vector<8x128xf32>,
    %56 = vector.extract_strided_slice %26 {offsets = [0, 128], sizes = [128, 128], strides = [1, 1]} : vector<128x256xf32> to vector<128x128xf32>
    %57 = vector.shape_cast %56 : vector<128x128xf32> to vector<8x16x128xf32>
    %58 = arith.truncf %57 : vector<8x16x128xf32> to vector<8x16x128xbf16>
    %c0_97 = arith.constant 0 : index
    %c2_98 = arith.constant 2 : index
    %c0_99 = arith.constant 0 : index
    %59 = vector.load %arg13[%c0_97, %c2_98, %c0_99] : memref<8x20x128xbf16, #tpu.memory_space<vmem>>, vector<8x16x128xbf16>
    tpu.vector_store %arg13[%c0_97, %c2_98, %c0_99], %58 {strides = array<i32>} : memref<8x20x128xbf16, #tpu.memory_space<vmem>>, vector<8x16x128xbf16>,
    %c0_100 = arith.constant 0 : index
    %c0_101 = arith.constant 0 : index
    %c0_102 = arith.constant 0 : index
    %60 = vector.load %arg13[%c0_100, %c0_101, %c0_102] : memref<8x20x128xbf16, #tpu.memory_space<vmem>>, vector<8x16x128xbf16>
    %c0_103 = arith.constant 0 : index
    %c0_104 = arith.constant 0 : index
    %c0_105 = arith.constant 0 : index
    %61 = vector.load %arg14[%c0_103, %c0_104, %c0_105] : memref<8x16x640xbf16, #tpu.memory_space<vmem>>, vector<8x16x128xbf16>
    tpu.vector_store %arg14[%c0_103, %c0_104, %c0_105], %60 {strides = array<i32>} : memref<8x16x640xbf16, #tpu.memory_space<vmem>>, vector<8x16x128xbf16>,
    %c0_106 = arith.constant 0 : index
    %c1_107 = arith.constant 1 : index
    %c0_108 = arith.constant 0 : index
    %62 = vector.load %arg13[%c0_106, %c1_107, %c0_108] : memref<8x20x128xbf16, #tpu.memory_space<vmem>>, vector<8x16x128xbf16>
    %c0_109 = arith.constant 0 : index
    %c0_110 = arith.constant 0 : index
    %c128_111 = arith.constant 128 : index
    %63 = vector.load %arg14[%c0_109, %c0_110, %c128_111] : memref<8x16x640xbf16, #tpu.memory_space<vmem>>, vector<8x16x128xbf16>
    tpu.vector_store %arg14[%c0_109, %c0_110, %c128_111], %62 {strides = array<i32>} : memref<8x16x640xbf16, #tpu.memory_space<vmem>>, vector<8x16x128xbf16>,
    %c0_112 = arith.constant 0 : index
    %c2_113 = arith.constant 2 : index
    %c0_114 = arith.constant 0 : index
    %64 = vector.load %arg13[%c0_112, %c2_113, %c0_114] : memref<8x20x128xbf16, #tpu.memory_space<vmem>>, vector<8x16x128xbf16>
    %c0_115 = arith.constant 0 : index
    %c0_116 = arith.constant 0 : index
    %c256_117 = arith.constant 256 : index
    %65 = vector.load %arg14[%c0_115, %c0_116, %c256_117] : memref<8x16x640xbf16, #tpu.memory_space<vmem>>, vector<8x16x128xbf16>
    tpu.vector_store %arg14[%c0_115, %c0_116, %c256_117], %64 {strides = array<i32>} : memref<8x16x640xbf16, #tpu.memory_space<vmem>>, vector<8x16x128xbf16>,
    %c0_118 = arith.constant 0 : index
    %c3_119 = arith.constant 3 : index
    %c0_120 = arith.constant 0 : index
    %66 = vector.load %arg13[%c0_118, %c3_119, %c0_120] : memref<8x20x128xbf16, #tpu.memory_space<vmem>>, vector<8x16x128xbf16>
    %c0_121 = arith.constant 0 : index
    %c0_122 = arith.constant 0 : index
    %c384_123 = arith.constant 384 : index
    %67 = vector.load %arg14[%c0_121, %c0_122, %c384_123] : memref<8x16x640xbf16, #tpu.memory_space<vmem>>, vector<8x16x128xbf16>
    tpu.vector_store %arg14[%c0_121, %c0_122, %c384_123], %66 {strides = array<i32>} : memref<8x16x640xbf16, #tpu.memory_space<vmem>>, vector<8x16x128xbf16>,
    %c0_124 = arith.constant 0 : index
    %c4_125 = arith.constant 4 : index
    %c0_126 = arith.constant 0 : index
    %68 = vector.load %arg13[%c0_124, %c4_125, %c0_126] : memref<8x20x128xbf16, #tpu.memory_space<vmem>>, vector<8x16x128xbf16>
    %c0_127 = arith.constant 0 : index
    %c0_128 = arith.constant 0 : index
    %c512_129 = arith.constant 512 : index
    %69 = vector.load %arg14[%c0_127, %c0_128, %c512_129] : memref<8x16x640xbf16, #tpu.memory_space<vmem>>, vector<8x16x128xbf16>
    tpu.vector_store %arg14[%c0_127, %c0_128, %c512_129], %68 {strides = array<i32>} : memref<8x16x640xbf16, #tpu.memory_space<vmem>>, vector<8x16x128xbf16>,
    %c0_130 = arith.constant 0 : index
    %c0_131 = arith.constant 0 : index
    %c0_132 = arith.constant 0 : index
    %70 = vector.load %arg14[%c0_130, %c0_131, %c0_132] : memref<8x16x640xbf16, #tpu.memory_space<vmem>>, vector<8x16x640xbf16>
    %71 = vector.shape_cast %70 : vector<8x16x640xbf16> to vector<128x640xbf16>
    %c0_133 = arith.constant 0 : index
    %c0_134 = arith.constant 0 : index
    %72 = vector.load %arg6[%c0_133, %c0_134] : memref<640x128xbf16, #tpu.memory_space<vmem>>, vector<640x128xbf16>
    %cst_135 = arith.constant dense<0.000000e+00> : vector<128x128xf32>
    %73 = tpu.matmul %71, %72, %cst_135 {dimension_numbers = #tpu.dot_dimension_numbers<[1], [0], [0], [1], [0, 0, 1, 1], [], []>} : vector<128x640xbf16>, vector<640x128xbf16>, vector<128x128xf32> -> vector<128x128xf32>
    %c0_136 = arith.constant 0 : index
    %c0_137 = arith.constant 0 : index
    %74 = vector.load %arg7[%c0_136, %c0_137] : memref<1x128xf32, #tpu.memory_space<vmem>>, vector<1x128xf32>
    %75 = vector.broadcast %74 : vector<1x128xf32> to vector<128x128xf32>
    %76 = arith.addf %73, %75 : vector<128x128xf32>
    %cst_138 = arith.constant 0.000000e+00 : f32
    %77 = vector.broadcast %cst_138 : f32 to vector<128x128xf32>
    %78 = arith.maximumf %76, %77 : vector<128x128xf32>
    %79 = vector.shape_cast %78 : vector<128x128xf32> to vector<8x16x128xf32>
    %cst_139 = arith.constant dense<0.000000e+00> : vector<8x128xf32>
    %80 = vector.multi_reduction <add>, %79, %cst_139 [1] : vector<8x16x128xf32> to vector<8x128xf32>
    %cst_140 = arith.constant 1.600000e+01 : f32
    %81 = vector.broadcast %cst_140 : f32 to vector<8x128xf32>
    %82 = arith.divf %80, %81 : vector<8x128xf32>
    %c0_141 = arith.constant 0 : index
    %c0_142 = arith.constant 0 : index
    %83 = vector.load %arg10[%c0_141, %c0_142] : memref<8x128xf32, #tpu.memory_space<vmem>>, vector<8x128xf32>
    tpu.vector_store %arg10[%c0_141, %c0_142], %82 {strides = array<i32>} : memref<8x128xf32, #tpu.memory_space<vmem>>, vector<8x128xf32>,
    return
  }
  func.func @transform_0(%arg0: i32) -> (i32, i32, i32) {
    %c0_i32 = arith.constant 0 : i32
    %c0_i32_0 = arith.constant 0 : i32
    %c0_i32_1 = arith.constant 0 : i32
    return %arg0, %c0_i32, %c0_i32_0 : i32, i32, i32
  }
  func.func @transform_1(%arg0: i32) -> (i32, i32) {
    %c0_i32 = arith.constant 0 : i32
    %c0_i32_0 = arith.constant 0 : i32
    %c0_i32_1 = arith.constant 0 : i32
    return %c0_i32, %c0_i32_0 : i32, i32
  }
  func.func @transform_2(%arg0: i32) -> (i32, i32) {
    %c0_i32 = arith.constant 0 : i32
    %c0_i32_0 = arith.constant 0 : i32
    %c0_i32_1 = arith.constant 0 : i32
    return %c0_i32, %c0_i32_0 : i32, i32
  }
  func.func @transform_3(%arg0: i32) -> (i32, i32) {
    %c0_i32 = arith.constant 0 : i32
    %c0_i32_0 = arith.constant 0 : i32
    %c0_i32_1 = arith.constant 0 : i32
    return %c0_i32, %c0_i32_0 : i32, i32
  }
  func.func @transform_4(%arg0: i32) -> (i32, i32) {
    %c0_i32 = arith.constant 0 : i32
    %c0_i32_0 = arith.constant 0 : i32
    %c0_i32_1 = arith.constant 0 : i32
    return %c0_i32, %c0_i32_0 : i32, i32
  }
  func.func @transform_5(%arg0: i32) -> (i32, i32) {
    %c0_i32 = arith.constant 0 : i32
    %c0_i32_0 = arith.constant 0 : i32
    %c0_i32_1 = arith.constant 0 : i32
    return %c0_i32, %c0_i32_0 : i32, i32
  }
  func.func @transform_6(%arg0: i32) -> (i32, i32) {
    %c0_i32 = arith.constant 0 : i32
    %c0_i32_0 = arith.constant 0 : i32
    %c0_i32_1 = arith.constant 0 : i32
    return %c0_i32, %c0_i32_0 : i32, i32
  }
  func.func @transform_7(%arg0: i32) -> (i32, i32, i32) {
    %c0_i32 = arith.constant 0 : i32
    %c0_i32_0 = arith.constant 0 : i32
    %c0_i32_1 = arith.constant 0 : i32
    return %arg0, %c0_i32, %c0_i32_0 : i32, i32, i32
  }
  func.func @transform_8(%arg0: i32) -> (i32, i32) {
    %c0_i32 = arith.constant 0 : i32
    %c0_i32_0 = arith.constant 0 : i32
    return %arg0, %c0_i32 : i32, i32
  }
  func.func @transform_9(%arg0: i32) -> (i32, i32) {
    %c0_i32 = arith.constant 0 : i32
    %c0_i32_0 = arith.constant 0 : i32
    return %arg0, %c0_i32 : i32, i32
  }
}

</mosaic_0001>

<llo_original>
// kernel: wav2vec_model_pallas.1
$region0: #{wav2vec_model_pallas.1}
  #allocation0 [shape = 'u32[]', space=smem, size = 0x4, offset = 0x4, fixed_abs, tag = 'smem constant byte address 0x4 - core index']
  #allocation1 [shape = 'u32[144,128]{1,0:T(1,128)}', space=vmem, size = 0x12000, scoped, tag = 'internal scratch']
  #allocation2 [shape = 'bf16[8,20,128]{2,1,0:T(8,128)(2,1)}', space=vmem, size = 0xc000, scoped, tag = 'scratch operand']
  #allocation3 [shape = 'bf16[8,16,640]{2,1,0:T(16,128)(2,1)}', space=vmem, size = 0x28000, scoped, tag = 'scratch operand']
  #allocation4 [shape = 'bf16[8,20,128]{2,1,0:T(8,128)(2,1)}', space=vmem, size = 0xc000, scoped, tag = 'scratch operand']
  #allocation5 [shape = 'bf16[8,16,640]{2,1,0:T(16,128)(2,1)}', space=vmem, size = 0x28000, scoped, tag = 'scratch operand']
  %s0 = inlined_call_operand.vmem [shape: bf16[16,16,128], index: 0, kind: input, shape index: {}]
  %s1 = inlined_call_operand.vmem [shape: bf16[640,256], index: 1, kind: input, shape index: {}]
  %s2 = inlined_call_operand.vmem [shape: f32[1,256], index: 2, kind: input, shape index: {}]
  %s3 = inlined_call_operand.vmem [shape: bf16[640,128], index: 3, kind: input, shape index: {}]
  %s4 = inlined_call_operand.vmem [shape: f32[1,128], index: 4, kind: input, shape index: {}]
  %s5 = inlined_call_operand.vmem [shape: bf16[640,128], index: 5, kind: input, shape index: {}]
  %s6 = inlined_call_operand.vmem [shape: f32[1,128], index: 6, kind: input, shape index: {}]
  %s7 = inlined_call_operand.hbm [shape: f32[16,16,128], index: 7, kind: output, shape index: {0}]
  %s8 = inlined_call_operand.vmem [shape: f32[16,128], index: 8, kind: output, shape index: {1}]
  %s9 = inlined_call_operand.vmem [shape: f32[16,128], index: 9, kind: output, shape index: {2}]
  %10 = xla_tuple %s7, %s8, %s9
  %s11 = sld [smem:[#allocation0]]
  $region77: #{wav2vec_model_pallas.1} parent=0
    _
  %s13 = ssub.s32 1, %s11
  %s14 = scalar_select 0, %s13, %s11
  $region1: #{wav2vec_model_pallas.1} parent=0
    #allocation6 [shape = 'u8[131072]{0}', space=vmem, size = 0x20000, scoped, tag = 'output window, operand 0']
    #allocation7 [shape = 's32[2]{0}', space=sflag, size = 0x8, scoped, tag = 'scoped memory for wav2vec_model_pallas.1']
    %15 = vsyncpa [#allocation7], 0
    %s16 = scalar_lea.sflag [#allocation7], 1
    %17 = vsyncpa %s16, 0
    loop: start=0, step=1, limit=4
    $region2: #{wav2vec_model_pallas.1} parent=1 // loop_pre_header
      _
    $region3: #{wav2vec_model_pallas.1} parent=1 // loop_header
      %s19 = sphi 0, %s23
      %p20 = scmp.ge.s32.totalorder %s19, 4
      %s29 = sphi 0, %s31
      %s32 = sphi 0, %s29
      %s33 = sphi 0, %s32
      %s49 = sphi 0, %s33
      %s53 = sphi 0, %s53
      %s55 = sphi 0, %s53
      %s56 = sphi 0, %s55
      %s70 = sphi 0, %s56
      %s74 = sphi 0, %s74
      %s76 = sphi 0, %s74
      %s77 = sphi 0, %s76
      %s91 = sphi 0, %s77
      %s95 = sphi 0, %s95
      %s97 = sphi 0, %s95
      %s98 = sphi 0, %s97
      %s112 = sphi 0, %s98
      %s116 = sphi 0, %s116
      %s118 = sphi 0, %s116
      %s119 = sphi 0, %s118
      %s133 = sphi 0, %s119
      %s137 = sphi 0, %s137
      %s139 = sphi 0, %s137
      %s140 = sphi 0, %s139
      %s154 = sphi 0, %s140
      %s158 = sphi 0, %s158
      %s160 = sphi 0, %s158
      %s161 = sphi 0, %s160
      %s175 = sphi 0, %s161
      %s181 = sphi 0, %s183
      %s184 = sphi 0, %s181
      %s185 = sphi 0, %s184
      %s201 = sphi 0, %s185
      %s207 = sphi 0, %s209
      %s210 = sphi 0, %s207
      %s211 = sphi 0, %s210
      %s227 = sphi 0, %s211
      %s233 = sphi 0, %s235
      %s236 = sphi 0, %s233
      %s237 = sphi 0, %s236
      %s253 = sphi 0, %s237
    $region4: #{wav2vec_model_pallas.1} parent=1 // loop_header_branch
      %22 = sbr.rel (%p20) target = $region8
    $region5: #{wav2vec_model_pallas.1} parent=1 // loop_body
      %s24 = ssub.s32 %s19, 1
      %s25 = ssub.s32 %s19, 2
      %s26 = sadd.s32 %s19, 1
      %s27 = ssub.s32 %s19, %s26
      %p28 = scmp.eq.s32.totalorder %s27, 0
      %s30 = sadd.s32 %s29, 1
      %s31 = scalar_select %p28, %s29, %s30
      %p34 = pneg %p28
      %p35 = scmp.eq.s32.totalorder %s19, 1
      %p36 = por %p34, %p35
      %p37 = scmp.ne.s32.totalorder %s29, %s32
      %p38 = scmp.eq.s32.totalorder %s19, 0
      %p39 = por %p37, %p38
      %p40 = scmp.ne.s32.totalorder %s29, %s32
      %p41 = scmp.eq.s32.totalorder %s24, 1
      %p42 = por %p40, %p41
      %p43 = scmp.ne.s32.totalorder %s32, %s33
      %p44 = scmp.eq.s32.totalorder %s24, 0
      %p45 = por %p43, %p44
      %p46 = scmp.ne.s32.totalorder %s32, %s33
      %p47 = scmp.eq.s32.totalorder %s25, 1
      %p48 = por %p46, %p47
      %p50 = scmp.ne.s32.totalorder %s33, %s49
      %p51 = scmp.eq.s32.totalorder %s25, 0
      %p52 = por %p50, %p51
      %s54 = sadd.s32 %s53, 1
      %p57 = scmp.eq.s32.totalorder %s19, 1
      %p58 = scmp.ne.s32.totalorder %s53, %s55
      %p59 = scmp.eq.s32.totalorder %s19, 0
      %p60 = por %p58, %p59
      %p61 = scmp.ne.s32.totalorder %s53, %s55
      %p62 = scmp.eq.s32.totalorder %s24, 1
      %p63 = por %p61, %p62
      %p64 = scmp.ne.s32.totalorder %s55, %s56
      %p65 = scmp.eq.s32.totalorder %s24, 0
      %p66 = por %p64, %p65
      %p67 = scmp.ne.s32.totalorder %s55, %s56
      %p68 = scmp.eq.s32.totalorder %s25, 1
      %p69 = por %p67, %p68
      %p71 = scmp.ne.s32.totalorder %s56, %s70
      %p72 = scmp.eq.s32.totalorder %s25, 0
      %p73 = por %p71, %p72
      %s75 = sadd.s32 %s74, 1
      %p78 = scmp.eq.s32.totalorder %s19, 1
      %p79 = scmp.ne.s32.totalorder %s74, %s76
      %p80 = scmp.eq.s32.totalorder %s19, 0
      %p81 = por %p79, %p80
      %p82 = scmp.ne.s32.totalorder %s74, %s76
      %p83 = scmp.eq.s32.totalorder %s24, 1
      %p84 = por %p82, %p83
      %p85 = scmp.ne.s32.totalorder %s76, %s77
      %p86 = scmp.eq.s32.totalorder %s24, 0
      %p87 = por %p85, %p86
      %p88 = scmp.ne.s32.totalorder %s76, %s77
      %p89 = scmp.eq.s32.totalorder %s25, 1
      %p90 = por %p88, %p89
      %p92 = scmp.ne.s32.totalorder %s77, %s91
      %p93 = scmp.eq.s32.totalorder %s25, 0
      %p94 = por %p92, %p93
      %s96 = sadd.s32 %s95, 1
      %p99 = scmp.eq.s32.totalorder %s19, 1
      %p100 = scmp.ne.s32.totalorder %s95, %s97
      %p101 = scmp.eq.s32.totalorder %s19, 0
      %p102 = por %p100, %p101
      %p103 = scmp.ne.s32.totalorder %s95, %s97
      %p104 = scmp.eq.s32.totalorder %s24, 1
      %p105 = por %p103, %p104
      %p106 = scmp.ne.s32.totalorder %s97, %s98
      %p107 = scmp.eq.s32.totalorder %s24, 0
      %p108 = por %p106, %p107
      %p109 = scmp.ne.s32.totalorder %s97, %s98
      %p110 = scmp.eq.s32.totalorder %s25, 1
      %p111 = por %p109, %p110
      %p113 = scmp.ne.s32.totalorder %s98, %s112
      %p114 = scmp.eq.s32.totalorder %s25, 0
      %p115 = por %p113, %p114
      %s117 = sadd.s32 %s116, 1
      %p120 = scmp.eq.s32.totalorder %s19, 1
      %p121 = scmp.ne.s32.totalorder %s116, %s118
      %p122 = scmp.eq.s32.totalorder %s19, 0
      %p123 = por %p121, %p122
      %p124 = scmp.ne.s32.totalorder %s116, %s118
      %p125 = scmp.eq.s32.totalorder %s24, 1
      %p126 = por %p124, %p125
      %p127 = scmp.ne.s32.totalorder %s118, %s119
      %p128 = scmp.eq.s32.totalorder %s24, 0
      %p129 = por %p127, %p128
      %p130 = scmp.ne.s32.totalorder %s118, %s119
      %p131 = scmp.eq.s32.totalorder %s25, 1
      %p132 = por %p130, %p131
      %p134 = scmp.ne.s32.totalorder %s119, %s133
      %p135 = scmp.eq.s32.totalorder %s25, 0
      %p136 = por %p134, %p135
      %s138 = sadd.s32 %s137, 1
      %p141 = scmp.eq.s32.totalorder %s19, 1
      %p142 = scmp.ne.s32.totalorder %s137, %s139
      %p143 = scmp.eq.s32.totalorder %s19, 0
      %p144 = por %p142, %p143
      %p145 = scmp.ne.s32.totalorder %s137, %s139
      %p146 = scmp.eq.s32.totalorder %s24, 1
      %p147 = por %p145, %p146
      %p148 = scmp.ne.s32.totalorder %s139, %s140
      %p149 = scmp.eq.s32.totalorder %s24, 0
      %p150 = por %p148, %p149
      %p151 = scmp.ne.s32.totalorder %s139, %s140
      %p152 = scmp.eq.s32.totalorder %s25, 1
      %p153 = por %p151, %p152
      %p155 = scmp.ne.s32.totalorder %s140, %s154
      %p156 = scmp.eq.s32.totalorder %s25, 0
      %p157 = por %p155, %p156
      %s159 = sadd.s32 %s158, 1
      %p162 = scmp.eq.s32.totalorder %s19, 1
      %p163 = scmp.ne.s32.totalorder %s158, %s160
      %p164 = scmp.eq.s32.totalorder %s19, 0
      %p165 = por %p163, %p164
      %p166 = scmp.ne.s32.totalorder %s158, %s160
      %p167 = scmp.eq.s32.totalorder %s24, 1
      %p168 = por %p166, %p167
      %p169 = scmp.ne.s32.totalorder %s160, %s161
      %p170 = scmp.eq.s32.totalorder %s24, 0
      %p171 = por %p169, %p170
      %p172 = scmp.ne.s32.totalorder %s160, %s161
      %p173 = scmp.eq.s32.totalorder %s25, 1
      %p174 = por %p172, %p173
      %p176 = scmp.ne.s32.totalorder %s161, %s175
      %p177 = scmp.eq.s32.totalorder %s25, 0
      %p178 = por %p176, %p177
      %s179 = ssub.s32 %s19, %s26
      %p180 = scmp.eq.s32.totalorder %s179, 0
      %s182 = sadd.s32 %s181, 1
      %s183 = scalar_select %p180, %s181, %s182
      %p186 = pneg %p180
      %p187 = scmp.eq.s32.totalorder %s19, 1
      %p188 = por %p186, %p187
      %p189 = scmp.ne.s32.totalorder %s181, %s184
      %p190 = scmp.eq.s32.totalorder %s19, 0
      %p191 = por %p189, %p190
      %p192 = scmp.ne.s32.totalorder %s181, %s184
      %p193 = scmp.eq.s32.totalorder %s24, 1
      %p194 = por %p192, %p193
      %p195 = scmp.ne.s32.totalorder %s184, %s185
      %p196 = scmp.eq.s32.totalorder %s24, 0
      %p197 = por %p195, %p196
      %p198 = scmp.ne.s32.totalorder %s184, %s185
      %p199 = scmp.eq.s32.totalorder %s25, 1
      %p200 = por %p198, %p199
      %p202 = scmp.ne.s32.totalorder %s185, %s201
      %p203 = scmp.eq.s32.totalorder %s25, 0
      %p204 = por %p202, %p203
      %s205 = ssub.s32 %s19, %s26
      %p206 = scmp.eq.s32.totalorder %s205, 0
      %s208 = sadd.s32 %s207, 1
      %s209 = scalar_select %p206, %s207, %s208
      %p212 = pneg %p206
      %p213 = scmp.eq.s32.totalorder %s19, 1
      %p214 = por %p212, %p213
      %p215 = scmp.ne.s32.totalorder %s207, %s210
      %p216 = scmp.eq.s32.totalorder %s19, 0
      %p217 = por %p215, %p216
      %p218 = scmp.ne.s32.totalorder %s207, %s210
      %p219 = scmp.eq.s32.totalorder %s24, 1
      %p220 = por %p218, %p219
      %p221 = scmp.ne.s32.totalorder %s210, %s211
      %p222 = scmp.eq.s32.totalorder %s24, 0
      %p223 = por %p221, %p222
      %p224 = scmp.ne.s32.totalorder %s210, %s211
      %p225 = scmp.eq.s32.totalorder %s25, 1
      %p226 = por %p224, %p225
      %p228 = scmp.ne.s32.totalorder %s211, %s227
      %p229 = scmp.eq.s32.totalorder %s25, 0
      %p230 = por %p228, %p229
      %s231 = ssub.s32 %s19, %s26
      %p232 = scmp.eq.s32.totalorder %s231, 0
      %s234 = sadd.s32 %s233, 1
      %s235 = scalar_select %p232, %s233, %s234
      %p238 = pneg %p232
      %p239 = scmp.eq.s32.totalorder %s19, 1
      %p240 = por %p238, %p239
      %p241 = scmp.ne.s32.totalorder %s233, %s236
      %p242 = scmp.eq.s32.totalorder %s19, 0
      %p243 = por %p241, %p242
      %p244 = scmp.ne.s32.totalorder %s233, %s236
      %p245 = scmp.eq.s32.totalorder %s24, 1
      %p246 = por %p244, %p245
      %p247 = scmp.ne.s32.totalorder %s236, %s237
      %p248 = scmp.eq.s32.totalorder %s24, 0
      %p249 = por %p247, %p248
      %p250 = scmp.ne.s32.totalorder %s236, %s237
      %p251 = scmp.eq.s32.totalorder %s25, 1
      %p252 = por %p250, %p251
      %p254 = scmp.ne.s32.totalorder %s237, %s253
      %p255 = scmp.eq.s32.totalorder %s25, 0
      %p256 = por %p254, %p255
      %p257 = scmp.le.s32.totalorder 1, %s19
      %p258 = scmp.lt.s32.totalorder %s19, 3
      %p259 = pnand %p257, %p258
      %p260 = pneg %p259
      // Predicated region
      $region9: #{wav2vec_model_pallas.1} parent=5 // pred_check
        _
      $region10: #{wav2vec_model_pallas.1} parent=5 // pred_check_branch
        %262 = sbr.rel (%p259) target = $region12
      $region11: #{wav2vec_model_pallas.1} parent=5 // pred_region
        %s263 = ssub.s32 %s19, 1
        // Predicated region
        $region13: #{wav2vec_model_pallas.1} parent=11 // pred_check
          %p264 = pneg %p66
        $region14: #{wav2vec_model_pallas.1} parent=11 // pred_check_branch
          %266 = sbr.rel (%p264) target = $region16
        $region15: #{wav2vec_model_pallas.1} parent=11 // pred_region
          _
        $region16: #{wav2vec_model_pallas.1} parent=11 // pred_fallthru
          _
        // Predicated region
        $region17: #{wav2vec_model_pallas.1} parent=11 // pred_check
          %p267 = pneg %p87
        $region18: #{wav2vec_model_pallas.1} parent=11 // pred_check_branch
          %269 = sbr.rel (%p267) target = $region20
        $region19: #{wav2vec_model_pallas.1} parent=11 // pred_region
          _
        $region20: #{wav2vec_model_pallas.1} parent=11 // pred_fallthru
          _
        // Predicated region
        $region21: #{wav2vec_model_pallas.1} parent=11 // pred_check
          %p270 = pneg %p108
        $region22: #{wav2vec_model_pallas.1} parent=11 // pred_check_branch
          %272 = sbr.rel (%p270) target = $region24
        $region23: #{wav2vec_model_pallas.1} parent=11 // pred_region
          _
        $region24: #{wav2vec_model_pallas.1} parent=11 // pred_fallthru
          _
        // Predicated region
        $region25: #{wav2vec_model_pallas.1} parent=11 // pred_check
          %p273 = pneg %p129
        $region26: #{wav2vec_model_pallas.1} parent=11 // pred_check_branch
          %275 = sbr.rel (%p273) target = $region28
        $region27: #{wav2vec_model_pallas.1} parent=11 // pred_region
          _
        $region28: #{wav2vec_model_pallas.1} parent=11 // pred_fallthru
          _
        // Predicated region
        $region29: #{wav2vec_model_pallas.1} parent=11 // pred_check
          %p276 = pneg %p150
        $region30: #{wav2vec_model_pallas.1} parent=11 // pred_check_branch
          %278 = sbr.rel (%p276) target = $region32
        $region31: #{wav2vec_model_pallas.1} parent=11 // pred_region
          _
        $region32: #{wav2vec_model_pallas.1} parent=11 // pred_fallthru
          _
        // Predicated region
        $region33: #{wav2vec_model_pallas.1} parent=11 // pred_check
          %p279 = pneg %p171
        $region34: #{wav2vec_model_pallas.1} parent=11 // pred_check_branch
          %281 = sbr.rel (%p279) target = $region36
        $region35: #{wav2vec_model_pallas.1} parent=11 // pred_region
          _
        $region36: #{wav2vec_model_pallas.1} parent=11 // pred_fallthru
          _
      $region12: #{wav2vec_model_pallas.1} parent=5 // pred_fallthru
        _
      %p282 = scmp.lt.s32.totalorder %s19, 2
      // Predicated region
      $region37: #{wav2vec_model_pallas.1} parent=5 // pred_check
        %p283 = pneg %p282
      $region38: #{wav2vec_model_pallas.1} parent=5 // pred_check_branch
        %285 = sbr.rel (%p283) target = $region40
      $region39: #{wav2vec_model_pallas.1} parent=5 // pred_region
        // Predicated region
        $region41: #{wav2vec_model_pallas.1} parent=39 // pred_check
          %p286 = pneg %p39
        $region42: #{wav2vec_model_pallas.1} parent=39 // pred_check_branch
          %288 = sbr.rel (%p286) target = $region44
        $region43: #{wav2vec_model_pallas.1} parent=39 // pred_region
          %s289 = smul.u32 8, %s19
          %p290 = scmp.lt.s32.totalorder %s289, 15
          %s291 = scalar_select %p290, %s289, 15
          %s292 = smul.addr %s291, 2
          %s293 = smul.addr %s292, 4
          %s294 = scalar_lea.vmem %s0, %s293
          %s295 = smul.u32 8, %s19
        $region44: #{wav2vec_model_pallas.1} parent=39 // pred_fallthru
          _
      $region40: #{wav2vec_model_pallas.1} parent=5 // pred_fallthru
        _
      %p296 = scmp.le.s32.totalorder 1, %s19
      %p297 = scmp.lt.s32.totalorder %s19, 3
      %p298 = pnand %p296, %p297
      %p299 = pneg %p298
      // Predicated region
      $region45: #{wav2vec_model_pallas.1} parent=5 // pred_check
        _
      $region46: #{wav2vec_model_pallas.1} parent=5 // pred_check_branch
        %301 = sbr.rel (%p298) target = $region48
      $region47: #{wav2vec_model_pallas.1} parent=5 // pred_region
        %s302 = ssub.s32 %s19, 1
        %s303 = smul.u32 8, %s24
        %p304 = scmp.lt.s32.totalorder %s303, 15
        %s305 = scalar_select %p304, %s303, 15
        %s306 = smul.addr %s305, 2
        %s307 = smul.addr %s306, 4
        %s308 = scalar_lea.vmem %s0, %s307
        %p309 = pneg %p45
        %p310 = pneg %p42
        %p311 = pneg %p66
        %p312 = pneg %p63
        %p313 = pneg %p87
        %p314 = pneg %p84
        %p315 = pneg %p108
        %p316 = pneg %p105
        %p317 = pneg %p129
        %p318 = pneg %p126
        %p319 = pneg %p150
        %p320 = pneg %p147
        %p321 = pneg %p171
        %p322 = pneg %p168
        %p323 = pneg %p197
        %p324 = pneg %p194
        %s325 = sand.u32 %s184, 1
        %s326 = scalar_lea.sflag [#allocation7], %s325
        %s327 = sand.u32 %s184, 1
        %s328 = smul.addr %s327, 128
        %s329 = scalar_lea.vmem [#allocation6], %s328
        %p330 = pneg %p223
        %p331 = pneg %p220
        %p332 = scmp.lt.s32.totalorder %s24, 1
        %s333 = scalar_select %p332, %s24, 1
        %s334 = smul.addr %s333, 8
        %s335 = scalar_lea.vmem %s8, %s334
        %p336 = pneg %p249
        %p337 = pneg %p246
        %p338 = scmp.lt.s32.totalorder %s24, 1
        %s339 = scalar_select %p338, %s24, 1
        %s340 = smul.addr %s339, 8
        %s341 = scalar_lea.vmem %s9, %s340
        %s342 = smul.u32 8, %s24
        %p343 = scmp.lt.s32.totalorder %s342, 15
        %s344 = scalar_select %p343, %s342, 15
        %s345 = smul.addr %s344, 2
        %s346 = smul.addr %s345, 4
        %s347 = scalar_lea.vmem %s0, %s346
        %s348 = smul.u32 8, %s24
        %s349 = smul.u32 8, %s24
        %p350 = scmp.lt.s32.totalorder %s24, 1
        %s351 = scalar_select %p350, %s24, 1
        %s352 = smul.addr %s351, 8
        %s353 = scalar_lea.vmem %s8, %s352
        %p354 = scmp.lt.s32.totalorder %s24, 1
        %s355 = scalar_select %p354, %s24, 1
        %s356 = smul.addr %s355, 8
        %s357 = scalar_lea.vmem %s9, %s356
        %359 = vst [vmem:[#allocation2] sm:$0x1] 0
        %360 = vst [vmem:[#allocation2 + $0xc] sm:$0x1] 0
        %361 = vst [vmem:[#allocation2 + $0x18] sm:$0x1] 0
        %362 = vst [vmem:[#allocation2 + $0x24] sm:$0x1] 0
        %363 = vst [vmem:[#allocation2 + $0x30] sm:$0x1] 0
        %364 = vst [vmem:[#allocation2 + $0x3c] sm:$0x1] 0
        %365 = vst [vmem:[#allocation2 + $0x48] sm:$0x1] 0
        %366 = vst [vmem:[#allocation2 + $0x54] sm:$0x1] 0
        %367 = vst [vmem:[#allocation2 + $0x8] sm:$0x2] 0
        %368 = vst [vmem:[#allocation2 + $0x14] sm:$0x2] 0
        %369 = vst [vmem:[#allocation2 + $0x20] sm:$0x2] 0
        %370 = vst [vmem:[#allocation2 + $0x2c] sm:$0x2] 0
        %371 = vst [vmem:[#allocation2 + $0x38] sm:$0x2] 0
        %372 = vst [vmem:[#allocation2 + $0x44] sm:$0x2] 0
        %373 = vst [vmem:[#allocation2 + $0x50] sm:$0x2] 0
        %374 = vst [vmem:[#allocation2 + $0x5c] sm:$0x2] 0
        %375 = vst [vmem:[#allocation4] sm:$0x1] 0
        %376 = vst [vmem:[#allocation4 + $0xc] sm:$0x1] 0
        %377 = vst [vmem:[#allocation4 + $0x18] sm:$0x1] 0
        %378 = vst [vmem:[#allocation4 + $0x24] sm:$0x1] 0
        %379 = vst [vmem:[#allocation4 + $0x30] sm:$0x1] 0
        %380 = vst [vmem:[#allocation4 + $0x3c] sm:$0x1] 0
        %381 = vst [vmem:[#allocation4 + $0x48] sm:$0x1] 0
        %382 = vst [vmem:[#allocation4 + $0x54] sm:$0x1] 0
        %383 = vst [vmem:[#allocation4 + $0x8] sm:$0x2] 0
        %384 = vst [vmem:[#allocation4 + $0x14] sm:$0x2] 0
        %385 = vst [vmem:[#allocation4 + $0x20] sm:$0x2] 0
        %386 = vst [vmem:[#allocation4 + $0x2c] sm:$0x2] 0
        %387 = vst [vmem:[#allocation4 + $0x38] sm:$0x2] 0
        %388 = vst [vmem:[#allocation4 + $0x44] sm:$0x2] 0
        %389 = vst [vmem:[#allocation4 + $0x50] sm:$0x2] 0
        %390 = vst [vmem:[#allocation4 + $0x5c] sm:$0x2] 0
        %v391 = vld [vmem:[%s347] sm:$0xf]
        %v392 = vld [vmem:[%s347 + $0x4] sm:$0xf]
        %v393 = vld [vmem:[%s347 + $0x8] sm:$0xf]
        %v394 = vld [vmem:[%s347 + $0xc] sm:$0xf]
        %v395 = vld [vmem:[%s347 + $0x10] sm:$0xf]
        %v396 = vld [vmem:[%s347 + $0x14] sm:$0xf]
        %v397 = vld [vmem:[%s347 + $0x18] sm:$0xf]
        %v398 = vld [vmem:[%s347 + $0x1c] sm:$0xf]
        %v399 = vld [vmem:[%s347 + $0x20] sm:$0xf]
        %v400 = vld [vmem:[%s347 + $0x24] sm:$0xf]
        %v401 = vld [vmem:[%s347 + $0x28] sm:$0xf]
        %v402 = vld [vmem:[%s347 + $0x2c] sm:$0xf]
        %v403 = vld [vmem:[%s347 + $0x30] sm:$0xf]
        %v404 = vld [vmem:[%s347 + $0x34] sm:$0xf]
        %v405 = vld [vmem:[%s347 + $0x38] sm:$0xf]
        %v406 = vld [vmem:[%s347 + $0x3c] sm:$0xf]
        %vm423 = vcmask 1040384
        %vm424 = vcmask 1044484
        %vm425 = vmor %vm423, %vm424
        %v426 = vrot.slane %v391, 7
        %v427 = vrot.slane %v426, 4
        %v428 = vrot.slane %v392, 7
        %v429 = vsel %vm425, %v427, %v428
        %v430 = vrot.slane %v428, 4
        %v431 = vrot.slane %v393, 7
        %v432 = vrot.slane %v431, 4
        %v433 = vrot.slane %v394, 7
        %v434 = vsel %vm425, %v432, %v433
        %v435 = vrot.slane %v433, 4
        %v436 = vrot.slane %v395, 7
        %v437 = vrot.slane %v436, 4
        %v438 = vrot.slane %v396, 7
        %v439 = vsel %vm425, %v437, %v438
        %v440 = vrot.slane %v438, 4
        %v441 = vrot.slane %v397, 7
        %v442 = vrot.slane %v441, 4
        %v443 = vrot.slane %v398, 7
        %v444 = vsel %vm425, %v442, %v443
        %v445 = vrot.slane %v443, 4
        %v446 = vrot.slane %v399, 7
        %v447 = vrot.slane %v446, 4
        %v448 = vrot.slane %v400, 7
        %v449 = vsel %vm425, %v447, %v448
        %v450 = vrot.slane %v448, 4
        %v451 = vrot.slane %v401, 7
        %v452 = vrot.slane %v451, 4
        %v453 = vrot.slane %v402, 7
        %v454 = vsel %vm425, %v452, %v453
        %v455 = vrot.slane %v453, 4
        %v456 = vrot.slane %v403, 7
        %v457 = vrot.slane %v456, 4
        %v458 = vrot.slane %v404, 7
        %v459 = vsel %vm425, %v457, %v458
        %v460 = vrot.slane %v458, 4
        %v461 = vrot.slane %v405, 7
        %v462 = vrot.slane %v461, 4
        %v463 = vrot.slane %v406, 7
        %v464 = vsel %vm425, %v462, %v463
        %v465 = vrot.slane %v463, 4
        %490 = vst [vmem:[#allocation2] sm:$0xe] %v426
        %491 = vst [vmem:[#allocation2 + $0x4] sm:$0xf] %v429
        %492 = vst [vmem:[#allocation2 + $0x8] sm:$0x1] %v430
        %493 = vst [vmem:[#allocation2 + $0xc] sm:$0xe] %v431
        %494 = vst [vmem:[#allocation2 + $0x10] sm:$0xf] %v434
        %495 = vst [vmem:[#allocation2 + $0x14] sm:$0x1] %v435
        %496 = vst [vmem:[#allocation2 + $0x18] sm:$0xe] %v436
        %497 = vst [vmem:[#allocation2 + $0x1c] sm:$0xf] %v439
        %498 = vst [vmem:[#allocation2 + $0x20] sm:$0x1] %v440
        %499 = vst [vmem:[#allocation2 + $0x24] sm:$0xe] %v441
        %500 = vst [vmem:[#allocation2 + $0x28] sm:$0xf] %v444
        %501 = vst [vmem:[#allocation2 + $0x2c] sm:$0x1] %v445
        %502 = vst [vmem:[#allocation2 + $0x30] sm:$0xe] %v446
        %503 = vst [vmem:[#allocation2 + $0x34] sm:$0xf] %v449
        %504 = vst [vmem:[#allocation2 + $0x38] sm:$0x1] %v450
        %505 = vst [vmem:[#allocation2 + $0x3c] sm:$0xe] %v451
        %506 = vst [vmem:[#allocation2 + $0x40] sm:$0xf] %v454
        %507 = vst [vmem:[#allocation2 + $0x44] sm:$0x1] %v455
        %508 = vst [vmem:[#allocation2 + $0x48] sm:$0xe] %v456
        %509 = vst [vmem:[#allocation2 + $0x4c] sm:$0xf] %v459
        %510 = vst [vmem:[#allocation2 + $0x50] sm:$0x1] %v460
        %511 = vst [vmem:[#allocation2 + $0x54] sm:$0xe] %v461
        %512 = vst [vmem:[#allocation2 + $0x58] sm:$0xf] %v464
        %513 = vst [vmem:[#allocation2 + $0x5c] sm:$0x1] %v465
        %v514 = vld [vmem:[#allocation2] sm:$0xf]
        %v515 = vld [vmem:[#allocation2 + $0x4] sm:$0xf]
        %v516 = vld [vmem:[#allocation2 + $0xc] sm:$0xf]
        %v517 = vld [vmem:[#allocation2 + $0x10] sm:$0xf]
        %v518 = vld [vmem:[#allocation2 + $0x18] sm:$0xf]
        %v519 = vld [vmem:[#allocation2 + $0x1c] sm:$0xf]
        %v520 = vld [vmem:[#allocation2 + $0x24] sm:$0xf]
        %v521 = vld [vmem:[#allocation2 + $0x28] sm:$0xf]
        %v522 = vld [vmem:[#allocation2 + $0x30] sm:$0xf]
        %v523 = vld [vmem:[#allocation2 + $0x34] sm:$0xf]
        %v524 = vld [vmem:[#allocation2 + $0x3c] sm:$0xf]
        %v525 = vld [vmem:[#allocation2 + $0x40] sm:$0xf]
        %v526 = vld [vmem:[#allocation2 + $0x48] sm:$0xf]
        %v527 = vld [vmem:[#allocation2 + $0x4c] sm:$0xf]
        %v528 = vld [vmem:[#allocation2 + $0x54] sm:$0xf]
        %v529 = vld [vmem:[#allocation2 + $0x58] sm:$0xf]
        %v546 = vunpack.c.l.b16 %v514
        %v547 = vunpack.c.l.b16 %v515
        %v548 = vunpack.c.l.b16 %v516
        %v549 = vunpack.c.l.b16 %v517
        %v550 = vunpack.c.l.b16 %v518
        %v551 = vunpack.c.l.b16 %v519
        %v552 = vunpack.c.l.b16 %v520
        %v553 = vunpack.c.l.b16 %v521
        %v554 = vunpack.c.l.b16 %v522
        %v555 = vunpack.c.l.b16 %v523
        %v556 = vunpack.c.l.b16 %v524
        %v557 = vunpack.c.l.b16 %v525
        %v558 = vunpack.c.l.b16 %v526
        %v559 = vunpack.c.l.b16 %v527
        %v560 = vunpack.c.l.b16 %v528
        %v561 = vunpack.c.l.b16 %v529
        %v562 = vpack.c.b16 %v547, %v546
        %v563 = vpack.c.b16 %v549, %v548
        %v564 = vpack.c.b16 %v551, %v550
        %v565 = vpack.c.b16 %v553, %v552
        %v566 = vpack.c.b16 %v555, %v554
        %v567 = vpack.c.b16 %v557, %v556
        %v568 = vpack.c.b16 %v559, %v558
        %v569 = vpack.c.b16 %v561, %v560
        %578 = vst [vmem:[#allocation3] sm:$0xff] %v562
        %579 = vst [vmem:[#allocation3 + $0x28] sm:$0xff] %v563
        %580 = vst [vmem:[#allocation3 + $0x50] sm:$0xff] %v564
        %581 = vst [vmem:[#allocation3 + $0x78] sm:$0xff] %v565
        %582 = vst [vmem:[#allocation3 + $0xa0] sm:$0xff] %v566
        %583 = vst [vmem:[#allocation3 + $0xc8] sm:$0xff] %v567
        %584 = vst [vmem:[#allocation3 + $0xf0] sm:$0xff] %v568
        %585 = vst [vmem:[#allocation3 + $0x118] sm:$0xff] %v569
        %v586 = vld [vmem:[#allocation2] sm:$0xf]
        %v587 = vld [vmem:[#allocation2 + $0x4] sm:$0xf]
        %v588 = vld [vmem:[#allocation2 + $0x8] sm:$0x1]
        %v589 = vld [vmem:[#allocation2 + $0xc] sm:$0xf]
        %v590 = vld [vmem:[#allocation2 + $0x10] sm:$0xf]
        %v591 = vld [vmem:[#allocation2 + $0x14] sm:$0x1]
        %v592 = vld [vmem:[#allocation2 + $0x18] sm:$0xf]
        %v593 = vld [vmem:[#allocation2 + $0x1c] sm:$0xf]
        %v594 = vld [vmem:[#allocation2 + $0x20] sm:$0x1]
        %v595 = vld [vmem:[#allocation2 + $0x24] sm:$0xf]
        %v596 = vld [vmem:[#allocation2 + $0x28] sm:$0xf]
        %v597 = vld [vmem:[#allocation2 + $0x2c] sm:$0x1]
        %v598 = vld [vmem:[#allocation2 + $0x30] sm:$0xf]
        %v599 = vld [vmem:[#allocation2 + $0x34] sm:$0xf]
        %v600 = vld [vmem:[#allocation2 + $0x38] sm:$0x1]
        %v601 = vld [vmem:[#allocation2 + $0x3c] sm:$0xf]
        %v602 = vld [vmem:[#allocation2 + $0x40] sm:$0xf]
        %v603 = vld [vmem:[#allocation2 + $0x44] sm:$0x1]
        %v604 = vld [vmem:[#allocation2 + $0x48] sm:$0xf]
        %v605 = vld [vmem:[#allocation2 + $0x4c] sm:$0xf]
        %v606 = vld [vmem:[#allocation2 + $0x50] sm:$0x1]
        %v607 = vld [vmem:[#allocation2 + $0x54] sm:$0xf]
        %v608 = vld [vmem:[#allocation2 + $0x58] sm:$0xf]
        %v609 = vld [vmem:[#allocation2 + $0x5c] sm:$0x1]
        %v634 = vunpack.c.l.b16 %v586
        %v635 = vunpack.c.l.b16 %v587
        %v636 = vunpack.c.l.b16 %v588
        %v637 = vunpack.c.l.b16 %v589
        %v638 = vunpack.c.l.b16 %v590
        %v639 = vunpack.c.l.b16 %v591
        %v640 = vunpack.c.l.b16 %v592
        %v641 = vunpack.c.l.b16 %v593
        %v642 = vunpack.c.l.b16 %v594
        %v643 = vunpack.c.l.b16 %v595
        %v644 = vunpack.c.l.b16 %v596
        %v645 = vunpack.c.l.b16 %v597
        %v646 = vunpack.c.l.b16 %v598
        %v647 = vunpack.c.l.b16 %v599
        %v648 = vunpack.c.l.b16 %v600
        %v649 = vunpack.c.l.b16 %v601
        %v650 = vunpack.c.l.b16 %v602
        %v651 = vunpack.c.l.b16 %v603
        %v652 = vunpack.c.l.b16 %v604
        %v653 = vunpack.c.l.b16 %v605
        %v654 = vunpack.c.l.b16 %v606
        %v655 = vunpack.c.l.b16 %v607
        %v656 = vunpack.c.l.b16 %v608
        %v657 = vunpack.c.l.b16 %v609
        %v658 = vpack.c.b16 %v635, %v634
        %v659 = vpack.c.b16 %v636, %v636
        %v660 = vpack.c.b16 %v638, %v637
        %v661 = vpack.c.b16 %v639, %v639
        %v662 = vpack.c.b16 %v641, %v640
        %v663 = vpack.c.b16 %v642, %v642
        %v664 = vpack.c.b16 %v644, %v643
        %v665 = vpack.c.b16 %v645, %v645
        %v666 = vpack.c.b16 %v647, %v646
        %v667 = vpack.c.b16 %v648, %v648
        %v668 = vpack.c.b16 %v650, %v649
        %v669 = vpack.c.b16 %v651, %v651
        %v670 = vpack.c.b16 %v653, %v652
        %v671 = vpack.c.b16 %v654, %v654
        %v672 = vpack.c.b16 %v656, %v655
        %v673 = vpack.c.b16 %v657, %v657
        %vm674 = vsmask.f32 7424
        %v676 = vshrl.u32 %v658, 16
        %v678 = vshll.u32 %v658, 16
        %v680 = vrot.slane %v678, 1
        %v681 = vor.u32 %v676, %v680
        %v683 = vshll.u32 %v659, 16
        %v685 = vrot.slane %v683, 1
        %v686 = vsel %vm674, %v681, %v685
        %v688 = vshrl.u32 %v660, 16
        %v690 = vshll.u32 %v660, 16
        %v692 = vrot.slane %v690, 1
        %v693 = vor.u32 %v688, %v692
        %v695 = vshll.u32 %v661, 16
        %v697 = vrot.slane %v695, 1
        %v698 = vsel %vm674, %v693, %v697
        %v700 = vshrl.u32 %v662, 16
        %v702 = vshll.u32 %v662, 16
        %v704 = vrot.slane %v702, 1
        %v705 = vor.u32 %v700, %v704
        %v707 = vshll.u32 %v663, 16
        %v709 = vrot.slane %v707, 1
        %v710 = vsel %vm674, %v705, %v709
        %v712 = vshrl.u32 %v664, 16
        %v714 = vshll.u32 %v664, 16
        %v716 = vrot.slane %v714, 1
        %v717 = vor.u32 %v712, %v716
        %v719 = vshll.u32 %v665, 16
        %v721 = vrot.slane %v719, 1
        %v722 = vsel %vm674, %v717, %v721
        %v724 = vshrl.u32 %v666, 16
        %v726 = vshll.u32 %v666, 16
        %v728 = vrot.slane %v726, 1
        %v729 = vor.u32 %v724, %v728
        %v731 = vshll.u32 %v667, 16
        %v733 = vrot.slane %v731, 1
        %v734 = vsel %vm674, %v729, %v733
        %v736 = vshrl.u32 %v668, 16
        %v738 = vshll.u32 %v668, 16
        %v740 = vrot.slane %v738, 1
        %v741 = vor.u32 %v736, %v740
        %v743 = vshll.u32 %v669, 16
        %v745 = vrot.slane %v743, 1
        %v746 = vsel %vm674, %v741, %v745
        %v748 = vshrl.u32 %v670, 16
        %v750 = vshll.u32 %v670, 16
        %v752 = vrot.slane %v750, 1
        %v753 = vor.u32 %v748, %v752
        %v755 = vshll.u32 %v671, 16
        %v757 = vrot.slane %v755, 1
        %v758 = vsel %vm674, %v753, %v757
        %v760 = vshrl.u32 %v672, 16
        %v762 = vshll.u32 %v672, 16
        %v764 = vrot.slane %v762, 1
        %v765 = vor.u32 %v760, %v764
        %v767 = vshll.u32 %v673, 16
        %v769 = vrot.slane %v767, 1
        %v770 = vsel %vm674, %v765, %v769
        %779 = vst [vmem:[#allocation3 + $0x8] sm:$0xff] %v686
        %780 = vst [vmem:[#allocation3 + $0x30] sm:$0xff] %v698
        %781 = vst [vmem:[#allocation3 + $0x58] sm:$0xff] %v710
        %782 = vst [vmem:[#allocation3 + $0x80] sm:$0xff] %v722
        %783 = vst [vmem:[#allocation3 + $0xa8] sm:$0xff] %v734
        %784 = vst [vmem:[#allocation3 + $0xd0] sm:$0xff] %v746
        %785 = vst [vmem:[#allocation3 + $0xf8] sm:$0xff] %v758
        %786 = vst [vmem:[#allocation3 + $0x120] sm:$0xff] %v770
        %v787 = vld [vmem:[#allocation2] sm:$0xe]
        %v788 = vld [vmem:[#allocation2 + $0x4] sm:$0xf]
        %v789 = vld [vmem:[#allocation2 + $0x8] sm:$0x1]
        %v790 = vld [vmem:[#allocation2 + $0xc] sm:$0xe]
        %v791 = vld [vmem:[#allocation2 + $0x10] sm:$0xf]
        %v792 = vld [vmem:[#allocation2 + $0x14] sm:$0x1]
        %v793 = vld [vmem:[#allocation2 + $0x18] sm:$0xe]
        %v794 = vld [vmem:[#allocation2 + $0x1c] sm:$0xf]
        %v795 = vld [vmem:[#allocation2 + $0x20] sm:$0x1]
        %v796 = vld [vmem:[#allocation2 + $0x24] sm:$0xe]
        %v797 = vld [vmem:[#allocation2 + $0x28] sm:$0xf]
        %v798 = vld [vmem:[#allocation2 + $0x2c] sm:$0x1]
        %v799 = vld [vmem:[#allocation2 + $0x30] sm:$0xe]
        %v800 = vld [vmem:[#allocation2 + $0x34] sm:$0xf]
        %v801 = vld [vmem:[#allocation2 + $0x38] sm:$0x1]
        %v802 = vld [vmem:[#allocation2 + $0x3c] sm:$0xe]
        %v803 = vld [vmem:[#allocation2 + $0x40] sm:$0xf]
        %v804 = vld [vmem:[#allocation2 + $0x44] sm:$0x1]
        %v805 = vld [vmem:[#allocation2 + $0x48] sm:$0xe]
        %v806 = vld [vmem:[#allocation2 + $0x4c] sm:$0xf]
        %v807 = vld [vmem:[#allocation2 + $0x50] sm:$0x1]
        %v808 = vld [vmem:[#allocation2 + $0x54] sm:$0xe]
        %v809 = vld [vmem:[#allocation2 + $0x58] sm:$0xf]
        %v810 = vld [vmem:[#allocation2 + $0x5c] sm:$0x1]
        %v835 = vunpack.c.l.b16 %v787
        %v836 = vunpack.c.l.b16 %v788
        %v837 = vunpack.c.l.b16 %v789
        %v838 = vunpack.c.l.b16 %v790
        %v839 = vunpack.c.l.b16 %v791
        %v840 = vunpack.c.l.b16 %v792
        %v841 = vunpack.c.l.b16 %v793
        %v842 = vunpack.c.l.b16 %v794
        %v843 = vunpack.c.l.b16 %v795
        %v844 = vunpack.c.l.b16 %v796
        %v845 = vunpack.c.l.b16 %v797
        %v846 = vunpack.c.l.b16 %v798
        %v847 = vunpack.c.l.b16 %v799
        %v848 = vunpack.c.l.b16 %v800
        %v849 = vunpack.c.l.b16 %v801
        %v850 = vunpack.c.l.b16 %v802
        %v851 = vunpack.c.l.b16 %v803
        %v852 = vunpack.c.l.b16 %v804
        %v853 = vunpack.c.l.b16 %v805
        %v854 = vunpack.c.l.b16 %v806
        %v855 = vunpack.c.l.b16 %v807
        %v856 = vunpack.c.l.b16 %v808
        %v857 = vunpack.c.l.b16 %v809
        %v858 = vunpack.c.l.b16 %v810
        %v859 = vpack.c.b16 %v836, %v835
        %v860 = vpack.c.b16 %v837, %v837
        %v861 = vpack.c.b16 %v839, %v838
        %v862 = vpack.c.b16 %v840, %v840
        %v863 = vpack.c.b16 %v842, %v841
        %v864 = vpack.c.b16 %v843, %v843
        %v865 = vpack.c.b16 %v845, %v844
        %v866 = vpack.c.b16 %v846, %v846
        %v867 = vpack.c.b16 %v848, %v847
        %v868 = vpack.c.b16 %v849, %v849
        %v869 = vpack.c.b16 %v851, %v850
        %v870 = vpack.c.b16 %v852, %v852
        %v871 = vpack.c.b16 %v854, %v853
        %v872 = vpack.c.b16 %v855, %v855
        %v873 = vpack.c.b16 %v857, %v856
        %v874 = vpack.c.b16 %v858, %v858
        %vm875 = vcmask 1046528
        %v876 = vrot.slane %v859, 1
        %v877 = vrot.slane %v860, 1
        %v878 = vsel %vm875, %v876, %v877
        %v879 = vrot.slane %v861, 1
        %v880 = vrot.slane %v862, 1
        %v881 = vsel %vm875, %v879, %v880
        %v882 = vrot.slane %v863, 1
        %v883 = vrot.slane %v864, 1
        %v884 = vsel %vm875, %v882, %v883
        %v885 = vrot.slane %v865, 1
        %v886 = vrot.slane %v866, 1
        %v887 = vsel %vm875, %v885, %v886
        %v888 = vrot.slane %v867, 1
        %v889 = vrot.slane %v868, 1
        %v890 = vsel %vm875, %v888, %v889
        %v891 = vrot.slane %v869, 1
        %v892 = vrot.slane %v870, 1
        %v893 = vsel %vm875, %v891, %v892
        %v894 = vrot.slane %v871, 1
        %v895 = vrot.slane %v872, 1
        %v896 = vsel %vm875, %v894, %v895
        %v897 = vrot.slane %v873, 1
        %v898 = vrot.slane %v874, 1
        %v899 = vsel %vm875, %v897, %v898
        %908 = vst [vmem:[#allocation3 + $0x10] sm:$0xff] %v878
        %909 = vst [vmem:[#allocation3 + $0x38] sm:$0xff] %v881
        %910 = vst [vmem:[#allocation3 + $0x60] sm:$0xff] %v884
        %911 = vst [vmem:[#allocation3 + $0x88] sm:$0xff] %v887
        %912 = vst [vmem:[#allocation3 + $0xb0] sm:$0xff] %v890
        %913 = vst [vmem:[#allocation3 + $0xd8] sm:$0xff] %v893
        %914 = vst [vmem:[#allocation3 + $0x100] sm:$0xff] %v896
        %915 = vst [vmem:[#allocation3 + $0x128] sm:$0xff] %v899
        %v916 = vld [vmem:[#allocation2] sm:$0xe]
        %v917 = vld [vmem:[#allocation2 + $0x4] sm:$0xf]
        %v918 = vld [vmem:[#allocation2 + $0x8] sm:$0x3]
        %v919 = vld [vmem:[#allocation2 + $0xc] sm:$0xe]
        %v920 = vld [vmem:[#allocation2 + $0x10] sm:$0xf]
        %v921 = vld [vmem:[#allocation2 + $0x14] sm:$0x3]
        %v922 = vld [vmem:[#allocation2 + $0x18] sm:$0xe]
        %v923 = vld [vmem:[#allocation2 + $0x1c] sm:$0xf]
        %v924 = vld [vmem:[#allocation2 + $0x20] sm:$0x3]
        %v925 = vld [vmem:[#allocation2 + $0x24] sm:$0xe]
        %v926 = vld [vmem:[#allocation2 + $0x28] sm:$0xf]
        %v927 = vld [vmem:[#allocation2 + $0x2c] sm:$0x3]
        %v928 = vld [vmem:[#allocation2 + $0x30] sm:$0xe]
        %v929 = vld [vmem:[#allocation2 + $0x34] sm:$0xf]
        %v930 = vld [vmem:[#allocation2 + $0x38] sm:$0x3]
        %v931 = vld [vmem:[#allocation2 + $0x3c] sm:$0xe]
        %v932 = vld [vmem:[#allocation2 + $0x40] sm:$0xf]
        %v933 = vld [vmem:[#allocation2 + $0x44] sm:$0x3]
        %v934 = vld [vmem:[#allocation2 + $0x48] sm:$0xe]
        %v935 = vld [vmem:[#allocation2 + $0x4c] sm:$0xf]
        %v936 = vld [vmem:[#allocation2 + $0x50] sm:$0x3]
        %v937 = vld [vmem:[#allocation2 + $0x54] sm:$0xe]
        %v938 = vld [vmem:[#allocation2 + $0x58] sm:$0xf]
        %v939 = vld [vmem:[#allocation2 + $0x5c] sm:$0x3]
        %v964 = vunpack.c.l.b16 %v916
        %v965 = vunpack.c.l.b16 %v917
        %v966 = vunpack.c.l.b16 %v918
        %v967 = vunpack.c.l.b16 %v919
        %v968 = vunpack.c.l.b16 %v920
        %v969 = vunpack.c.l.b16 %v921
        %v970 = vunpack.c.l.b16 %v922
        %v971 = vunpack.c.l.b16 %v923
        %v972 = vunpack.c.l.b16 %v924
        %v973 = vunpack.c.l.b16 %v925
        %v974 = vunpack.c.l.b16 %v926
        %v975 = vunpack.c.l.b16 %v927
        %v976 = vunpack.c.l.b16 %v928
        %v977 = vunpack.c.l.b16 %v929
        %v978 = vunpack.c.l.b16 %v930
        %v979 = vunpack.c.l.b16 %v931
        %v980 = vunpack.c.l.b16 %v932
        %v981 = vunpack.c.l.b16 %v933
        %v982 = vunpack.c.l.b16 %v934
        %v983 = vunpack.c.l.b16 %v935
        %v984 = vunpack.c.l.b16 %v936
        %v985 = vunpack.c.l.b16 %v937
        %v986 = vunpack.c.l.b16 %v938
        %v987 = vunpack.c.l.b16 %v939
        %v988 = vpack.c.b16 %v965, %v964
        %v989 = vpack.c.b16 %v966, %v966
        %v990 = vpack.c.b16 %v968, %v967
        %v991 = vpack.c.b16 %v969, %v969
        %v992 = vpack.c.b16 %v971, %v970
        %v993 = vpack.c.b16 %v972, %v972
        %v994 = vpack.c.b16 %v974, %v973
        %v995 = vpack.c.b16 %v975, %v975
        %v996 = vpack.c.b16 %v977, %v976
        %v997 = vpack.c.b16 %v978, %v978
        %v998 = vpack.c.b16 %v980, %v979
        %v999 = vpack.c.b16 %v981, %v981
        %v1000 = vpack.c.b16 %v983, %v982
        %v1001 = vpack.c.b16 %v984, %v984
        %v1002 = vpack.c.b16 %v986, %v985
        %v1003 = vpack.c.b16 %v987, %v987
        %vm1004 = vsmask.f32 6400
        %v1006 = vshrl.u32 %v988, 16
        %v1008 = vrot.slane %v1006, 1
        %v1009 = vshll.u32 %v988, 16
        %v1011 = vrot.slane %v1009, 2
        %v1012 = vor.u32 %v1008, %v1011
        %v1014 = vshrl.u32 %v989, 16
        %v1016 = vrot.slane %v1014, 1
        %v1017 = vshll.u32 %v989, 16
        %v1019 = vrot.slane %v1017, 2
        %v1020 = vor.u32 %v1016, %v1019
        %v1021 = vsel %vm1004, %v1012, %v1020
        %v1023 = vshrl.u32 %v990, 16
        %v1025 = vrot.slane %v1023, 1
        %v1026 = vshll.u32 %v990, 16
        %v1028 = vrot.slane %v1026, 2
        %v1029 = vor.u32 %v1025, %v1028
        %v1031 = vshrl.u32 %v991, 16
        %v1033 = vrot.slane %v1031, 1
        %v1034 = vshll.u32 %v991, 16
        %v1036 = vrot.slane %v1034, 2
        %v1037 = vor.u32 %v1033, %v1036
        %v1038 = vsel %vm1004, %v1029, %v1037
        %v1040 = vshrl.u32 %v992, 16
        %v1042 = vrot.slane %v1040, 1
        %v1043 = vshll.u32 %v992, 16
        %v1045 = vrot.slane %v1043, 2
        %v1046 = vor.u32 %v1042, %v1045
        %v1048 = vshrl.u32 %v993, 16
        %v1050 = vrot.slane %v1048, 1
        %v1051 = vshll.u32 %v993, 16
        %v1053 = vrot.slane %v1051, 2
        %v1054 = vor.u32 %v1050, %v1053
        %v1055 = vsel %vm1004, %v1046, %v1054
        %v1057 = vshrl.u32 %v994, 16
        %v1059 = vrot.slane %v1057, 1
        %v1060 = vshll.u32 %v994, 16
        %v1062 = vrot.slane %v1060, 2
        %v1063 = vor.u32 %v1059, %v1062
        %v1065 = vshrl.u32 %v995, 16
        %v1067 = vrot.slane %v1065, 1
        %v1068 = vshll.u32 %v995, 16
        %v1070 = vrot.slane %v1068, 2
        %v1071 = vor.u32 %v1067, %v1070
        %v1072 = vsel %vm1004, %v1063, %v1071
        %v1074 = vshrl.u32 %v996, 16
        %v1076 = vrot.slane %v1074, 1
        %v1077 = vshll.u32 %v996, 16
        %v1079 = vrot.slane %v1077, 2
        %v1080 = vor.u32 %v1076, %v1079
        %v1082 = vshrl.u32 %v997, 16
        %v1084 = vrot.slane %v1082, 1
        %v1085 = vshll.u32 %v997, 16
        %v1087 = vrot.slane %v1085, 2
        %v1088 = vor.u32 %v1084, %v1087
        %v1089 = vsel %vm1004, %v1080, %v1088
        %v1091 = vshrl.u32 %v998, 16
        %v1093 = vrot.slane %v1091, 1
        %v1094 = vshll.u32 %v998, 16
        %v1096 = vrot.slane %v1094, 2
        %v1097 = vor.u32 %v1093, %v1096
        %v1099 = vshrl.u32 %v999, 16
        %v1101 = vrot.slane %v1099, 1
        %v1102 = vshll.u32 %v999, 16
        %v1104 = vrot.slane %v1102, 2
        %v1105 = vor.u32 %v1101, %v1104
        %v1106 = vsel %vm1004, %v1097, %v1105
        %v1108 = vshrl.u32 %v1000, 16
        %v1110 = vrot.slane %v1108, 1
        %v1111 = vshll.u32 %v1000, 16
        %v1113 = vrot.slane %v1111, 2
        %v1114 = vor.u32 %v1110, %v1113
        %v1116 = vshrl.u32 %v1001, 16
        %v1118 = vrot.slane %v1116, 1
        %v1119 = vshll.u32 %v1001, 16
        %v1121 = vrot.slane %v1119, 2
        %v1122 = vor.u32 %v1118, %v1121
        %v1123 = vsel %vm1004, %v1114, %v1122
        %v1125 = vshrl.u32 %v1002, 16
        %v1127 = vrot.slane %v1125, 1
        %v1128 = vshll.u32 %v1002, 16
        %v1130 = vrot.slane %v1128, 2
        %v1131 = vor.u32 %v1127, %v1130
        %v1133 = vshrl.u32 %v1003, 16
        %v1135 = vrot.slane %v1133, 1
        %v1136 = vshll.u32 %v1003, 16
        %v1138 = vrot.slane %v1136, 2
        %v1139 = vor.u32 %v1135, %v1138
        %v1140 = vsel %vm1004, %v1131, %v1139
        %1149 = vst [vmem:[#allocation3 + $0x18] sm:$0xff] %v1021
        %1150 = vst [vmem:[#allocation3 + $0x40] sm:$0xff] %v1038
        %1151 = vst [vmem:[#allocation3 + $0x68] sm:$0xff] %v1055
        %1152 = vst [vmem:[#allocation3 + $0x90] sm:$0xff] %v1072
        %1153 = vst [vmem:[#allocation3 + $0xb8] sm:$0xff] %v1089
        %1154 = vst [vmem:[#allocation3 + $0xe0] sm:$0xff] %v1106
        %1155 = vst [vmem:[#allocation3 + $0x108] sm:$0xff] %v1123
        %1156 = vst [vmem:[#allocation3 + $0x130] sm:$0xff] %v1140
        %v1157 = vld [vmem:[#allocation2] sm:$0xc]
        %v1158 = vld [vmem:[#allocation2 + $0x4] sm:$0xf]
        %v1159 = vld [vmem:[#allocation2 + $0x8] sm:$0x3]
        %v1160 = vld [vmem:[#allocation2 + $0xc] sm:$0xc]
        %v1161 = vld [vmem:[#allocation2 + $0x10] sm:$0xf]
        %v1162 = vld [vmem:[#allocation2 + $0x14] sm:$0x3]
        %v1163 = vld [vmem:[#allocation2 + $0x18] sm:$0xc]
        %v1164 = vld [vmem:[#allocation2 + $0x1c] sm:$0xf]
        %v1165 = vld [vmem:[#allocation2 + $0x20] sm:$0x3]
        %v1166 = vld [vmem:[#allocation2 + $0x24] sm:$0xc]
        %v1167 = vld [vmem:[#allocation2 + $0x28] sm:$0xf]
        %v1168 = vld [vmem:[#allocation2 + $0x2c] sm:$0x3]
        %v1169 = vld [vmem:[#allocation2 + $0x30] sm:$0xc]
        %v1170 = vld [vmem:[#allocation2 + $0x34] sm:$0xf]
        %v1171 = vld [vmem:[#allocation2 + $0x38] sm:$0x3]
        %v1172 = vld [vmem:[#allocation2 + $0x3c] sm:$0xc]
        %v1173 = vld [vmem:[#allocation2 + $0x40] sm:$0xf]
        %v1174 = vld [vmem:[#allocation2 + $0x44] sm:$0x3]
        %v1175 = vld [vmem:[#allocation2 + $0x48] sm:$0xc]
        %v1176 = vld [vmem:[#allocation2 + $0x4c] sm:$0xf]
        %v1177 = vld [vmem:[#allocation2 + $0x50] sm:$0x3]
        %v1178 = vld [vmem:[#allocation2 + $0x54] sm:$0xc]
        %v1179 = vld [vmem:[#allocation2 + $0x58] sm:$0xf]
        %v1180 = vld [vmem:[#allocation2 + $0x5c] sm:$0x3]
        %v1205 = vunpack.c.l.b16 %v1157
        %v1206 = vunpack.c.l.b16 %v1158
        %v1207 = vunpack.c.l.b16 %v1159
        %v1208 = vunpack.c.l.b16 %v1160
        %v1209 = vunpack.c.l.b16 %v1161
        %v1210 = vunpack.c.l.b16 %v1162
        %v1211 = vunpack.c.l.b16 %v1163
        %v1212 = vunpack.c.l.b16 %v1164
        %v1213 = vunpack.c.l.b16 %v1165
        %v1214 = vunpack.c.l.b16 %v1166
        %v1215 = vunpack.c.l.b16 %v1167
        %v1216 = vunpack.c.l.b16 %v1168
        %v1217 = vunpack.c.l.b16 %v1169
        %v1218 = vunpack.c.l.b16 %v1170
        %v1219 = vunpack.c.l.b16 %v1171
        %v1220 = vunpack.c.l.b16 %v1172
        %v1221 = vunpack.c.l.b16 %v1173
        %v1222 = vunpack.c.l.b16 %v1174
        %v1223 = vunpack.c.l.b16 %v1175
        %v1224 = vunpack.c.l.b16 %v1176
        %v1225 = vunpack.c.l.b16 %v1177
        %v1226 = vunpack.c.l.b16 %v1178
        %v1227 = vunpack.c.l.b16 %v1179
        %v1228 = vunpack.c.l.b16 %v1180
        %v1229 = vpack.c.b16 %v1206, %v1205
        %v1230 = vpack.c.b16 %v1207, %v1207
        %v1231 = vpack.c.b16 %v1209, %v1208
        %v1232 = vpack.c.b16 %v1210, %v1210
        %v1233 = vpack.c.b16 %v1212, %v1211
        %v1234 = vpack.c.b16 %v1213, %v1213
        %v1235 = vpack.c.b16 %v1215, %v1214
        %v1236 = vpack.c.b16 %v1216, %v1216
        %v1237 = vpack.c.b16 %v1218, %v1217
        %v1238 = vpack.c.b16 %v1219, %v1219
        %v1239 = vpack.c.b16 %v1221, %v1220
        %v1240 = vpack.c.b16 %v1222, %v1222
        %v1241 = vpack.c.b16 %v1224, %v1223
        %v1242 = vpack.c.b16 %v1225, %v1225
        %v1243 = vpack.c.b16 %v1227, %v1226
        %v1244 = vpack.c.b16 %v1228, %v1228
        %vm1245 = vcmask 1045504
        %v1246 = vrot.slane %v1229, 2
        %v1247 = vrot.slane %v1230, 2
        %v1248 = vsel %vm1245, %v1246, %v1247
        %v1249 = vrot.slane %v1231, 2
        %v1250 = vrot.slane %v1232, 2
        %v1251 = vsel %vm1245, %v1249, %v1250
        %v1252 = vrot.slane %v1233, 2
        %v1253 = vrot.slane %v1234, 2
        %v1254 = vsel %vm1245, %v1252, %v1253
        %v1255 = vrot.slane %v1235, 2
        %v1256 = vrot.slane %v1236, 2
        %v1257 = vsel %vm1245, %v1255, %v1256
        %v1258 = vrot.slane %v1237, 2
        %v1259 = vrot.slane %v1238, 2
        %v1260 = vsel %vm1245, %v1258, %v1259
        %v1261 = vrot.slane %v1239, 2
        %v1262 = vrot.slane %v1240, 2
        %v1263 = vsel %vm1245, %v1261, %v1262
        %v1264 = vrot.slane %v1241, 2
        %v1265 = vrot.slane %v1242, 2
        %v1266 = vsel %vm1245, %v1264, %v1265
        %v1267 = vrot.slane %v1243, 2
        %v1268 = vrot.slane %v1244, 2
        %v1269 = vsel %vm1245, %v1267, %v1268
        %1278 = vst [vmem:[#allocation3 + $0x20] sm:$0xff] %v1248
        %1279 = vst [vmem:[#allocation3 + $0x48] sm:$0xff] %v1251
        %1280 = vst [vmem:[#allocation3 + $0x70] sm:$0xff] %v1254
        %1281 = vst [vmem:[#allocation3 + $0x98] sm:$0xff] %v1257
        %1282 = vst [vmem:[#allocation3 + $0xc0] sm:$0xff] %v1260
        %1283 = vst [vmem:[#allocation3 + $0xe8] sm:$0xff] %v1263
        %1284 = vst [vmem:[#allocation3 + $0x110] sm:$0xff] %v1266
        %1285 = vst [vmem:[#allocation3 + $0x138] sm:$0xff] %v1269
        %v1286 = vld [vmem:[#allocation3] sm:$0xff]
        %v1287 = vld [vmem:[#allocation3 + $0x8] sm:$0xff]
        %v1288 = vld [vmem:[#allocation3 + $0x10] sm:$0xff]
        %v1289 = vld [vmem:[#allocation3 + $0x18] sm:$0xff]
        %v1290 = vld [vmem:[#allocation3 + $0x20] sm:$0xff]
        %v1291 = vld [vmem:[#allocation3 + $0x28] sm:$0xff]
        %v1292 = vld [vmem:[#allocation3 + $0x30] sm:$0xff]
        %v1293 = vld [vmem:[#allocation3 + $0x38] sm:$0xff]
        %v1294 = vld [vmem:[#allocation3 + $0x40] sm:$0xff]
        %v1295 = vld [vmem:[#allocation3 + $0x48] sm:$0xff]
        %v1296 = vld [vmem:[#allocation3 + $0x50] sm:$0xff]
        %v1297 = vld [vmem:[#allocation3 + $0x58] sm:$0xff]
        %v1298 = vld [vmem:[#allocation3 + $0x60] sm:$0xff]
        %v1299 = vld [vmem:[#allocation3 + $0x68] sm:$0xff]
        %v1300 = vld [vmem:[#allocation3 + $0x70] sm:$0xff]
        %v1301 = vld [vmem:[#allocation3 + $0x78] sm:$0xff]
        %v1302 = vld [vmem:[#allocation3 + $0x80] sm:$0xff]
        %v1303 = vld [vmem:[#allocation3 + $0x88] sm:$0xff]
        %v1304 = vld [vmem:[#allocation3 + $0x90] sm:$0xff]
        %v1305 = vld [vmem:[#allocation3 + $0x98] sm:$0xff]
        %v1306 = vld [vmem:[#allocation3 + $0xa0] sm:$0xff]
        %v1307 = vld [vmem:[#allocation3 + $0xa8] sm:$0xff]
        %v1308 = vld [vmem:[#allocation3 + $0xb0] sm:$0xff]
        %v1309 = vld [vmem:[#allocation3 + $0xb8] sm:$0xff]
        %v1310 = vld [vmem:[#allocation3 + $0xc0] sm:$0xff]
        %v1311 = vld [vmem:[#allocation3 + $0xc8] sm:$0xff]
        %v1312 = vld [vmem:[#allocation3 + $0xd0] sm:$0xff]
        %v1313 = vld [vmem:[#allocation3 + $0xd8] sm:$0xff]
        %v1314 = vld [vmem:[#allocation3 + $0xe0] sm:$0xff]
        %v1315 = vld [vmem:[#allocation3 + $0xe8] sm:$0xff]
        %v1316 = vld [vmem:[#allocation3 + $0xf0] sm:$0xff]
        %v1317 = vld [vmem:[#allocation3 + $0xf8] sm:$0xff]
        %v1318 = vld [vmem:[#allocation3 + $0x100] sm:$0xff]
        %v1319 = vld [vmem:[#allocation3 + $0x108] sm:$0xff]
        %v1320 = vld [vmem:[#allocation3 + $0x110] sm:$0xff]
        %v1321 = vld [vmem:[#allocation3 + $0x118] sm:$0xff]
        %v1322 = vld [vmem:[#allocation3 + $0x120] sm:$0xff]
        %v1323 = vld [vmem:[#allocation3 + $0x128] sm:$0xff]
        %v1324 = vld [vmem:[#allocation3 + $0x130] sm:$0xff]
        %v1325 = vld [vmem:[#allocation3 + $0x138] sm:$0xff]
        %v1326 = vld [vmem:[%s1] sm:$0xff]
        %v1327 = vld [vmem:[%s1 + $0x8] sm:$0xff]
        %v1328 = vld [vmem:[%s1 + $0x10] sm:$0xff]
        %v1329 = vld [vmem:[%s1 + $0x18] sm:$0xff]
        %v1330 = vld [vmem:[%s1 + $0x20] sm:$0xff]
        %v1331 = vld [vmem:[%s1 + $0x28] sm:$0xff]
        %v1332 = vld [vmem:[%s1 + $0x30] sm:$0xff]
        %v1333 = vld [vmem:[%s1 + $0x38] sm:$0xff]
        %v1334 = vld [vmem:[%s1 + $0x40] sm:$0xff]
        %v1335 = vld [vmem:[%s1 + $0x48] sm:$0xff]
        %v1336 = vld [vmem:[%s1 + $0x50] sm:$0xff]
        %v1337 = vld [vmem:[%s1 + $0x58] sm:$0xff]
        %v1338 = vld [vmem:[%s1 + $0x60] sm:$0xff]
        %v1339 = vld [vmem:[%s1 + $0x68] sm:$0xff]
        %v1340 = vld [vmem:[%s1 + $0x70] sm:$0xff]
        %v1341 = vld [vmem:[%s1 + $0x78] sm:$0xff]
        %v1342 = vld [vmem:[%s1 + $0x80] sm:$0xff]
        %v1343 = vld [vmem:[%s1 + $0x88] sm:$0xff]
        %v1344 = vld [vmem:[%s1 + $0x90] sm:$0xff]
        %v1345 = vld [vmem:[%s1 + $0x98] sm:$0xff]
        %v1346 = vld [vmem:[%s1 + $0xa0] sm:$0xff]
        %v1347 = vld [vmem:[%s1 + $0xa8] sm:$0xff]
        %v1348 = vld [vmem:[%s1 + $0xb0] sm:$0xff]
        %v1349 = vld [vmem:[%s1 + $0xb8] sm:$0xff]
        %v1350 = vld [vmem:[%s1 + $0xc0] sm:$0xff]
        %v1351 = vld [vmem:[%s1 + $0xc8] sm:$0xff]
        %v1352 = vld [vmem:[%s1 + $0xd0] sm:$0xff]
        %v1353 = vld [vmem:[%s1 + $0xd8] sm:$0xff]
        %v1354 = vld [vmem:[%s1 + $0xe0] sm:$0xff]
        %v1355 = vld [vmem:[%s1 + $0xe8] sm:$0xff]
        %v1356 = vld [vmem:[%s1 + $0xf0] sm:$0xff]
        %v1357 = vld [vmem:[%s1 + $0xf8] sm:$0xff]
        %v1358 = vld [vmem:[%s1 + $0x100] sm:$0xff]
        %v1359 = vld [vmem:[%s1 + $0x108] sm:$0xff]
        %v1360 = vld [vmem:[%s1 + $0x110] sm:$0xff]
        %v1361 = vld [vmem:[%s1 + $0x118] sm:$0xff]
        %v1362 = vld [vmem:[%s1 + $0x120] sm:$0xff]
        %v1363 = vld [vmem:[%s1 + $0x128] sm:$0xff]
        %v1364 = vld [vmem:[%s1 + $0x130] sm:$0xff]
        %v1365 = vld [vmem:[%s1 + $0x138] sm:$0xff]
        %v1366 = vld [vmem:[%s1 + $0x140] sm:$0xff]
        %v1367 = vld [vmem:[%s1 + $0x148] sm:$0xff]
        %v1368 = vld [vmem:[%s1 + $0x150] sm:$0xff]
        %v1369 = vld [vmem:[%s1 + $0x158] sm:$0xff]
        %v1370 = vld [vmem:[%s1 + $0x160] sm:$0xff]
        %v1371 = vld [vmem:[%s1 + $0x168] sm:$0xff]
        %v1372 = vld [vmem:[%s1 + $0x170] sm:$0xff]
        %v1373 = vld [vmem:[%s1 + $0x178] sm:$0xff]
        %v1374 = vld [vmem:[%s1 + $0x180] sm:$0xff]
        %v1375 = vld [vmem:[%s1 + $0x188] sm:$0xff]
        %v1376 = vld [vmem:[%s1 + $0x190] sm:$0xff]
        %v1377 = vld [vmem:[%s1 + $0x198] sm:$0xff]
        %v1378 = vld [vmem:[%s1 + $0x1a0] sm:$0xff]
        %v1379 = vld [vmem:[%s1 + $0x1a8] sm:$0xff]
        %v1380 = vld [vmem:[%s1 + $0x1b0] sm:$0xff]
        %v1381 = vld [vmem:[%s1 + $0x1b8] sm:$0xff]
        %v1382 = vld [vmem:[%s1 + $0x1c0] sm:$0xff]
        %v1383 = vld [vmem:[%s1 + $0x1c8] sm:$0xff]
        %v1384 = vld [vmem:[%s1 + $0x1d0] sm:$0xff]
        %v1385 = vld [vmem:[%s1 + $0x1d8] sm:$0xff]
        %v1386 = vld [vmem:[%s1 + $0x1e0] sm:$0xff]
        %v1387 = vld [vmem:[%s1 + $0x1e8] sm:$0xff]
        %v1388 = vld [vmem:[%s1 + $0x1f0] sm:$0xff]
        %v1389 = vld [vmem:[%s1 + $0x1f8] sm:$0xff]
        %v1390 = vld [vmem:[%s1 + $0x200] sm:$0xff]
        %v1391 = vld [vmem:[%s1 + $0x208] sm:$0xff]
        %v1392 = vld [vmem:[%s1 + $0x210] sm:$0xff]
        %v1393 = vld [vmem:[%s1 + $0x218] sm:$0xff]
        %v1394 = vld [vmem:[%s1 + $0x220] sm:$0xff]
        %v1395 = vld [vmem:[%s1 + $0x228] sm:$0xff]
        %v1396 = vld [vmem:[%s1 + $0x230] sm:$0xff]
        %v1397 = vld [vmem:[%s1 + $0x238] sm:$0xff]
        %v1398 = vld [vmem:[%s1 + $0x240] sm:$0xff]
        %v1399 = vld [vmem:[%s1 + $0x248] sm:$0xff]
        %v1400 = vld [vmem:[%s1 + $0x250] sm:$0xff]
        %v1401 = vld [vmem:[%s1 + $0x258] sm:$0xff]
        %v1402 = vld [vmem:[%s1 + $0x260] sm:$0xff]
        %v1403 = vld [vmem:[%s1 + $0x268] sm:$0xff]
        %v1404 = vld [vmem:[%s1 + $0x270] sm:$0xff]
        %v1405 = vld [vmem:[%s1 + $0x278] sm:$0xff]
        %v1406 = vld [vmem:[%s2] sm:$0x3]
        %v1408 = vlaneseq
        %v1409 = vshrl.u32 %v1408, 7
        %v1410 = vsub.s32 0, %v1409
        %v1411 = vrot.slane %v1406, %v1410
        %v1412 = vlaneseq
        %v1413 = vshrl.u32 %v1412, 7
        %v1414 = vsub.s32 1, %v1413
        %v1415 = vrot.slane %v1406, %v1414
        %v1498 = vunpack.c.l.b16 %v1326
        %v1499 = vunpack.c.h.b16 %v1326
        %v1500 = vunpack.c.l.b16 %v1327
        %v1501 = vunpack.c.h.b16 %v1327
        %v1502 = vunpack.c.l.b16 %v1328
        %v1503 = vunpack.c.h.b16 %v1328
        %v1504 = vunpack.c.l.b16 %v1329
        %v1505 = vunpack.c.h.b16 %v1329
        %v1506 = vunpack.c.l.b16 %v1330
        %v1507 = vunpack.c.h.b16 %v1330
        %v1508 = vunpack.c.l.b16 %v1331
        %v1509 = vunpack.c.h.b16 %v1331
        %v1510 = vunpack.c.l.b16 %v1332
        %v1511 = vunpack.c.h.b16 %v1332
        %v1512 = vunpack.c.l.b16 %v1333
        %v1513 = vunpack.c.h.b16 %v1333
        %v1514 = vunpack.c.l.b16 %v1334
        %v1515 = vunpack.c.h.b16 %v1334
        %v1516 = vunpack.c.l.b16 %v1335
        %v1517 = vunpack.c.h.b16 %v1335
        %v1518 = vunpack.c.l.b16 %v1336
        %v1519 = vunpack.c.h.b16 %v1336
        %v1520 = vunpack.c.l.b16 %v1337
        %v1521 = vunpack.c.h.b16 %v1337
        %v1522 = vunpack.c.l.b16 %v1338
        %v1523 = vunpack.c.h.b16 %v1338
        %v1524 = vunpack.c.l.b16 %v1339
        %v1525 = vunpack.c.h.b16 %v1339
        %v1526 = vunpack.c.l.b16 %v1340
        %v1527 = vunpack.c.h.b16 %v1340
        %v1528 = vunpack.c.l.b16 %v1341
        %v1529 = vunpack.c.h.b16 %v1341
        %v1530 = vunpack.c.l.b16 %v1342
        %v1531 = vunpack.c.h.b16 %v1342
        %v1532 = vunpack.c.l.b16 %v1343
        %v1533 = vunpack.c.h.b16 %v1343
        %v1534 = vunpack.c.l.b16 %v1344
        %v1535 = vunpack.c.h.b16 %v1344
        %v1536 = vunpack.c.l.b16 %v1345
        %v1537 = vunpack.c.h.b16 %v1345
        %v1538 = vunpack.c.l.b16 %v1346
        %v1539 = vunpack.c.h.b16 %v1346
        %v1540 = vunpack.c.l.b16 %v1347
        %v1541 = vunpack.c.h.b16 %v1347
        %v1542 = vunpack.c.l.b16 %v1348
        %v1543 = vunpack.c.h.b16 %v1348
        %v1544 = vunpack.c.l.b16 %v1349
        %v1545 = vunpack.c.h.b16 %v1349
        %v1546 = vunpack.c.l.b16 %v1350
        %v1547 = vunpack.c.h.b16 %v1350
        %v1548 = vunpack.c.l.b16 %v1351
        %v1549 = vunpack.c.h.b16 %v1351
        %v1550 = vunpack.c.l.b16 %v1352
        %v1551 = vunpack.c.h.b16 %v1352
        %v1552 = vunpack.c.l.b16 %v1353
        %v1553 = vunpack.c.h.b16 %v1353
        %v1554 = vunpack.c.l.b16 %v1354
        %v1555 = vunpack.c.h.b16 %v1354
        %v1556 = vunpack.c.l.b16 %v1355
        %v1557 = vunpack.c.h.b16 %v1355
        %v1558 = vunpack.c.l.b16 %v1356
        %v1559 = vunpack.c.h.b16 %v1356
        %v1560 = vunpack.c.l.b16 %v1357
        %v1561 = vunpack.c.h.b16 %v1357
        %v1562 = vunpack.c.l.b16 %v1358
        %v1563 = vunpack.c.h.b16 %v1358
        %v1564 = vunpack.c.l.b16 %v1359
        %v1565 = vunpack.c.h.b16 %v1359
        %v1566 = vunpack.c.l.b16 %v1360
        %v1567 = vunpack.c.h.b16 %v1360
        %v1568 = vunpack.c.l.b16 %v1361
        %v1569 = vunpack.c.h.b16 %v1361
        %v1570 = vunpack.c.l.b16 %v1362
        %v1571 = vunpack.c.h.b16 %v1362
        %v1572 = vunpack.c.l.b16 %v1363
        %v1573 = vunpack.c.h.b16 %v1363
        %v1574 = vunpack.c.l.b16 %v1364
        %v1575 = vunpack.c.h.b16 %v1364
        %v1576 = vunpack.c.l.b16 %v1365
        %v1577 = vunpack.c.h.b16 %v1365
        %v1578 = vunpack.c.l.b16 %v1366
        %v1579 = vunpack.c.h.b16 %v1366
        %v1580 = vunpack.c.l.b16 %v1367
        %v1581 = vunpack.c.h.b16 %v1367
        %v1582 = vunpack.c.l.b16 %v1368
        %v1583 = vunpack.c.h.b16 %v1368
        %v1584 = vunpack.c.l.b16 %v1369
        %v1585 = vunpack.c.h.b16 %v1369
        %v1586 = vunpack.c.l.b16 %v1370
        %v1587 = vunpack.c.h.b16 %v1370
        %v1588 = vunpack.c.l.b16 %v1371
        %v1589 = vunpack.c.h.b16 %v1371
        %v1590 = vunpack.c.l.b16 %v1372
        %v1591 = vunpack.c.h.b16 %v1372
        %v1592 = vunpack.c.l.b16 %v1373
        %v1593 = vunpack.c.h.b16 %v1373
        %v1594 = vunpack.c.l.b16 %v1374
        %v1595 = vunpack.c.h.b16 %v1374
        %v1596 = vunpack.c.l.b16 %v1375
        %v1597 = vunpack.c.h.b16 %v1375
        %v1598 = vunpack.c.l.b16 %v1376
        %v1599 = vunpack.c.h.b16 %v1376
        %v1600 = vunpack.c.l.b16 %v1377
        %v1601 = vunpack.c.h.b16 %v1377
        %v1602 = vunpack.c.l.b16 %v1378
        %v1603 = vunpack.c.h.b16 %v1378
        %v1604 = vunpack.c.l.b16 %v1379
        %v1605 = vunpack.c.h.b16 %v1379
        %v1606 = vunpack.c.l.b16 %v1380
        %v1607 = vunpack.c.h.b16 %v1380
        %v1608 = vunpack.c.l.b16 %v1381
        %v1609 = vunpack.c.h.b16 %v1381
        %v1610 = vunpack.c.l.b16 %v1382
        %v1611 = vunpack.c.h.b16 %v1382
        %v1612 = vunpack.c.l.b16 %v1383
        %v1613 = vunpack.c.h.b16 %v1383
        %v1614 = vunpack.c.l.b16 %v1384
        %v1615 = vunpack.c.h.b16 %v1384
        %v1616 = vunpack.c.l.b16 %v1385
        %v1617 = vunpack.c.h.b16 %v1385
        %v1618 = vunpack.c.l.b16 %v1386
        %v1619 = vunpack.c.h.b16 %v1386
        %v1620 = vunpack.c.l.b16 %v1387
        %v1621 = vunpack.c.h.b16 %v1387
        %v1622 = vunpack.c.l.b16 %v1388
        %v1623 = vunpack.c.h.b16 %v1388
        %v1624 = vunpack.c.l.b16 %v1389
        %v1625 = vunpack.c.h.b16 %v1389
        %v1626 = vunpack.c.l.b16 %v1390
        %v1627 = vunpack.c.h.b16 %v1390
        %v1628 = vunpack.c.l.b16 %v1391
        %v1629 = vunpack.c.h.b16 %v1391
        %v1630 = vunpack.c.l.b16 %v1392
        %v1631 = vunpack.c.h.b16 %v1392
        %v1632 = vunpack.c.l.b16 %v1393
        %v1633 = vunpack.c.h.b16 %v1393
        %v1634 = vunpack.c.l.b16 %v1394
        %v1635 = vunpack.c.h.b16 %v1394
        %v1636 = vunpack.c.l.b16 %v1395
        %v1637 = vunpack.c.h.b16 %v1395
        %v1638 = vunpack.c.l.b16 %v1396
        %v1639 = vunpack.c.h.b16 %v1396
        %v1640 = vunpack.c.l.b16 %v1397
        %v1641 = vunpack.c.h.b16 %v1397
        %v1642 = vunpack.c.l.b16 %v1398
        %v1643 = vunpack.c.h.b16 %v1398
        %v1644 = vunpack.c.l.b16 %v1399
        %v1645 = vunpack.c.h.b16 %v1399
        %v1646 = vunpack.c.l.b16 %v1400
        %v1647 = vunpack.c.h.b16 %v1400
        %v1648 = vunpack.c.l.b16 %v1401
        %v1649 = vunpack.c.h.b16 %v1401
        %v1650 = vunpack.c.l.b16 %v1402
        %v1651 = vunpack.c.h.b16 %v1402
        %v1652 = vunpack.c.l.b16 %v1403
        %v1653 = vunpack.c.h.b16 %v1403
        %v1654 = vunpack.c.l.b16 %v1404
        %v1655 = vunpack.c.h.b16 %v1404
        %v1656 = vunpack.c.l.b16 %v1405
        %v1657 = vunpack.c.h.b16 %v1405
        %v1658 = vpack.c.b16 %v1500, %v1498
        %v1659 = vpack.c.b16 %v1501, %v1499
        %v1660 = vpack.c.b16 %v1504, %v1502
        %v1661 = vpack.c.b16 %v1505, %v1503
        %v1662 = vpack.c.b16 %v1508, %v1506
        %v1663 = vpack.c.b16 %v1509, %v1507
        %v1664 = vpack.c.b16 %v1512, %v1510
        %v1665 = vpack.c.b16 %v1513, %v1511
        %v1666 = vpack.c.b16 %v1516, %v1514
        %v1667 = vpack.c.b16 %v1517, %v1515
        %v1668 = vpack.c.b16 %v1520, %v1518
        %v1669 = vpack.c.b16 %v1521, %v1519
        %v1670 = vpack.c.b16 %v1524, %v1522
        %v1671 = vpack.c.b16 %v1525, %v1523
        %v1672 = vpack.c.b16 %v1528, %v1526
        %v1673 = vpack.c.b16 %v1529, %v1527
        %v1674 = vpack.c.b16 %v1532, %v1530
        %v1675 = vpack.c.b16 %v1533, %v1531
        %v1676 = vpack.c.b16 %v1536, %v1534
        %v1677 = vpack.c.b16 %v1537, %v1535
        %v1678 = vpack.c.b16 %v1540, %v1538
        %v1679 = vpack.c.b16 %v1541, %v1539
        %v1680 = vpack.c.b16 %v1544, %v1542
        %v1681 = vpack.c.b16 %v1545, %v1543
        %v1682 = vpack.c.b16 %v1548, %v1546
        %v1683 = vpack.c.b16 %v1549, %v1547
        %v1684 = vpack.c.b16 %v1552, %v1550
        %v1685 = vpack.c.b16 %v1553, %v1551
        %v1686 = vpack.c.b16 %v1556, %v1554
        %v1687 = vpack.c.b16 %v1557, %v1555
        %v1688 = vpack.c.b16 %v1560, %v1558
        %v1689 = vpack.c.b16 %v1561, %v1559
        %v1690 = vpack.c.b16 %v1564, %v1562
        %v1691 = vpack.c.b16 %v1565, %v1563
        %v1692 = vpack.c.b16 %v1568, %v1566
        %v1693 = vpack.c.b16 %v1569, %v1567
        %v1694 = vpack.c.b16 %v1572, %v1570
        %v1695 = vpack.c.b16 %v1573, %v1571
        %v1696 = vpack.c.b16 %v1576, %v1574
        %v1697 = vpack.c.b16 %v1577, %v1575
        %v1698 = vpack.c.b16 %v1580, %v1578
        %v1699 = vpack.c.b16 %v1581, %v1579
        %v1700 = vpack.c.b16 %v1584, %v1582
        %v1701 = vpack.c.b16 %v1585, %v1583
        %v1702 = vpack.c.b16 %v1588, %v1586
        %v1703 = vpack.c.b16 %v1589, %v1587
        %v1704 = vpack.c.b16 %v1592, %v1590
        %v1705 = vpack.c.b16 %v1593, %v1591
        %v1706 = vpack.c.b16 %v1596, %v1594
        %v1707 = vpack.c.b16 %v1597, %v1595
        %v1708 = vpack.c.b16 %v1600, %v1598
        %v1709 = vpack.c.b16 %v1601, %v1599
        %v1710 = vpack.c.b16 %v1604, %v1602
        %v1711 = vpack.c.b16 %v1605, %v1603
        %v1712 = vpack.c.b16 %v1608, %v1606
        %v1713 = vpack.c.b16 %v1609, %v1607
        %v1714 = vpack.c.b16 %v1612, %v1610
        %v1715 = vpack.c.b16 %v1613, %v1611
        %v1716 = vpack.c.b16 %v1616, %v1614
        %v1717 = vpack.c.b16 %v1617, %v1615
        %v1718 = vpack.c.b16 %v1620, %v1618
        %v1719 = vpack.c.b16 %v1621, %v1619
        %v1720 = vpack.c.b16 %v1624, %v1622
        %v1721 = vpack.c.b16 %v1625, %v1623
        %v1722 = vpack.c.b16 %v1628, %v1626
        %v1723 = vpack.c.b16 %v1629, %v1627
        %v1724 = vpack.c.b16 %v1632, %v1630
        %v1725 = vpack.c.b16 %v1633, %v1631
        %v1726 = vpack.c.b16 %v1636, %v1634
        %v1727 = vpack.c.b16 %v1637, %v1635
        %v1728 = vpack.c.b16 %v1640, %v1638
        %v1729 = vpack.c.b16 %v1641, %v1639
        %v1730 = vpack.c.b16 %v1644, %v1642
        %v1731 = vpack.c.b16 %v1645, %v1643
        %v1732 = vpack.c.b16 %v1648, %v1646
        %v1733 = vpack.c.b16 %v1649, %v1647
        %v1734 = vpack.c.b16 %v1652, %v1650
        %v1735 = vpack.c.b16 %v1653, %v1651
        %v1736 = vpack.c.b16 %v1656, %v1654
        %v1737 = vpack.c.b16 %v1657, %v1655
        %1818 = vmatprep.subr.bf16.mxu0 %v1659
        %1819 = vmatpush1.bf16.msra.mxu0 %v1658
        %1820 = vmatprep.subr.bf16.mxu0 %v1661
        %1821 = vmatpush1.bf16.msra.mxu0 %v1660
        %1822 = vmatprep.subr.bf16.mxu0 %v1663
        %1823 = vmatpush1.bf16.msra.mxu0 %v1662
        %1824 = vmatprep.subr.bf16.mxu0 %v1665
        %1825 = vmatpush1.bf16.msra.mxu0 %v1664
        %1826 = vmatprep.subr.bf16.mxu0 %v1667
        %1827 = vmatpush1.bf16.msra.mxu0 %v1666
        %1828 = vmatprep.subr.bf16.mxu0 %v1669
        %1829 = vmatpush1.bf16.msra.mxu0 %v1668
        %1830 = vmatprep.subr.bf16.mxu0 %v1671
        %1831 = vmatpush1.bf16.msra.mxu0 %v1670
        %1832 = vmatprep.subr.bf16.mxu0 %v1673
        %1833 = vmatpush1.bf16.msra.mxu0 %v1672
        %1834 = vmatprep.subr.bf16.mxu0 %v1675
        %1835 = vmatpush1.bf16.msra.mxu0 %v1674
        %1836 = vmatprep.subr.bf16.mxu0 %v1677
        %1837 = vmatpush1.bf16.msra.mxu0 %v1676
        %1838 = vmatprep.subr.bf16.mxu0 %v1679
        %1839 = vmatpush1.bf16.msra.mxu0 %v1678
        %1840 = vmatprep.subr.bf16.mxu0 %v1681
        %1841 = vmatpush1.bf16.msra.mxu0 %v1680
        %1842 = vmatprep.subr.bf16.mxu0 %v1683
        %1843 = vmatpush1.bf16.msra.mxu0 %v1682
        %1844 = vmatprep.subr.bf16.mxu0 %v1685
        %1845 = vmatpush1.bf16.msra.mxu0 %v1684
        %1846 = vmatprep.subr.bf16.mxu0 %v1687
        %1847 = vmatpush1.bf16.msra.mxu0 %v1686
        %1848 = vmatprep.subr.bf16.mxu0 %v1689
        %1849 = vmatpush1.bf16.msra.mxu0 %v1688
        %1850 = vmatprep.mubr.bf16.mxu0 %v1287
        %1851 = vmatmul.mubr.bf16.gmra.mrb[0].mxu0 %v1286
        %v1852 = vpop.f32.mrb[0].mxu0
        %v1853 = vadd.f32 %v1411, %v1852
        %v1854 = vpop.f32.mrb[0].mxu0
        %v1855 = vadd.f32 %v1415, %v1854
        %v1856 = vpop.f32.mrb[0].mxu0
        %v1857 = vadd.f32 %v1411, %v1856
        %v1858 = vpop.f32.mrb[0].mxu0
        %v1859 = vadd.f32 %v1415, %v1858
        %1860 = vmatprep.mubr.bf16.mxu0 %v1292
        %1861 = vmatmul.mubr.bf16.gmra.mrb[0].mxu0 %v1291
        %v1862 = vpop.f32.mrb[0].mxu0
        %v1863 = vadd.f32 %v1411, %v1862
        %v1864 = vpop.f32.mrb[0].mxu0
        %v1865 = vadd.f32 %v1415, %v1864
        %v1866 = vpop.f32.mrb[0].mxu0
        %v1867 = vadd.f32 %v1411, %v1866
        %v1868 = vpop.f32.mrb[0].mxu0
        %v1869 = vadd.f32 %v1415, %v1868
        %1870 = vmatprep.mubr.bf16.mxu0 %v1297
        %1871 = vmatmul.mubr.bf16.gmra.mrb[0].mxu0 %v1296
        %v1872 = vpop.f32.mrb[0].mxu0
        %v1873 = vadd.f32 %v1411, %v1872
        %v1874 = vpop.f32.mrb[0].mxu0
        %v1875 = vadd.f32 %v1415, %v1874
        %v1876 = vpop.f32.mrb[0].mxu0
        %v1877 = vadd.f32 %v1411, %v1876
        %v1878 = vpop.f32.mrb[0].mxu0
        %v1879 = vadd.f32 %v1415, %v1878
        %1880 = vmatprep.mubr.bf16.mxu0 %v1302
        %1881 = vmatmul.mubr.bf16.gmra.mrb[0].mxu0 %v1301
        %v1882 = vpop.f32.mrb[0].mxu0
        %v1883 = vadd.f32 %v1411, %v1882
        %v1884 = vpop.f32.mrb[0].mxu0
        %v1885 = vadd.f32 %v1415, %v1884
        %v1886 = vpop.f32.mrb[0].mxu0
        %v1887 = vadd.f32 %v1411, %v1886
        %v1888 = vpop.f32.mrb[0].mxu0
        %v1889 = vadd.f32 %v1415, %v1888
        %1890 = vmatprep.mubr.bf16.mxu0 %v1307
        %1891 = vmatmul.mubr.bf16.gmra.mrb[0].mxu0 %v1306
        %v1892 = vpop.f32.mrb[0].mxu0
        %v1893 = vadd.f32 %v1411, %v1892
        %v1894 = vpop.f32.mrb[0].mxu0
        %v1895 = vadd.f32 %v1415, %v1894
        %v1896 = vpop.f32.mrb[0].mxu0
        %v1897 = vadd.f32 %v1411, %v1896
        %v1898 = vpop.f32.mrb[0].mxu0
        %v1899 = vadd.f32 %v1415, %v1898
        %1900 = vmatprep.mubr.bf16.mxu0 %v1312
        %1901 = vmatmul.mubr.bf16.gmra.mrb[0].mxu0 %v1311
        %v1902 = vpop.f32.mrb[0].mxu0
        %v1903 = vadd.f32 %v1411, %v1902
        %v1904 = vpop.f32.mrb[0].mxu0
        %v1905 = vadd.f32 %v1415, %v1904
        %v1906 = vpop.f32.mrb[0].mxu0
        %v1907 = vadd.f32 %v1411, %v1906
        %v1908 = vpop.f32.mrb[0].mxu0
        %v1909 = vadd.f32 %v1415, %v1908
        %1910 = vmatprep.mubr.bf16.mxu0 %v1317
        %1911 = vmatmul.mubr.bf16.gmra.mrb[0].mxu0 %v1316
        %v1912 = vpop.f32.mrb[0].mxu0
        %v1913 = vadd.f32 %v1411, %v1912
        %v1914 = vpop.f32.mrb[0].mxu0
        %v1915 = vadd.f32 %v1415, %v1914
        %v1916 = vpop.f32.mrb[0].mxu0
        %v1917 = vadd.f32 %v1411, %v1916
        %v1918 = vpop.f32.mrb[0].mxu0
        %v1919 = vadd.f32 %v1415, %v1918
        %1920 = vmatprep.mubr.bf16.mxu0 %v1322
        %1921 = vmatmul.mubr.bf16.gmra.mrb[0].mxu0 %v1321
        %v1922 = vpop.f32.mrb[0].mxu0
        %v1923 = vadd.f32 %v1411, %v1922
        %v1924 = vpop.f32.mrb[0].mxu0
        %v1925 = vadd.f32 %v1415, %v1924
        %v1926 = vpop.f32.mrb[0].mxu0
        %v1927 = vadd.f32 %v1411, %v1926
        %v1928 = vpop.f32.mrb[0].mxu0
        %v1929 = vadd.f32 %v1415, %v1928
        %1930 = vdwg.mxu0
        %1931 = vmatprep.subr.bf16.mxu0 %v1691
        %1932 = vmatpush1.bf16.msra.mxu0 %v1690
        %1933 = vmatprep.subr.bf16.mxu0 %v1693
        %1934 = vmatpush1.bf16.msra.mxu0 %v1692
        %1935 = vmatprep.subr.bf16.mxu0 %v1695
        %1936 = vmatpush1.bf16.msra.mxu0 %v1694
        %1937 = vmatprep.subr.bf16.mxu0 %v1697
        %1938 = vmatpush1.bf16.msra.mxu0 %v1696
        %1939 = vmatprep.subr.bf16.mxu0 %v1699
        %1940 = vmatpush1.bf16.msra.mxu0 %v1698
        %1941 = vmatprep.subr.bf16.mxu0 %v1701
        %1942 = vmatpush1.bf16.msra.mxu0 %v1700
        %1943 = vmatprep.subr.bf16.mxu0 %v1703
        %1944 = vmatpush1.bf16.msra.mxu0 %v1702
        %1945 = vmatprep.subr.bf16.mxu0 %v1705
        %1946 = vmatpush1.bf16.msra.mxu0 %v1704
        %1947 = vmatprep.subr.bf16.mxu0 %v1707
        %1948 = vmatpush1.bf16.msra.mxu0 %v1706
        %1949 = vmatprep.subr.bf16.mxu0 %v1709
        %1950 = vmatpush1.bf16.msra.mxu0 %v1708
        %1951 = vmatprep.subr.bf16.mxu0 %v1711
        %1952 = vmatpush1.bf16.msra.mxu0 %v1710
        %1953 = vmatprep.subr.bf16.mxu0 %v1713
        %1954 = vmatpush1.bf16.msra.mxu0 %v1712
        %1955 = vmatprep.subr.bf16.mxu0 %v1715
        %1956 = vmatpush1.bf16.msra.mxu0 %v1714
        %1957 = vmatprep.subr.bf16.mxu0 %v1717
        %1958 = vmatpush1.bf16.msra.mxu0 %v1716
        %1959 = vmatprep.subr.bf16.mxu0 %v1719
        %1960 = vmatpush1.bf16.msra.mxu0 %v1718
        %1961 = vmatprep.subr.bf16.mxu0 %v1721
        %1962 = vmatpush1.bf16.msra.mxu0 %v1720
        %1963 = vmatprep.mubr.bf16.mxu0 %v1289
        %1964 = vmatmul.mubr.bf16.gmra.mrb[0].mxu0 %v1288
        %v1965 = vpop.f32.mrb[0].mxu0
        %v1966 = vadd.f32 %v1853, %v1965
        %v1967 = vpop.f32.mrb[0].mxu0
        %v1968 = vadd.f32 %v1855, %v1967
        %v1969 = vpop.f32.mrb[0].mxu0
        %v1970 = vadd.f32 %v1857, %v1969
        %v1971 = vpop.f32.mrb[0].mxu0
        %v1972 = vadd.f32 %v1859, %v1971
        %1973 = vmatprep.mubr.bf16.mxu0 %v1294
        %1974 = vmatmul.mubr.bf16.gmra.mrb[0].mxu0 %v1293
        %v1975 = vpop.f32.mrb[0].mxu0
        %v1976 = vadd.f32 %v1863, %v1975
        %v1977 = vpop.f32.mrb[0].mxu0
        %v1978 = vadd.f32 %v1865, %v1977
        %v1979 = vpop.f32.mrb[0].mxu0
        %v1980 = vadd.f32 %v1867, %v1979
        %v1981 = vpop.f32.mrb[0].mxu0
        %v1982 = vadd.f32 %v1869, %v1981
        %1983 = vmatprep.mubr.bf16.mxu0 %v1299
        %1984 = vmatmul.mubr.bf16.gmra.mrb[0].mxu0 %v1298
        %v1985 = vpop.f32.mrb[0].mxu0
        %v1986 = vadd.f32 %v1873, %v1985
        %v1987 = vpop.f32.mrb[0].mxu0
        %v1988 = vadd.f32 %v1875, %v1987
        %v1989 = vpop.f32.mrb[0].mxu0
        %v1990 = vadd.f32 %v1877, %v1989
        %v1991 = vpop.f32.mrb[0].mxu0
        %v1992 = vadd.f32 %v1879, %v1991
        %1993 = vmatprep.mubr.bf16.mxu0 %v1304
        %1994 = vmatmul.mubr.bf16.gmra.mrb[0].mxu0 %v1303
        %v1995 = vpop.f32.mrb[0].mxu0
        %v1996 = vadd.f32 %v1883, %v1995
        %v1997 = vpop.f32.mrb[0].mxu0
        %v1998 = vadd.f32 %v1885, %v1997
        %v1999 = vpop.f32.mrb[0].mxu0
        %v2000 = vadd.f32 %v1887, %v1999
        %v2001 = vpop.f32.mrb[0].mxu0
        %v2002 = vadd.f32 %v1889, %v2001
        %2003 = vmatprep.mubr.bf16.mxu0 %v1309
        %2004 = vmatmul.mubr.bf16.gmra.mrb[0].mxu0 %v1308
        %v2005 = vpop.f32.mrb[0].mxu0
        %v2006 = vadd.f32 %v1893, %v2005
        %v2007 = vpop.f32.mrb[0].mxu0
        %v2008 = vadd.f32 %v1895, %v2007
        %v2009 = vpop.f32.mrb[0].mxu0
        %v2010 = vadd.f32 %v1897, %v2009
        %v2011 = vpop.f32.mrb[0].mxu0
        %v2012 = vadd.f32 %v1899, %v2011
        %2013 = vmatprep.mubr.bf16.mxu0 %v1314
        %2014 = vmatmul.mubr.bf16.gmra.mrb[0].mxu0 %v1313
        %v2015 = vpop.f32.mrb[0].mxu0
        %v2016 = vadd.f32 %v1903, %v2015
        %v2017 = vpop.f32.mrb[0].mxu0
        %v2018 = vadd.f32 %v1905, %v2017
        %v2019 = vpop.f32.mrb[0].mxu0
        %v2020 = vadd.f32 %v1907, %v2019
        %v2021 = vpop.f32.mrb[0].mxu0
        %v2022 = vadd.f32 %v1909, %v2021
        %2023 = vmatprep.mubr.bf16.mxu0 %v1319
        %2024 = vmatmul.mubr.bf16.gmra.mrb[0].mxu0 %v1318
        %v2025 = vpop.f32.mrb[0].mxu0
        %v2026 = vadd.f32 %v1913, %v2025
        %v2027 = vpop.f32.mrb[0].mxu0
        %v2028 = vadd.f32 %v1915, %v2027
        %v2029 = vpop.f32.mrb[0].mxu0
        %v2030 = vadd.f32 %v1917, %v2029
        %v2031 = vpop.f32.mrb[0].mxu0
        %v2032 = vadd.f32 %v1919, %v2031
        %2033 = vmatprep.mubr.bf16.mxu0 %v1324
        %2034 = vmatmul.mubr.bf16.gmra.mrb[0].mxu0 %v1323
        %v2035 = vpop.f32.mrb[0].mxu0
        %v2036 = vadd.f32 %v1923, %v2035
        %v2037 = vpop.f32.mrb[0].mxu0
        %v2038 = vadd.f32 %v1925, %v2037
        %v2039 = vpop.f32.mrb[0].mxu0
        %v2040 = vadd.f32 %v1927, %v2039
        %v2041 = vpop.f32.mrb[0].mxu0
        %v2042 = vadd.f32 %v1929, %v2041
        %2043 = vdwg.mxu0
        %2044 = vmatprep.subr.bf16.mxu0 %v1723
        %2045 = vmatpush1.bf16.msra.mxu0 %v1722
        %2046 = vmatprep.subr.bf16.mxu0 %v1725
        %2047 = vmatpush1.bf16.msra.mxu0 %v1724
        %2048 = vmatprep.subr.bf16.mxu0 %v1727
        %2049 = vmatpush1.bf16.msra.mxu0 %v1726
        %2050 = vmatprep.subr.bf16.mxu0 %v1729
        %2051 = vmatpush1.bf16.msra.mxu0 %v1728
        %2052 = vmatprep.subr.bf16.mxu0 %v1731
        %2053 = vmatpush1.bf16.msra.mxu0 %v1730
        %2054 = vmatprep.subr.bf16.mxu0 %v1733
        %2055 = vmatpush1.bf16.msra.mxu0 %v1732
        %2056 = vmatprep.subr.bf16.mxu0 %v1735
        %2057 = vmatpush1.bf16.msra.mxu0 %v1734
        %2058 = vmatprep.subr.bf16.mxu0 %v1737
        %2059 = vmatpush1.bf16.msra.mxu0 %v1736
        %2060 = vmatprep.subr.bf16.mxu0 0
        %2061 = vmatpush1.bf16.msra.mxu0 0
        %2062 = vmatprep.subr.bf16.mxu0 0
        %2063 = vmatpush1.bf16.msra.mxu0 0
        %2064 = vmatprep.subr.bf16.mxu0 0
        %2065 = vmatpush1.bf16.msra.mxu0 0
        %2066 = vmatprep.subr.bf16.mxu0 0
        %2067 = vmatpush1.bf16.msra.mxu0 0
        %2068 = vmatprep.subr.bf16.mxu0 0
        %2069 = vmatpush1.bf16.msra.mxu0 0
        %2070 = vmatprep.subr.bf16.mxu0 0
        %2071 = vmatpush1.bf16.msra.mxu0 0
        %2072 = vmatprep.subr.bf16.mxu0 0
        %2073 = vmatpush1.bf16.msra.mxu0 0
        %2074 = vmatprep.subr.bf16.mxu0 0
        %2075 = vmatpush1.bf16.msra.mxu0 0
        %2076 = vmatprep.mubr.bf16.mxu0 0
        %2077 = vmatmul.mubr.bf16.gmra.mrb[0].mxu0 %v1290
        %v2078 = vpop.f32.mrb[0].mxu0
        %v2079 = vadd.f32 %v1966, %v2078
        %v2080 = vpop.f32.mrb[0].mxu0
        %v2081 = vadd.f32 %v1968, %v2080
        %v2082 = vpop.f32.mrb[0].mxu0
        %v2083 = vadd.f32 %v1970, %v2082
        %v2084 = vpop.f32.mrb[0].mxu0
        %v2085 = vadd.f32 %v1972, %v2084
        %2086 = vmatprep.mubr.bf16.mxu0 0
        %2087 = vmatmul.mubr.bf16.gmra.mrb[0].mxu0 %v1295
        %v2088 = vpop.f32.mrb[0].mxu0
        %v2089 = vadd.f32 %v1976, %v2088
        %v2090 = vpop.f32.mrb[0].mxu0
        %v2091 = vadd.f32 %v1978, %v2090
        %v2092 = vpop.f32.mrb[0].mxu0
        %v2093 = vadd.f32 %v1980, %v2092
        %v2094 = vpop.f32.mrb[0].mxu0
        %v2095 = vadd.f32 %v1982, %v2094
        %2096 = vmatprep.mubr.bf16.mxu0 0
        %2097 = vmatmul.mubr.bf16.gmra.mrb[0].mxu0 %v1300
        %v2098 = vpop.f32.mrb[0].mxu0
        %v2099 = vadd.f32 %v1986, %v2098
        %v2100 = vpop.f32.mrb[0].mxu0
        %v2101 = vadd.f32 %v1988, %v2100
        %v2102 = vpop.f32.mrb[0].mxu0
        %v2103 = vadd.f32 %v1990, %v2102
        %v2104 = vpop.f32.mrb[0].mxu0
        %v2105 = vadd.f32 %v1992, %v2104
        %2106 = vmatprep.mubr.bf16.mxu0 0
        %2107 = vmatmul.mubr.bf16.gmra.mrb[0].mxu0 %v1305
        %v2108 = vpop.f32.mrb[0].mxu0
        %v2109 = vadd.f32 %v1996, %v2108
        %v2110 = vpop.f32.mrb[0].mxu0
        %v2111 = vadd.f32 %v1998, %v2110
        %v2112 = vpop.f32.mrb[0].mxu0
        %v2113 = vadd.f32 %v2000, %v2112
        %v2114 = vpop.f32.mrb[0].mxu0
        %v2115 = vadd.f32 %v2002, %v2114
        %2116 = vmatprep.mubr.bf16.mxu0 0
        %2117 = vmatmul.mubr.bf16.gmra.mrb[0].mxu0 %v1310
        %v2118 = vpop.f32.mrb[0].mxu0
        %v2119 = vadd.f32 %v2006, %v2118
        %v2120 = vpop.f32.mrb[0].mxu0
        %v2121 = vadd.f32 %v2008, %v2120
        %v2122 = vpop.f32.mrb[0].mxu0
        %v2123 = vadd.f32 %v2010, %v2122
        %v2124 = vpop.f32.mrb[0].mxu0
        %v2125 = vadd.f32 %v2012, %v2124
        %2126 = vmatprep.mubr.bf16.mxu0 0
        %2127 = vmatmul.mubr.bf16.gmra.mrb[0].mxu0 %v1315
        %v2128 = vpop.f32.mrb[0].mxu0
        %v2129 = vadd.f32 %v2016, %v2128
        %v2130 = vpop.f32.mrb[0].mxu0
        %v2131 = vadd.f32 %v2018, %v2130
        %v2132 = vpop.f32.mrb[0].mxu0
        %v2133 = vadd.f32 %v2020, %v2132
        %v2134 = vpop.f32.mrb[0].mxu0
        %v2135 = vadd.f32 %v2022, %v2134
        %2136 = vmatprep.mubr.bf16.mxu0 0
        %2137 = vmatmul.mubr.bf16.gmra.mrb[0].mxu0 %v1320
        %v2138 = vpop.f32.mrb[0].mxu0
        %v2139 = vadd.f32 %v2026, %v2138
        %v2140 = vpop.f32.mrb[0].mxu0
        %v2141 = vadd.f32 %v2028, %v2140
        %v2142 = vpop.f32.mrb[0].mxu0
        %v2143 = vadd.f32 %v2030, %v2142
        %v2144 = vpop.f32.mrb[0].mxu0
        %v2145 = vadd.f32 %v2032, %v2144
        %2146 = vmatprep.mubr.bf16.mxu0 0
        %2147 = vmatmul.mubr.bf16.gmra.mrb[0].mxu0 %v1325
        %v2148 = vpop.f32.mrb[0].mxu0
        %v2149 = vadd.f32 %v2036, %v2148
        %v2150 = vpop.f32.mrb[0].mxu0
        %v2151 = vadd.f32 %v2038, %v2150
        %v2152 = vpop.f32.mrb[0].mxu0
        %v2153 = vadd.f32 %v2040, %v2152
        %v2154 = vpop.f32.mrb[0].mxu0
        %v2155 = vadd.f32 %v2042, %v2154
        %2156 = vdwg.mxu0
        %v2157 = vmax.f32 %v2079, 0.0
        %v2158 = vmax.f32 %v2081, 0.0
        %v2159 = vmax.f32 %v2083, 0.0
        %v2160 = vmax.f32 %v2085, 0.0
        %v2161 = vmax.f32 %v2089, 0.0
        %v2162 = vmax.f32 %v2091, 0.0
        %v2163 = vmax.f32 %v2093, 0.0
        %v2164 = vmax.f32 %v2095, 0.0
        %v2165 = vmax.f32 %v2099, 0.0
        %v2166 = vmax.f32 %v2101, 0.0
        %v2167 = vmax.f32 %v2103, 0.0
        %v2168 = vmax.f32 %v2105, 0.0
        %v2169 = vmax.f32 %v2109, 0.0
        %v2170 = vmax.f32 %v2111, 0.0
        %v2171 = vmax.f32 %v2113, 0.0
        %v2172 = vmax.f32 %v2115, 0.0
        %v2173 = vmax.f32 %v2119, 0.0
        %v2174 = vmax.f32 %v2121, 0.0
        %v2175 = vmax.f32 %v2123, 0.0
        %v2176 = vmax.f32 %v2125, 0.0
        %v2177 = vmax.f32 %v2129, 0.0
        %v2178 = vmax.f32 %v2131, 0.0
        %v2179 = vmax.f32 %v2133, 0.0
        %v2180 = vmax.f32 %v2135, 0.0
        %v2181 = vmax.f32 %v2139, 0.0
        %v2182 = vmax.f32 %v2141, 0.0
        %v2183 = vmax.f32 %v2143, 0.0
        %v2184 = vmax.f32 %v2145, 0.0
        %v2185 = vmax.f32 %v2149, 0.0
        %v2186 = vmax.f32 %v2151, 0.0
        %v2187 = vmax.f32 %v2153, 0.0
        %v2188 = vmax.f32 %v2155, 0.0
        %v2189 = vpack.c.bf16 %v2159, %v2157
        %v2190 = vpack.c.bf16 %v2163, %v2161
        %v2191 = vpack.c.bf16 %v2167, %v2165
        %v2192 = vpack.c.bf16 %v2171, %v2169
        %v2193 = vpack.c.bf16 %v2175, %v2173
        %v2194 = vpack.c.bf16 %v2179, %v2177
        %v2195 = vpack.c.bf16 %v2183, %v2181
        %v2196 = vpack.c.bf16 %v2187, %v2185
        %v2205 = vunpack.c.l.b16 %v2189
        %v2206 = vunpack.c.h.b16 %v2189
        %v2207 = vunpack.c.l.b16 %v2190
        %v2208 = vunpack.c.h.b16 %v2190
        %v2209 = vunpack.c.l.b16 %v2191
        %v2210 = vunpack.c.h.b16 %v2191
        %v2211 = vunpack.c.l.b16 %v2192
        %v2212 = vunpack.c.h.b16 %v2192
        %v2213 = vunpack.c.l.b16 %v2193
        %v2214 = vunpack.c.h.b16 %v2193
        %v2215 = vunpack.c.l.b16 %v2194
        %v2216 = vunpack.c.h.b16 %v2194
        %v2217 = vunpack.c.l.b16 %v2195
        %v2218 = vunpack.c.h.b16 %v2195
        %v2219 = vunpack.c.l.b16 %v2196
        %v2220 = vunpack.c.h.b16 %v2196
        %v2221 = vpack.c.b16 %v2205, %v2205
        %v2222 = vpack.c.b16 %v2206, %v2206
        %v2223 = vpack.c.b16 %v2207, %v2207
        %v2224 = vpack.c.b16 %v2208, %v2208
        %v2225 = vpack.c.b16 %v2209, %v2209
        %v2226 = vpack.c.b16 %v2210, %v2210
        %v2227 = vpack.c.b16 %v2211, %v2211
        %v2228 = vpack.c.b16 %v2212, %v2212
        %v2229 = vpack.c.b16 %v2213, %v2213
        %v2230 = vpack.c.b16 %v2214, %v2214
        %v2231 = vpack.c.b16 %v2215, %v2215
        %v2232 = vpack.c.b16 %v2216, %v2216
        %v2233 = vpack.c.b16 %v2217, %v2217
        %v2234 = vpack.c.b16 %v2218, %v2218
        %v2235 = vpack.c.b16 %v2219, %v2219
        %v2236 = vpack.c.b16 %v2220, %v2220
        %v2237 = vrot.slane %v2221, 7
        %v2238 = vrot.slane %v2237, 4
        %v2239 = vrot.slane %v2222, 7
        %v2240 = vsel %vm425, %v2238, %v2239
        %v2241 = vrot.slane %v2239, 4
        %v2242 = vrot.slane %v2223, 7
        %v2243 = vrot.slane %v2242, 4
        %v2244 = vrot.slane %v2224, 7
        %v2245 = vsel %vm425, %v2243, %v2244
        %v2246 = vrot.slane %v2244, 4
        %v2247 = vrot.slane %v2225, 7
        %v2248 = vrot.slane %v2247, 4
        %v2249 = vrot.slane %v2226, 7
        %v2250 = vsel %vm425, %v2248, %v2249
        %v2251 = vrot.slane %v2249, 4
        %v2252 = vrot.slane %v2227, 7
        %v2253 = vrot.slane %v2252, 4
        %v2254 = vrot.slane %v2228, 7
        %v2255 = vsel %vm425, %v2253, %v2254
        %v2256 = vrot.slane %v2254, 4
        %v2257 = vrot.slane %v2229, 7
        %v2258 = vrot.slane %v2257, 4
        %v2259 = vrot.slane %v2230, 7
        %v2260 = vsel %vm425, %v2258, %v2259
        %v2261 = vrot.slane %v2259, 4
        %v2262 = vrot.slane %v2231, 7
        %v2263 = vrot.slane %v2262, 4
        %v2264 = vrot.slane %v2232, 7
        %v2265 = vsel %vm425, %v2263, %v2264
        %v2266 = vrot.slane %v2264, 4
        %v2267 = vrot.slane %v2233, 7
        %v2268 = vrot.slane %v2267, 4
        %v2269 = vrot.slane %v2234, 7
        %v2270 = vsel %vm425, %v2268, %v2269
        %v2271 = vrot.slane %v2269, 4
        %v2272 = vrot.slane %v2235, 7
        %v2273 = vrot.slane %v2272, 4
        %v2274 = vrot.slane %v2236, 7
        %v2275 = vsel %vm425, %v2273, %v2274
        %v2276 = vrot.slane %v2274, 4
        %2301 = vst [vmem:[#allocation4] sm:$0xe] %v2237
        %2302 = vst [vmem:[#allocation4 + $0x4] sm:$0xf] %v2240
        %2303 = vst [vmem:[#allocation4 + $0x8] sm:$0x1] %v2241
        %2304 = vst [vmem:[#allocation4 + $0xc] sm:$0xe] %v2242
        %2305 = vst [vmem:[#allocation4 + $0x10] sm:$0xf] %v2245
        %2306 = vst [vmem:[#allocation4 + $0x14] sm:$0x1] %v2246
        %2307 = vst [vmem:[#allocation4 + $0x18] sm:$0xe] %v2247
        %2308 = vst [vmem:[#allocation4 + $0x1c] sm:$0xf] %v2250
        %2309 = vst [vmem:[#allocation4 + $0x20] sm:$0x1] %v2251
        %2310 = vst [vmem:[#allocation4 + $0x24] sm:$0xe] %v2252
        %2311 = vst [vmem:[#allocation4 + $0x28] sm:$0xf] %v2255
        %2312 = vst [vmem:[#allocation4 + $0x2c] sm:$0x1] %v2256
        %2313 = vst [vmem:[#allocation4 + $0x30] sm:$0xe] %v2257
        %2314 = vst [vmem:[#allocation4 + $0x34] sm:$0xf] %v2260
        %2315 = vst [vmem:[#allocation4 + $0x38] sm:$0x1] %v2261
        %2316 = vst [vmem:[#allocation4 + $0x3c] sm:$0xe] %v2262
        %2317 = vst [vmem:[#allocation4 + $0x40] sm:$0xf] %v2265
        %2318 = vst [vmem:[#allocation4 + $0x44] sm:$0x1] %v2266
        %2319 = vst [vmem:[#allocation4 + $0x48] sm:$0xe] %v2267
        %2320 = vst [vmem:[#allocation4 + $0x4c] sm:$0xf] %v2270
        %2321 = vst [vmem:[#allocation4 + $0x50] sm:$0x1] %v2271
        %2322 = vst [vmem:[#allocation4 + $0x54] sm:$0xe] %v2272
        %2323 = vst [vmem:[#allocation4 + $0x58] sm:$0xf] %v2275
        %2324 = vst [vmem:[#allocation4 + $0x5c] sm:$0x1] %v2276
        %v2325 = vld [vmem:[#allocation4] sm:$0xf]
        %v2326 = vld [vmem:[#allocation4 + $0x4] sm:$0xf]
        %v2327 = vld [vmem:[#allocation4 + $0xc] sm:$0xf]
        %v2328 = vld [vmem:[#allocation4 + $0x10] sm:$0xf]
        %v2329 = vld [vmem:[#allocation4 + $0x18] sm:$0xf]
        %v2330 = vld [vmem:[#allocation4 + $0x1c] sm:$0xf]
        %v2331 = vld [vmem:[#allocation4 + $0x24] sm:$0xf]
        %v2332 = vld [vmem:[#allocation4 + $0x28] sm:$0xf]
        %v2333 = vld [vmem:[#allocation4 + $0x30] sm:$0xf]
        %v2334 = vld [vmem:[#allocation4 + $0x34] sm:$0xf]
        %v2335 = vld [vmem:[#allocation4 + $0x3c] sm:$0xf]
        %v2336 = vld [vmem:[#allocation4 + $0x40] sm:$0xf]
        %v2337 = vld [vmem:[#allocation4 + $0x48] sm:$0xf]
        %v2338 = vld [vmem:[#allocation4 + $0x4c] sm:$0xf]
        %v2339 = vld [vmem:[#allocation4 + $0x54] sm:$0xf]
        %v2340 = vld [vmem:[#allocation4 + $0x58] sm:$0xf]
        %v2357 = vunpack.c.l.b16 %v2325
        %v2358 = vunpack.c.l.b16 %v2326
        %v2359 = vunpack.c.l.b16 %v2327
        %v2360 = vunpack.c.l.b16 %v2328
        %v2361 = vunpack.c.l.b16 %v2329
        %v2362 = vunpack.c.l.b16 %v2330
        %v2363 = vunpack.c.l.b16 %v2331
        %v2364 = vunpack.c.l.b16 %v2332
        %v2365 = vunpack.c.l.b16 %v2333
        %v2366 = vunpack.c.l.b16 %v2334
        %v2367 = vunpack.c.l.b16 %v2335
        %v2368 = vunpack.c.l.b16 %v2336
        %v2369 = vunpack.c.l.b16 %v2337
        %v2370 = vunpack.c.l.b16 %v2338
        %v2371 = vunpack.c.l.b16 %v2339
        %v2372 = vunpack.c.l.b16 %v2340
        %v2373 = vpack.c.b16 %v2358, %v2357
        %v2374 = vpack.c.b16 %v2360, %v2359
        %v2375 = vpack.c.b16 %v2362, %v2361
        %v2376 = vpack.c.b16 %v2364, %v2363
        %v2377 = vpack.c.b16 %v2366, %v2365
        %v2378 = vpack.c.b16 %v2368, %v2367
        %v2379 = vpack.c.b16 %v2370, %v2369
        %v2380 = vpack.c.b16 %v2372, %v2371
        %2389 = vst [vmem:[#allocation5] sm:$0xff] %v2373
        %2390 = vst [vmem:[#allocation5 + $0x28] sm:$0xff] %v2374
        %2391 = vst [vmem:[#allocation5 + $0x50] sm:$0xff] %v2375
        %2392 = vst [vmem:[#allocation5 + $0x78] sm:$0xff] %v2376
        %2393 = vst [vmem:[#allocation5 + $0xa0] sm:$0xff] %v2377
        %2394 = vst [vmem:[#allocation5 + $0xc8] sm:$0xff] %v2378
        %2395 = vst [vmem:[#allocation5 + $0xf0] sm:$0xff] %v2379
        %2396 = vst [vmem:[#allocation5 + $0x118] sm:$0xff] %v2380
        %v2397 = vld [vmem:[#allocation4] sm:$0xf]
        %v2398 = vld [vmem:[#allocation4 + $0x4] sm:$0xf]
        %v2399 = vld [vmem:[#allocation4 + $0x8] sm:$0x1]
        %v2400 = vld [vmem:[#allocation4 + $0xc] sm:$0xf]
        %v2401 = vld [vmem:[#allocation4 + $0x10] sm:$0xf]
        %v2402 = vld [vmem:[#allocation4 + $0x14] sm:$0x1]
        %v2403 = vld [vmem:[#allocation4 + $0x18] sm:$0xf]
        %v2404 = vld [vmem:[#allocation4 + $0x1c] sm:$0xf]
        %v2405 = vld [vmem:[#allocation4 + $0x20] sm:$0x1]
        %v2406 = vld [vmem:[#allocation4 + $0x24] sm:$0xf]
        %v2407 = vld [vmem:[#allocation4 + $0x28] sm:$0xf]
        %v2408 = vld [vmem:[#allocation4 + $0x2c] sm:$0x1]
        %v2409 = vld [vmem:[#allocation4 + $0x30] sm:$0xf]
        %v2410 = vld [vmem:[#allocation4 + $0x34] sm:$0xf]
        %v2411 = vld [vmem:[#allocation4 + $0x38] sm:$0x1]
        %v2412 = vld [vmem:[#allocation4 + $0x3c] sm:$0xf]
        %v2413 = vld [vmem:[#allocation4 + $0x40] sm:$0xf]
        %v2414 = vld [vmem:[#allocation4 + $0x44] sm:$0x1]
        %v2415 = vld [vmem:[#allocation4 + $0x48] sm:$0xf]
        %v2416 = vld [vmem:[#allocation4 + $0x4c] sm:$0xf]
        %v2417 = vld [vmem:[#allocation4 + $0x50] sm:$0x1]
        %v2418 = vld [vmem:[#allocation4 + $0x54] sm:$0xf]
        %v2419 = vld [vmem:[#allocation4 + $0x58] sm:$0xf]
        %v2420 = vld [vmem:[#allocation4 + $0x5c] sm:$0x1]
        %v2445 = vunpack.c.l.b16 %v2397
        %v2446 = vunpack.c.l.b16 %v2398
        %v2447 = vunpack.c.l.b16 %v2399
        %v2448 = vunpack.c.l.b16 %v2400
        %v2449 = vunpack.c.l.b16 %v2401
        %v2450 = vunpack.c.l.b16 %v2402
        %v2451 = vunpack.c.l.b16 %v2403
        %v2452 = vunpack.c.l.b16 %v2404
        %v2453 = vunpack.c.l.b16 %v2405
        %v2454 = vunpack.c.l.b16 %v2406
        %v2455 = vunpack.c.l.b16 %v2407
        %v2456 = vunpack.c.l.b16 %v2408
        %v2457 = vunpack.c.l.b16 %v2409
        %v2458 = vunpack.c.l.b16 %v2410
        %v2459 = vunpack.c.l.b16 %v2411
        %v2460 = vunpack.c.l.b16 %v2412
        %v2461 = vunpack.c.l.b16 %v2413
        %v2462 = vunpack.c.l.b16 %v2414
        %v2463 = vunpack.c.l.b16 %v2415
        %v2464 = vunpack.c.l.b16 %v2416
        %v2465 = vunpack.c.l.b16 %v2417
        %v2466 = vunpack.c.l.b16 %v2418
        %v2467 = vunpack.c.l.b16 %v2419
        %v2468 = vunpack.c.l.b16 %v2420
        %v2469 = vpack.c.b16 %v2446, %v2445
        %v2470 = vpack.c.b16 %v2447, %v2447
        %v2471 = vpack.c.b16 %v2449, %v2448
        %v2472 = vpack.c.b16 %v2450, %v2450
        %v2473 = vpack.c.b16 %v2452, %v2451
        %v2474 = vpack.c.b16 %v2453, %v2453
        %v2475 = vpack.c.b16 %v2455, %v2454
        %v2476 = vpack.c.b16 %v2456, %v2456
        %v2477 = vpack.c.b16 %v2458, %v2457
        %v2478 = vpack.c.b16 %v2459, %v2459
        %v2479 = vpack.c.b16 %v2461, %v2460
        %v2480 = vpack.c.b16 %v2462, %v2462
        %v2481 = vpack.c.b16 %v2464, %v2463
        %v2482 = vpack.c.b16 %v2465, %v2465
        %v2483 = vpack.c.b16 %v2467, %v2466
        %v2484 = vpack.c.b16 %v2468, %v2468
        %v2486 = vshrl.u32 %v2469, 16
        %v2488 = vshll.u32 %v2469, 16
        %v2490 = vrot.slane %v2488, 1
        %v2491 = vor.u32 %v2486, %v2490
        %v2493 = vshll.u32 %v2470, 16
        %v2495 = vrot.slane %v2493, 1
        %v2496 = vsel %vm674, %v2491, %v2495
        %v2498 = vshrl.u32 %v2471, 16
        %v2500 = vshll.u32 %v2471, 16
        %v2502 = vrot.slane %v2500, 1
        %v2503 = vor.u32 %v2498, %v2502
        %v2505 = vshll.u32 %v2472, 16
        %v2507 = vrot.slane %v2505, 1
        %v2508 = vsel %vm674, %v2503, %v2507
        %v2510 = vshrl.u32 %v2473, 16
        %v2512 = vshll.u32 %v2473, 16
        %v2514 = vrot.slane %v2512, 1
        %v2515 = vor.u32 %v2510, %v2514
        %v2517 = vshll.u32 %v2474, 16
        %v2519 = vrot.slane %v2517, 1
        %v2520 = vsel %vm674, %v2515, %v2519
        %v2522 = vshrl.u32 %v2475, 16
        %v2524 = vshll.u32 %v2475, 16
        %v2526 = vrot.slane %v2524, 1
        %v2527 = vor.u32 %v2522, %v2526
        %v2529 = vshll.u32 %v2476, 16
        %v2531 = vrot.slane %v2529, 1
        %v2532 = vsel %vm674, %v2527, %v2531
        %v2534 = vshrl.u32 %v2477, 16
        %v2536 = vshll.u32 %v2477, 16
        %v2538 = vrot.slane %v2536, 1
        %v2539 = vor.u32 %v2534, %v2538
        %v2541 = vshll.u32 %v2478, 16
        %v2543 = vrot.slane %v2541, 1
        %v2544 = vsel %vm674, %v2539, %v2543
        %v2546 = vshrl.u32 %v2479, 16
        %v2548 = vshll.u32 %v2479, 16
        %v2550 = vrot.slane %v2548, 1
        %v2551 = vor.u32 %v2546, %v2550
        %v2553 = vshll.u32 %v2480, 16
        %v2555 = vrot.slane %v2553, 1
        %v2556 = vsel %vm674, %v2551, %v2555
        %v2558 = vshrl.u32 %v2481, 16
        %v2560 = vshll.u32 %v2481, 16
        %v2562 = vrot.slane %v2560, 1
        %v2563 = vor.u32 %v2558, %v2562
        %v2565 = vshll.u32 %v2482, 16
        %v2567 = vrot.slane %v2565, 1
        %v2568 = vsel %vm674, %v2563, %v2567
        %v2570 = vshrl.u32 %v2483, 16
        %v2572 = vshll.u32 %v2483, 16
        %v2574 = vrot.slane %v2572, 1
        %v2575 = vor.u32 %v2570, %v2574
        %v2577 = vshll.u32 %v2484, 16
        %v2579 = vrot.slane %v2577, 1
        %v2580 = vsel %vm674, %v2575, %v2579
        %2589 = vst [vmem:[#allocation5 + $0x8] sm:$0xff] %v2496
        %2590 = vst [vmem:[#allocation5 + $0x30] sm:$0xff] %v2508
        %2591 = vst [vmem:[#allocation5 + $0x58] sm:$0xff] %v2520
        %2592 = vst [vmem:[#allocation5 + $0x80] sm:$0xff] %v2532
        %2593 = vst [vmem:[#allocation5 + $0xa8] sm:$0xff] %v2544
        %2594 = vst [vmem:[#allocation5 + $0xd0] sm:$0xff] %v2556
        %2595 = vst [vmem:[#allocation5 + $0xf8] sm:$0xff] %v2568
        %2596 = vst [vmem:[#allocation5 + $0x120] sm:$0xff] %v2580
        %v2597 = vld [vmem:[#allocation4] sm:$0xe]
        %v2598 = vld [vmem:[#allocation4 + $0x4] sm:$0xf]
        %v2599 = vld [vmem:[#allocation4 + $0x8] sm:$0x1]
        %v2600 = vld [vmem:[#allocation4 + $0xc] sm:$0xe]
        %v2601 = vld [vmem:[#allocation4 + $0x10] sm:$0xf]
        %v2602 = vld [vmem:[#allocation4 + $0x14] sm:$0x1]
        %v2603 = vld [vmem:[#allocation4 + $0x18] sm:$0xe]
        %v2604 = vld [vmem:[#allocation4 + $0x1c] sm:$0xf]
        %v2605 = vld [vmem:[#allocation4 + $0x20] sm:$0x1]
        %v2606 = vld [vmem:[#allocation4 + $0x24] sm:$0xe]
        %v2607 = vld [vmem:[#allocation4 + $0x28] sm:$0xf]
        %v2608 = vld [vmem:[#allocation4 + $0x2c] sm:$0x1]
        %v2609 = vld [vmem:[#allocation4 + $0x30] sm:$0xe]
        %v2610 = vld [vmem:[#allocation4 + $0x34] sm:$0xf]
        %v2611 = vld [vmem:[#allocation4 + $0x38] sm:$0x1]
        %v2612 = vld [vmem:[#allocation4 + $0x3c] sm:$0xe]
        %v2613 = vld [vmem:[#allocation4 + $0x40] sm:$0xf]
        %v2614 = vld [vmem:[#allocation4 + $0x44] sm:$0x1]
        %v2615 = vld [vmem:[#allocation4 + $0x48] sm:$0xe]
        %v2616 = vld [vmem:[#allocation4 + $0x4c] sm:$0xf]
        %v2617 = vld [vmem:[#allocation4 + $0x50] sm:$0x1]
        %v2618 = vld [vmem:[#allocation4 + $0x54] sm:$0xe]
        %v2619 = vld [vmem:[#allocation4 + $0x58] sm:$0xf]
        %v2620 = vld [vmem:[#allocation4 + $0x5c] sm:$0x1]
        %v2645 = vunpack.c.l.b16 %v2597
        %v2646 = vunpack.c.l.b16 %v2598
        %v2647 = vunpack.c.l.b16 %v2599
        %v2648 = vunpack.c.l.b16 %v2600
        %v2649 = vunpack.c.l.b16 %v2601
        %v2650 = vunpack.c.l.b16 %v2602
        %v2651 = vunpack.c.l.b16 %v2603
        %v2652 = vunpack.c.l.b16 %v2604
        %v2653 = vunpack.c.l.b16 %v2605
        %v2654 = vunpack.c.l.b16 %v2606
        %v2655 = vunpack.c.l.b16 %v2607
        %v2656 = vunpack.c.l.b16 %v2608
        %v2657 = vunpack.c.l.b16 %v2609
        %v2658 = vunpack.c.l.b16 %v2610
        %v2659 = vunpack.c.l.b16 %v2611
        %v2660 = vunpack.c.l.b16 %v2612
        %v2661 = vunpack.c.l.b16 %v2613
        %v2662 = vunpack.c.l.b16 %v2614
        %v2663 = vunpack.c.l.b16 %v2615
        %v2664 = vunpack.c.l.b16 %v2616
        %v2665 = vunpack.c.l.b16 %v2617
        %v2666 = vunpack.c.l.b16 %v2618
        %v2667 = vunpack.c.l.b16 %v2619
        %v2668 = vunpack.c.l.b16 %v2620
        %v2669 = vpack.c.b16 %v2646, %v2645
        %v2670 = vpack.c.b16 %v2647, %v2647
        %v2671 = vpack.c.b16 %v2649, %v2648
        %v2672 = vpack.c.b16 %v2650, %v2650
        %v2673 = vpack.c.b16 %v2652, %v2651
        %v2674 = vpack.c.b16 %v2653, %v2653
        %v2675 = vpack.c.b16 %v2655, %v2654
        %v2676 = vpack.c.b16 %v2656, %v2656
        %v2677 = vpack.c.b16 %v2658, %v2657
        %v2678 = vpack.c.b16 %v2659, %v2659
        %v2679 = vpack.c.b16 %v2661, %v2660
        %v2680 = vpack.c.b16 %v2662, %v2662
        %v2681 = vpack.c.b16 %v2664, %v2663
        %v2682 = vpack.c.b16 %v2665, %v2665
        %v2683 = vpack.c.b16 %v2667, %v2666
        %v2684 = vpack.c.b16 %v2668, %v2668
        %v2685 = vrot.slane %v2669, 1
        %v2686 = vrot.slane %v2670, 1
        %v2687 = vsel %vm875, %v2685, %v2686
        %v2688 = vrot.slane %v2671, 1
        %v2689 = vrot.slane %v2672, 1
        %v2690 = vsel %vm875, %v2688, %v2689
        %v2691 = vrot.slane %v2673, 1
        %v2692 = vrot.slane %v2674, 1
        %v2693 = vsel %vm875, %v2691, %v2692
        %v2694 = vrot.slane %v2675, 1
        %v2695 = vrot.slane %v2676, 1
        %v2696 = vsel %vm875, %v2694, %v2695
        %v2697 = vrot.slane %v2677, 1
        %v2698 = vrot.slane %v2678, 1
        %v2699 = vsel %vm875, %v2697, %v2698
        %v2700 = vrot.slane %v2679, 1
        %v2701 = vrot.slane %v2680, 1
        %v2702 = vsel %vm875, %v2700, %v2701
        %v2703 = vrot.slane %v2681, 1
        %v2704 = vrot.slane %v2682, 1
        %v2705 = vsel %vm875, %v2703, %v2704
        %v2706 = vrot.slane %v2683, 1
        %v2707 = vrot.slane %v2684, 1
        %v2708 = vsel %vm875, %v2706, %v2707
        %2717 = vst [vmem:[#allocation5 + $0x10] sm:$0xff] %v2687
        %2718 = vst [vmem:[#allocation5 + $0x38] sm:$0xff] %v2690
        %2719 = vst [vmem:[#allocation5 + $0x60] sm:$0xff] %v2693
        %2720 = vst [vmem:[#allocation5 + $0x88] sm:$0xff] %v2696
        %2721 = vst [vmem:[#allocation5 + $0xb0] sm:$0xff] %v2699
        %2722 = vst [vmem:[#allocation5 + $0xd8] sm:$0xff] %v2702
        %2723 = vst [vmem:[#allocation5 + $0x100] sm:$0xff] %v2705
        %2724 = vst [vmem:[#allocation5 + $0x128] sm:$0xff] %v2708
        %v2725 = vld [vmem:[#allocation4] sm:$0xe]
        %v2726 = vld [vmem:[#allocation4 + $0x4] sm:$0xf]
        %v2727 = vld [vmem:[#allocation4 + $0x8] sm:$0x3]
        %v2728 = vld [vmem:[#allocation4 + $0xc] sm:$0xe]
        %v2729 = vld [vmem:[#allocation4 + $0x10] sm:$0xf]
        %v2730 = vld [vmem:[#allocation4 + $0x14] sm:$0x3]
        %v2731 = vld [vmem:[#allocation4 + $0x18] sm:$0xe]
        %v2732 = vld [vmem:[#allocation4 + $0x1c] sm:$0xf]
        %v2733 = vld [vmem:[#allocation4 + $0x20] sm:$0x3]
        %v2734 = vld [vmem:[#allocation4 + $0x24] sm:$0xe]
        %v2735 = vld [vmem:[#allocation4 + $0x28] sm:$0xf]
        %v2736 = vld [vmem:[#allocation4 + $0x2c] sm:$0x3]
        %v2737 = vld [vmem:[#allocation4 + $0x30] sm:$0xe]
        %v2738 = vld [vmem:[#allocation4 + $0x34] sm:$0xf]
        %v2739 = vld [vmem:[#allocation4 + $0x38] sm:$0x3]
        %v2740 = vld [vmem:[#allocation4 + $0x3c] sm:$0xe]
        %v2741 = vld [vmem:[#allocation4 + $0x40] sm:$0xf]
        %v2742 = vld [vmem:[#allocation4 + $0x44] sm:$0x3]
        %v2743 = vld [vmem:[#allocation4 + $0x48] sm:$0xe]
        %v2744 = vld [vmem:[#allocation4 + $0x4c] sm:$0xf]
        %v2745 = vld [vmem:[#allocation4 + $0x50] sm:$0x3]
        %v2746 = vld [vmem:[#allocation4 + $0x54] sm:$0xe]
        %v2747 = vld [vmem:[#allocation4 + $0x58] sm:$0xf]
        %v2748 = vld [vmem:[#allocation4 + $0x5c] sm:$0x3]
        %v2773 = vunpack.c.l.b16 %v2725
        %v2774 = vunpack.c.l.b16 %v2726
        %v2775 = vunpack.c.l.b16 %v2727
        %v2776 = vunpack.c.l.b16 %v2728
        %v2777 = vunpack.c.l.b16 %v2729
        %v2778 = vunpack.c.l.b16 %v2730
        %v2779 = vunpack.c.l.b16 %v2731
        %v2780 = vunpack.c.l.b16 %v2732
        %v2781 = vunpack.c.l.b16 %v2733
        %v2782 = vunpack.c.l.b16 %v2734
        %v2783 = vunpack.c.l.b16 %v2735
        %v2784 = vunpack.c.l.b16 %v2736
        %v2785 = vunpack.c.l.b16 %v2737
        %v2786 = vunpack.c.l.b16 %v2738
        %v2787 = vunpack.c.l.b16 %v2739
        %v2788 = vunpack.c.l.b16 %v2740
        %v2789 = vunpack.c.l.b16 %v2741
        %v2790 = vunpack.c.l.b16 %v2742
        %v2791 = vunpack.c.l.b16 %v2743
        %v2792 = vunpack.c.l.b16 %v2744
        %v2793 = vunpack.c.l.b16 %v2745
        %v2794 = vunpack.c.l.b16 %v2746
        %v2795 = vunpack.c.l.b16 %v2747
        %v2796 = vunpack.c.l.b16 %v2748
        %v2797 = vpack.c.b16 %v2774, %v2773
        %v2798 = vpack.c.b16 %v2775, %v2775
        %v2799 = vpack.c.b16 %v2777, %v2776
        %v2800 = vpack.c.b16 %v2778, %v2778
        %v2801 = vpack.c.b16 %v2780, %v2779
        %v2802 = vpack.c.b16 %v2781, %v2781
        %v2803 = vpack.c.b16 %v2783, %v2782
        %v2804 = vpack.c.b16 %v2784, %v2784
        %v2805 = vpack.c.b16 %v2786, %v2785
        %v2806 = vpack.c.b16 %v2787, %v2787
        %v2807 = vpack.c.b16 %v2789, %v2788
        %v2808 = vpack.c.b16 %v2790, %v2790
        %v2809 = vpack.c.b16 %v2792, %v2791
        %v2810 = vpack.c.b16 %v2793, %v2793
        %v2811 = vpack.c.b16 %v2795, %v2794
        %v2812 = vpack.c.b16 %v2796, %v2796
        %v2814 = vshrl.u32 %v2797, 16
        %v2816 = vrot.slane %v2814, 1
        %v2817 = vshll.u32 %v2797, 16
        %v2819 = vrot.slane %v2817, 2
        %v2820 = vor.u32 %v2816, %v2819
        %v2822 = vshrl.u32 %v2798, 16
        %v2824 = vrot.slane %v2822, 1
        %v2825 = vshll.u32 %v2798, 16
        %v2827 = vrot.slane %v2825, 2
        %v2828 = vor.u32 %v2824, %v2827
        %v2829 = vsel %vm1004, %v2820, %v2828
        %v2831 = vshrl.u32 %v2799, 16
        %v2833 = vrot.slane %v2831, 1
        %v2834 = vshll.u32 %v2799, 16
        %v2836 = vrot.slane %v2834, 2
        %v2837 = vor.u32 %v2833, %v2836
        %v2839 = vshrl.u32 %v2800, 16
        %v2841 = vrot.slane %v2839, 1
        %v2842 = vshll.u32 %v2800, 16
        %v2844 = vrot.slane %v2842, 2
        %v2845 = vor.u32 %v2841, %v2844
        %v2846 = vsel %vm1004, %v2837, %v2845
        %v2848 = vshrl.u32 %v2801, 16
        %v2850 = vrot.slane %v2848, 1
        %v2851 = vshll.u32 %v2801, 16
        %v2853 = vrot.slane %v2851, 2
        %v2854 = vor.u32 %v2850, %v2853
        %v2856 = vshrl.u32 %v2802, 16
        %v2858 = vrot.slane %v2856, 1
        %v2859 = vshll.u32 %v2802, 16
        %v2861 = vrot.slane %v2859, 2
        %v2862 = vor.u32 %v2858, %v2861
        %v2863 = vsel %vm1004, %v2854, %v2862
        %v2865 = vshrl.u32 %v2803, 16
        %v2867 = vrot.slane %v2865, 1
        %v2868 = vshll.u32 %v2803, 16
        %v2870 = vrot.slane %v2868, 2
        %v2871 = vor.u32 %v2867, %v2870
        %v2873 = vshrl.u32 %v2804, 16
        %v2875 = vrot.slane %v2873, 1
        %v2876 = vshll.u32 %v2804, 16
        %v2878 = vrot.slane %v2876, 2
        %v2879 = vor.u32 %v2875, %v2878
        %v2880 = vsel %vm1004, %v2871, %v2879
        %v2882 = vshrl.u32 %v2805, 16
        %v2884 = vrot.slane %v2882, 1
        %v2885 = vshll.u32 %v2805, 16
        %v2887 = vrot.slane %v2885, 2
        %v2888 = vor.u32 %v2884, %v2887
        %v2890 = vshrl.u32 %v2806, 16
        %v2892 = vrot.slane %v2890, 1
        %v2893 = vshll.u32 %v2806, 16
        %v2895 = vrot.slane %v2893, 2
        %v2896 = vor.u32 %v2892, %v2895
        %v2897 = vsel %vm1004, %v2888, %v2896
        %v2899 = vshrl.u32 %v2807, 16
        %v2901 = vrot.slane %v2899, 1
        %v2902 = vshll.u32 %v2807, 16
        %v2904 = vrot.slane %v2902, 2
        %v2905 = vor.u32 %v2901, %v2904
        %v2907 = vshrl.u32 %v2808, 16
        %v2909 = vrot.slane %v2907, 1
        %v2910 = vshll.u32 %v2808, 16
        %v2912 = vrot.slane %v2910, 2
        %v2913 = vor.u32 %v2909, %v2912
        %v2914 = vsel %vm1004, %v2905, %v2913
        %v2916 = vshrl.u32 %v2809, 16
        %v2918 = vrot.slane %v2916, 1
        %v2919 = vshll.u32 %v2809, 16
        %v2921 = vrot.slane %v2919, 2
        %v2922 = vor.u32 %v2918, %v2921
        %v2924 = vshrl.u32 %v2810, 16
        %v2926 = vrot.slane %v2924, 1
        %v2927 = vshll.u32 %v2810, 16
        %v2929 = vrot.slane %v2927, 2
        %v2930 = vor.u32 %v2926, %v2929
        %v2931 = vsel %vm1004, %v2922, %v2930
        %v2933 = vshrl.u32 %v2811, 16
        %v2935 = vrot.slane %v2933, 1
        %v2936 = vshll.u32 %v2811, 16
        %v2938 = vrot.slane %v2936, 2
        %v2939 = vor.u32 %v2935, %v2938
        %v2941 = vshrl.u32 %v2812, 16
        %v2943 = vrot.slane %v2941, 1
        %v2944 = vshll.u32 %v2812, 16
        %v2946 = vrot.slane %v2944, 2
        %v2947 = vor.u32 %v2943, %v2946
        %v2948 = vsel %vm1004, %v2939, %v2947
        %2957 = vst [vmem:[#allocation5 + $0x18] sm:$0xff] %v2829
        %2958 = vst [vmem:[#allocation5 + $0x40] sm:$0xff] %v2846
        %2959 = vst [vmem:[#allocation5 + $0x68] sm:$0xff] %v2863
        %2960 = vst [vmem:[#allocation5 + $0x90] sm:$0xff] %v2880
        %2961 = vst [vmem:[#allocation5 + $0xb8] sm:$0xff] %v2897
        %2962 = vst [vmem:[#allocation5 + $0xe0] sm:$0xff] %v2914
        %2963 = vst [vmem:[#allocation5 + $0x108] sm:$0xff] %v2931
        %2964 = vst [vmem:[#allocation5 + $0x130] sm:$0xff] %v2948
        %v2965 = vld [vmem:[#allocation4] sm:$0xc]
        %v2966 = vld [vmem:[#allocation4 + $0x4] sm:$0xf]
        %v2967 = vld [vmem:[#allocation4 + $0x8] sm:$0x3]
        %v2968 = vld [vmem:[#allocation4 + $0xc] sm:$0xc]
        %v2969 = vld [vmem:[#allocation4 + $0x10] sm:$0xf]
        %v2970 = vld [vmem:[#allocation4 + $0x14] sm:$0x3]
        %v2971 = vld [vmem:[#allocation4 + $0x18] sm:$0xc]
        %v2972 = vld [vmem:[#allocation4 + $0x1c] sm:$0xf]
        %v2973 = vld [vmem:[#allocation4 + $0x20] sm:$0x3]
        %v2974 = vld [vmem:[#allocation4 + $0x24] sm:$0xc]
        %v2975 = vld [vmem:[#allocation4 + $0x28] sm:$0xf]
        %v2976 = vld [vmem:[#allocation4 + $0x2c] sm:$0x3]
        %v2977 = vld [vmem:[#allocation4 + $0x30] sm:$0xc]
        %v2978 = vld [vmem:[#allocation4 + $0x34] sm:$0xf]
        %v2979 = vld [vmem:[#allocation4 + $0x38] sm:$0x3]
        %v2980 = vld [vmem:[#allocation4 + $0x3c] sm:$0xc]
        %v2981 = vld [vmem:[#allocation4 + $0x40] sm:$0xf]
        %v2982 = vld [vmem:[#allocation4 + $0x44] sm:$0x3]
        %v2983 = vld [vmem:[#allocation4 + $0x48] sm:$0xc]
        %v2984 = vld [vmem:[#allocation4 + $0x4c] sm:$0xf]
        %v2985 = vld [vmem:[#allocation4 + $0x50] sm:$0x3]
        %v2986 = vld [vmem:[#allocation4 + $0x54] sm:$0xc]
        %v2987 = vld [vmem:[#allocation4 + $0x58] sm:$0xf]
        %v2988 = vld [vmem:[#allocation4 + $0x5c] sm:$0x3]
        %v3013 = vunpack.c.l.b16 %v2965
        %v3014 = vunpack.c.l.b16 %v2966
        %v3015 = vunpack.c.l.b16 %v2967
        %v3016 = vunpack.c.l.b16 %v2968
        %v3017 = vunpack.c.l.b16 %v2969
        %v3018 = vunpack.c.l.b16 %v2970
        %v3019 = vunpack.c.l.b16 %v2971
        %v3020 = vunpack.c.l.b16 %v2972
        %v3021 = vunpack.c.l.b16 %v2973
        %v3022 = vunpack.c.l.b16 %v2974
        %v3023 = vunpack.c.l.b16 %v2975
        %v3024 = vunpack.c.l.b16 %v2976
        %v3025 = vunpack.c.l.b16 %v2977
        %v3026 = vunpack.c.l.b16 %v2978
        %v3027 = vunpack.c.l.b16 %v2979
        %v3028 = vunpack.c.l.b16 %v2980
        %v3029 = vunpack.c.l.b16 %v2981
        %v3030 = vunpack.c.l.b16 %v2982
        %v3031 = vunpack.c.l.b16 %v2983
        %v3032 = vunpack.c.l.b16 %v2984
        %v3033 = vunpack.c.l.b16 %v2985
        %v3034 = vunpack.c.l.b16 %v2986
        %v3035 = vunpack.c.l.b16 %v2987
        %v3036 = vunpack.c.l.b16 %v2988
        %v3037 = vpack.c.b16 %v3014, %v3013
        %v3038 = vpack.c.b16 %v3015, %v3015
        %v3039 = vpack.c.b16 %v3017, %v3016
        %v3040 = vpack.c.b16 %v3018, %v3018
        %v3041 = vpack.c.b16 %v3020, %v3019
        %v3042 = vpack.c.b16 %v3021, %v3021
        %v3043 = vpack.c.b16 %v3023, %v3022
        %v3044 = vpack.c.b16 %v3024, %v3024
        %v3045 = vpack.c.b16 %v3026, %v3025
        %v3046 = vpack.c.b16 %v3027, %v3027
        %v3047 = vpack.c.b16 %v3029, %v3028
        %v3048 = vpack.c.b16 %v3030, %v3030
        %v3049 = vpack.c.b16 %v3032, %v3031
        %v3050 = vpack.c.b16 %v3033, %v3033
        %v3051 = vpack.c.b16 %v3035, %v3034
        %v3052 = vpack.c.b16 %v3036, %v3036
        %v3053 = vrot.slane %v3037, 2
        %v3054 = vrot.slane %v3038, 2
        %v3055 = vsel %vm1245, %v3053, %v3054
        %v3056 = vrot.slane %v3039, 2
        %v3057 = vrot.slane %v3040, 2
        %v3058 = vsel %vm1245, %v3056, %v3057
        %v3059 = vrot.slane %v3041, 2
        %v3060 = vrot.slane %v3042, 2
        %v3061 = vsel %vm1245, %v3059, %v3060
        %v3062 = vrot.slane %v3043, 2
        %v3063 = vrot.slane %v3044, 2
        %v3064 = vsel %vm1245, %v3062, %v3063
        %v3065 = vrot.slane %v3045, 2
        %v3066 = vrot.slane %v3046, 2
        %v3067 = vsel %vm1245, %v3065, %v3066
        %v3068 = vrot.slane %v3047, 2
        %v3069 = vrot.slane %v3048, 2
        %v3070 = vsel %vm1245, %v3068, %v3069
        %v3071 = vrot.slane %v3049, 2
        %v3072 = vrot.slane %v3050, 2
        %v3073 = vsel %vm1245, %v3071, %v3072
        %v3074 = vrot.slane %v3051, 2
        %v3075 = vrot.slane %v3052, 2
        %v3076 = vsel %vm1245, %v3074, %v3075
        %3085 = vst [vmem:[#allocation5 + $0x20] sm:$0xff] %v3055
        %3086 = vst [vmem:[#allocation5 + $0x48] sm:$0xff] %v3058
        %3087 = vst [vmem:[#allocation5 + $0x70] sm:$0xff] %v3061
        %3088 = vst [vmem:[#allocation5 + $0x98] sm:$0xff] %v3064
        %3089 = vst [vmem:[#allocation5 + $0xc0] sm:$0xff] %v3067
        %3090 = vst [vmem:[#allocation5 + $0xe8] sm:$0xff] %v3070
        %3091 = vst [vmem:[#allocation5 + $0x110] sm:$0xff] %v3073
        %3092 = vst [vmem:[#allocation5 + $0x138] sm:$0xff] %v3076
        %v3093 = vld [vmem:[#allocation5] sm:$0xff]
        %v3094 = vld [vmem:[#allocation5 + $0x8] sm:$0xff]
        %v3095 = vld [vmem:[#allocation5 + $0x10] sm:$0xff]
        %v3096 = vld [vmem:[#allocation5 + $0x18] sm:$0xff]
        %v3097 = vld [vmem:[#allocation5 + $0x20] sm:$0xff]
        %v3098 = vld [vmem:[#allocation5 + $0x28] sm:$0xff]
        %v3099 = vld [vmem:[#allocation5 + $0x30] sm:$0xff]
        %v3100 = vld [vmem:[#allocation5 + $0x38] sm:$0xff]
        %v3101 = vld [vmem:[#allocation5 + $0x40] sm:$0xff]
        %v3102 = vld [vmem:[#allocation5 + $0x48] sm:$0xff]
        %v3103 = vld [vmem:[#allocation5 + $0x50] sm:$0xff]
        %v3104 = vld [vmem:[#allocation5 + $0x58] sm:$0xff]
        %v3105 = vld [vmem:[#allocation5 + $0x60] sm:$0xff]
        %v3106 = vld [vmem:[#allocation5 + $0x68] sm:$0xff]
        %v3107 = vld [vmem:[#allocation5 + $0x70] sm:$0xff]
        %v3108 = vld [vmem:[#allocation5 + $0x78] sm:$0xff]
        %v3109 = vld [vmem:[#allocation5 + $0x80] sm:$0xff]
        %v3110 = vld [vmem:[#allocation5 + $0x88] sm:$0xff]
        %v3111 = vld [vmem:[#allocation5 + $0x90] sm:$0xff]
        %v3112 = vld [vmem:[#allocation5 + $0x98] sm:$0xff]
        %v3113 = vld [vmem:[#allocation5 + $0xa0] sm:$0xff]
        %v3114 = vld [vmem:[#allocation5 + $0xa8] sm:$0xff]
        %v3115 = vld [vmem:[#allocation5 + $0xb0] sm:$0xff]
        %v3116 = vld [vmem:[#allocation5 + $0xb8] sm:$0xff]
        %v3117 = vld [vmem:[#allocation5 + $0xc0] sm:$0xff]
        %v3118 = vld [vmem:[#allocation5 + $0xc8] sm:$0xff]
        %v3119 = vld [vmem:[#allocation5 + $0xd0] sm:$0xff]
        %v3120 = vld [vmem:[#allocation5 + $0xd8] sm:$0xff]
        %v3121 = vld [vmem:[#allocation5 + $0xe0] sm:$0xff]
        %v3122 = vld [vmem:[#allocation5 + $0xe8] sm:$0xff]
        %v3123 = vld [vmem:[#allocation5 + $0xf0] sm:$0xff]
        %v3124 = vld [vmem:[#allocation5 + $0xf8] sm:$0xff]
        %v3125 = vld [vmem:[#allocation5 + $0x100] sm:$0xff]
        %v3126 = vld [vmem:[#allocation5 + $0x108] sm:$0xff]
        %v3127 = vld [vmem:[#allocation5 + $0x110] sm:$0xff]
        %v3128 = vld [vmem:[#allocation5 + $0x118] sm:$0xff]
        %v3129 = vld [vmem:[#allocation5 + $0x120] sm:$0xff]
        %v3130 = vld [vmem:[#allocation5 + $0x128] sm:$0xff]
        %v3131 = vld [vmem:[#allocation5 + $0x130] sm:$0xff]
        %v3132 = vld [vmem:[#allocation5 + $0x138] sm:$0xff]
        %v3133 = vld [vmem:[%s3] sm:$0xf]
        %v3134 = vld [vmem:[%s3 + $0x4] sm:$0xf]
        %v3135 = vld [vmem:[%s3 + $0x8] sm:$0xf]
        %v3136 = vld [vmem:[%s3 + $0xc] sm:$0xf]
        %v3137 = vld [vmem:[%s3 + $0x10] sm:$0xf]
        %v3138 = vld [vmem:[%s3 + $0x14] sm:$0xf]
        %v3139 = vld [vmem:[%s3 + $0x18] sm:$0xf]
        %v3140 = vld [vmem:[%s3 + $0x1c] sm:$0xf]
        %v3141 = vld [vmem:[%s3 + $0x20] sm:$0xf]
        %v3142 = vld [vmem:[%s3 + $0x24] sm:$0xf]
        %v3143 = vld [vmem:[%s3 + $0x28] sm:$0xf]
        %v3144 = vld [vmem:[%s3 + $0x2c] sm:$0xf]
        %v3145 = vld [vmem:[%s3 + $0x30] sm:$0xf]
        %v3146 = vld [vmem:[%s3 + $0x34] sm:$0xf]
        %v3147 = vld [vmem:[%s3 + $0x38] sm:$0xf]
        %v3148 = vld [vmem:[%s3 + $0x3c] sm:$0xf]
        %v3149 = vld [vmem:[%s3 + $0x40] sm:$0xf]
        %v3150 = vld [vmem:[%s3 + $0x44] sm:$0xf]
        %v3151 = vld [vmem:[%s3 + $0x48] sm:$0xf]
        %v3152 = vld [vmem:[%s3 + $0x4c] sm:$0xf]
        %v3153 = vld [vmem:[%s3 + $0x50] sm:$0xf]
        %v3154 = vld [vmem:[%s3 + $0x54] sm:$0xf]
        %v3155 = vld [vmem:[%s3 + $0x58] sm:$0xf]
        %v3156 = vld [vmem:[%s3 + $0x5c] sm:$0xf]
        %v3157 = vld [vmem:[%s3 + $0x60] sm:$0xf]
        %v3158 = vld [vmem:[%s3 + $0x64] sm:$0xf]
        %v3159 = vld [vmem:[%s3 + $0x68] sm:$0xf]
        %v3160 = vld [vmem:[%s3 + $0x6c] sm:$0xf]
        %v3161 = vld [vmem:[%s3 + $0x70] sm:$0xf]
        %v3162 = vld [vmem:[%s3 + $0x74] sm:$0xf]
        %v3163 = vld [vmem:[%s3 + $0x78] sm:$0xf]
        %v3164 = vld [vmem:[%s3 + $0x7c] sm:$0xf]
        %v3165 = vld [vmem:[%s3 + $0x80] sm:$0xf]
        %v3166 = vld [vmem:[%s3 + $0x84] sm:$0xf]
        %v3167 = vld [vmem:[%s3 + $0x88] sm:$0xf]
        %v3168 = vld [vmem:[%s3 + $0x8c] sm:$0xf]
        %v3169 = vld [vmem:[%s3 + $0x90] sm:$0xf]
        %v3170 = vld [vmem:[%s3 + $0x94] sm:$0xf]
        %v3171 = vld [vmem:[%s3 + $0x98] sm:$0xf]
        %v3172 = vld [vmem:[%s3 + $0x9c] sm:$0xf]
        %v3173 = vld [vmem:[%s3 + $0xa0] sm:$0xf]
        %v3174 = vld [vmem:[%s3 + $0xa4] sm:$0xf]
        %v3175 = vld [vmem:[%s3 + $0xa8] sm:$0xf]
        %v3176 = vld [vmem:[%s3 + $0xac] sm:$0xf]
        %v3177 = vld [vmem:[%s3 + $0xb0] sm:$0xf]
        %v3178 = vld [vmem:[%s3 + $0xb4] sm:$0xf]
        %v3179 = vld [vmem:[%s3 + $0xb8] sm:$0xf]
        %v3180 = vld [vmem:[%s3 + $0xbc] sm:$0xf]
        %v3181 = vld [vmem:[%s3 + $0xc0] sm:$0xf]
        %v3182 = vld [vmem:[%s3 + $0xc4] sm:$0xf]
        %v3183 = vld [vmem:[%s3 + $0xc8] sm:$0xf]
        %v3184 = vld [vmem:[%s3 + $0xcc] sm:$0xf]
        %v3185 = vld [vmem:[%s3 + $0xd0] sm:$0xf]
        %v3186 = vld [vmem:[%s3 + $0xd4] sm:$0xf]
        %v3187 = vld [vmem:[%s3 + $0xd8] sm:$0xf]
        %v3188 = vld [vmem:[%s3 + $0xdc] sm:$0xf]
        %v3189 = vld [vmem:[%s3 + $0xe0] sm:$0xf]
        %v3190 = vld [vmem:[%s3 + $0xe4] sm:$0xf]
        %v3191 = vld [vmem:[%s3 + $0xe8] sm:$0xf]
        %v3192 = vld [vmem:[%s3 + $0xec] sm:$0xf]
        %v3193 = vld [vmem:[%s3 + $0xf0] sm:$0xf]
        %v3194 = vld [vmem:[%s3 + $0xf4] sm:$0xf]
        %v3195 = vld [vmem:[%s3 + $0xf8] sm:$0xf]
        %v3196 = vld [vmem:[%s3 + $0xfc] sm:$0xf]
        %v3197 = vld [vmem:[%s3 + $0x100] sm:$0xf]
        %v3198 = vld [vmem:[%s3 + $0x104] sm:$0xf]
        %v3199 = vld [vmem:[%s3 + $0x108] sm:$0xf]
        %v3200 = vld [vmem:[%s3 + $0x10c] sm:$0xf]
        %v3201 = vld [vmem:[%s3 + $0x110] sm:$0xf]
        %v3202 = vld [vmem:[%s3 + $0x114] sm:$0xf]
        %v3203 = vld [vmem:[%s3 + $0x118] sm:$0xf]
        %v3204 = vld [vmem:[%s3 + $0x11c] sm:$0xf]
        %v3205 = vld [vmem:[%s3 + $0x120] sm:$0xf]
        %v3206 = vld [vmem:[%s3 + $0x124] sm:$0xf]
        %v3207 = vld [vmem:[%s3 + $0x128] sm:$0xf]
        %v3208 = vld [vmem:[%s3 + $0x12c] sm:$0xf]
        %v3209 = vld [vmem:[%s3 + $0x130] sm:$0xf]
        %v3210 = vld [vmem:[%s3 + $0x134] sm:$0xf]
        %v3211 = vld [vmem:[%s3 + $0x138] sm:$0xf]
        %v3212 = vld [vmem:[%s3 + $0x13c] sm:$0xf]
        %v3213 = vld [vmem:[%s4] sm:$0x1]
        %v3215 = vlaneseq
        %v3216 = vshrl.u32 %v3215, 7
        %v3217 = vsub.s32 0, %v3216
        %v3218 = vrot.slane %v3213, %v3217
        %v3300 = vunpack.c.l.b16 %v3133
        %v3301 = vunpack.c.l.b16 %v3134
        %v3302 = vunpack.c.l.b16 %v3135
        %v3303 = vunpack.c.l.b16 %v3136
        %v3304 = vunpack.c.l.b16 %v3137
        %v3305 = vunpack.c.l.b16 %v3138
        %v3306 = vunpack.c.l.b16 %v3139
        %v3307 = vunpack.c.l.b16 %v3140
        %v3308 = vunpack.c.l.b16 %v3141
        %v3309 = vunpack.c.l.b16 %v3142
        %v3310 = vunpack.c.l.b16 %v3143
        %v3311 = vunpack.c.l.b16 %v3144
        %v3312 = vunpack.c.l.b16 %v3145
        %v3313 = vunpack.c.l.b16 %v3146
        %v3314 = vunpack.c.l.b16 %v3147
        %v3315 = vunpack.c.l.b16 %v3148
        %v3316 = vunpack.c.l.b16 %v3149
        %v3317 = vunpack.c.l.b16 %v3150
        %v3318 = vunpack.c.l.b16 %v3151
        %v3319 = vunpack.c.l.b16 %v3152
        %v3320 = vunpack.c.l.b16 %v3153
        %v3321 = vunpack.c.l.b16 %v3154
        %v3322 = vunpack.c.l.b16 %v3155
        %v3323 = vunpack.c.l.b16 %v3156
        %v3324 = vunpack.c.l.b16 %v3157
        %v3325 = vunpack.c.l.b16 %v3158
        %v3326 = vunpack.c.l.b16 %v3159
        %v3327 = vunpack.c.l.b16 %v3160
        %v3328 = vunpack.c.l.b16 %v3161
        %v3329 = vunpack.c.l.b16 %v3162
        %v3330 = vunpack.c.l.b16 %v3163
        %v3331 = vunpack.c.l.b16 %v3164
        %v3332 = vunpack.c.l.b16 %v3165
        %v3333 = vunpack.c.l.b16 %v3166
        %v3334 = vunpack.c.l.b16 %v3167
        %v3335 = vunpack.c.l.b16 %v3168
        %v3336 = vunpack.c.l.b16 %v3169
        %v3337 = vunpack.c.l.b16 %v3170
        %v3338 = vunpack.c.l.b16 %v3171
        %v3339 = vunpack.c.l.b16 %v3172
        %v3340 = vunpack.c.l.b16 %v3173
        %v3341 = vunpack.c.l.b16 %v3174
        %v3342 = vunpack.c.l.b16 %v3175
        %v3343 = vunpack.c.l.b16 %v3176
        %v3344 = vunpack.c.l.b16 %v3177
        %v3345 = vunpack.c.l.b16 %v3178
        %v3346 = vunpack.c.l.b16 %v3179
        %v3347 = vunpack.c.l.b16 %v3180
        %v3348 = vunpack.c.l.b16 %v3181
        %v3349 = vunpack.c.l.b16 %v3182
        %v3350 = vunpack.c.l.b16 %v3183
        %v3351 = vunpack.c.l.b16 %v3184
        %v3352 = vunpack.c.l.b16 %v3185
        %v3353 = vunpack.c.l.b16 %v3186
        %v3354 = vunpack.c.l.b16 %v3187
        %v3355 = vunpack.c.l.b16 %v3188
        %v3356 = vunpack.c.l.b16 %v3189
        %v3357 = vunpack.c.l.b16 %v3190
        %v3358 = vunpack.c.l.b16 %v3191
        %v3359 = vunpack.c.l.b16 %v3192
        %v3360 = vunpack.c.l.b16 %v3193
        %v3361 = vunpack.c.l.b16 %v3194
        %v3362 = vunpack.c.l.b16 %v3195
        %v3363 = vunpack.c.l.b16 %v3196
        %v3364 = vunpack.c.l.b16 %v3197
        %v3365 = vunpack.c.l.b16 %v3198
        %v3366 = vunpack.c.l.b16 %v3199
        %v3367 = vunpack.c.l.b16 %v3200
        %v3368 = vunpack.c.l.b16 %v3201
        %v3369 = vunpack.c.l.b16 %v3202
        %v3370 = vunpack.c.l.b16 %v3203
        %v3371 = vunpack.c.l.b16 %v3204
        %v3372 = vunpack.c.l.b16 %v3205
        %v3373 = vunpack.c.l.b16 %v3206
        %v3374 = vunpack.c.l.b16 %v3207
        %v3375 = vunpack.c.l.b16 %v3208
        %v3376 = vunpack.c.l.b16 %v3209
        %v3377 = vunpack.c.l.b16 %v3210
        %v3378 = vunpack.c.l.b16 %v3211
        %v3379 = vunpack.c.l.b16 %v3212
        %v3380 = vpack.c.b16 %v3301, %v3300
        %v3381 = vpack.c.b16 %v3303, %v3302
        %v3382 = vpack.c.b16 %v3305, %v3304
        %v3383 = vpack.c.b16 %v3307, %v3306
        %v3384 = vpack.c.b16 %v3309, %v3308
        %v3385 = vpack.c.b16 %v3311, %v3310
        %v3386 = vpack.c.b16 %v3313, %v3312
        %v3387 = vpack.c.b16 %v3315, %v3314
        %v3388 = vpack.c.b16 %v3317, %v3316
        %v3389 = vpack.c.b16 %v3319, %v3318
        %v3390 = vpack.c.b16 %v3321, %v3320
        %v3391 = vpack.c.b16 %v3323, %v3322
        %v3392 = vpack.c.b16 %v3325, %v3324
        %v3393 = vpack.c.b16 %v3327, %v3326
        %v3394 = vpack.c.b16 %v3329, %v3328
        %v3395 = vpack.c.b16 %v3331, %v3330
        %v3396 = vpack.c.b16 %v3333, %v3332
        %v3397 = vpack.c.b16 %v3335, %v3334
        %v3398 = vpack.c.b16 %v3337, %v3336
        %v3399 = vpack.c.b16 %v3339, %v3338
        %v3400 = vpack.c.b16 %v3341, %v3340
        %v3401 = vpack.c.b16 %v3343, %v3342
        %v3402 = vpack.c.b16 %v3345, %v3344
        %v3403 = vpack.c.b16 %v3347, %v3346
        %v3404 = vpack.c.b16 %v3349, %v3348
        %v3405 = vpack.c.b16 %v3351, %v3350
        %v3406 = vpack.c.b16 %v3353, %v3352
        %v3407 = vpack.c.b16 %v3355, %v3354
        %v3408 = vpack.c.b16 %v3357, %v3356
        %v3409 = vpack.c.b16 %v3359, %v3358
        %v3410 = vpack.c.b16 %v3361, %v3360
        %v3411 = vpack.c.b16 %v3363, %v3362
        %v3412 = vpack.c.b16 %v3365, %v3364
        %v3413 = vpack.c.b16 %v3367, %v3366
        %v3414 = vpack.c.b16 %v3369, %v3368
        %v3415 = vpack.c.b16 %v3371, %v3370
        %v3416 = vpack.c.b16 %v3373, %v3372
        %v3417 = vpack.c.b16 %v3375, %v3374
        %v3418 = vpack.c.b16 %v3377, %v3376
        %v3419 = vpack.c.b16 %v3379, %v3378
        %3460 = vmatprep.subr.bf16.mxu0 0
        %3461 = vmatpush1.bf16.msra.mxu0 %v3380
        %3462 = vmatprep.subr.bf16.mxu0 0
        %3463 = vmatpush1.bf16.msra.mxu0 %v3381
        %3464 = vmatprep.subr.bf16.mxu0 0
        %3465 = vmatpush1.bf16.msra.mxu0 %v3382
        %3466 = vmatprep.subr.bf16.mxu0 0
        %3467 = vmatpush1.bf16.msra.mxu0 %v3383
        %3468 = vmatprep.subr.bf16.mxu0 0
        %3469 = vmatpush1.bf16.msra.mxu0 %v3384
        %3470 = vmatprep.subr.bf16.mxu0 0
        %3471 = vmatpush1.bf16.msra.mxu0 %v3385
        %3472 = vmatprep.subr.bf16.mxu0 0
        %3473 = vmatpush1.bf16.msra.mxu0 %v3386
        %3474 = vmatprep.subr.bf16.mxu0 0
        %3475 = vmatpush1.bf16.msra.mxu0 %v3387
        %3476 = vmatprep.subr.bf16.mxu0 0
        %3477 = vmatpush1.bf16.msra.mxu0 %v3388
        %3478 = vmatprep.subr.bf16.mxu0 0
        %3479 = vmatpush1.bf16.msra.mxu0 %v3389
        %3480 = vmatprep.subr.bf16.mxu0 0
        %3481 = vmatpush1.bf16.msra.mxu0 %v3390
        %3482 = vmatprep.subr.bf16.mxu0 0
        %3483 = vmatpush1.bf16.msra.mxu0 %v3391
        %3484 = vmatprep.subr.bf16.mxu0 0
        %3485 = vmatpush1.bf16.msra.mxu0 %v3392
        %3486 = vmatprep.subr.bf16.mxu0 0
        %3487 = vmatpush1.bf16.msra.mxu0 %v3393
        %3488 = vmatprep.subr.bf16.mxu0 0
        %3489 = vmatpush1.bf16.msra.mxu0 %v3394
        %3490 = vmatprep.subr.bf16.mxu0 0
        %3491 = vmatpush1.bf16.msra.mxu0 %v3395
        %3492 = vmatprep.mubr.bf16.mxu0 %v3094
        %3493 = vmatmul.mubr.bf16.gmra.mrb[0].mxu0 %v3093
        %v3494 = vpop.f32.mrb[0].mxu0
        %v3495 = vadd.f32 %v3218, %v3494
        %v3496 = vpop.f32.mrb[0].mxu0
        %v3497 = vpop.f32.mrb[0].mxu0
        %v3498 = vadd.f32 %v3218, %v3497
        %v3499 = vpop.f32.mrb[0].mxu0
        %3500 = vmatprep.mubr.bf16.mxu0 %v3099
        %3501 = vmatmul.mubr.bf16.gmra.mrb[0].mxu0 %v3098
        %v3502 = vpop.f32.mrb[0].mxu0
        %v3503 = vadd.f32 %v3218, %v3502
        %v3504 = vpop.f32.mrb[0].mxu0
        %v3505 = vpop.f32.mrb[0].mxu0
        %v3506 = vadd.f32 %v3218, %v3505
        %v3507 = vpop.f32.mrb[0].mxu0
        %3508 = vmatprep.mubr.bf16.mxu0 %v3104
        %3509 = vmatmul.mubr.bf16.gmra.mrb[0].mxu0 %v3103
        %v3510 = vpop.f32.mrb[0].mxu0
        %v3511 = vadd.f32 %v3218, %v3510
        %v3512 = vpop.f32.mrb[0].mxu0
        %v3513 = vpop.f32.mrb[0].mxu0
        %v3514 = vadd.f32 %v3218, %v3513
        %v3515 = vpop.f32.mrb[0].mxu0
        %3516 = vmatprep.mubr.bf16.mxu0 %v3109
        %3517 = vmatmul.mubr.bf16.gmra.mrb[0].mxu0 %v3108
        %v3518 = vpop.f32.mrb[0].mxu0
        %v3519 = vadd.f32 %v3218, %v3518
        %v3520 = vpop.f32.mrb[0].mxu0
        %v3521 = vpop.f32.mrb[0].mxu0
        %v3522 = vadd.f32 %v3218, %v3521
        %v3523 = vpop.f32.mrb[0].mxu0
        %3524 = vmatprep.mubr.bf16.mxu0 %v3114
        %3525 = vmatmul.mubr.bf16.gmra.mrb[0].mxu0 %v3113
        %v3526 = vpop.f32.mrb[0].mxu0
        %v3527 = vadd.f32 %v3218, %v3526
        %v3528 = vpop.f32.mrb[0].mxu0
        %v3529 = vpop.f32.mrb[0].mxu0
        %v3530 = vadd.f32 %v3218, %v3529
        %v3531 = vpop.f32.mrb[0].mxu0
        %3532 = vmatprep.mubr.bf16.mxu0 %v3119
        %3533 = vmatmul.mubr.bf16.gmra.mrb[0].mxu0 %v3118
        %v3534 = vpop.f32.mrb[0].mxu0
        %v3535 = vadd.f32 %v3218, %v3534
        %v3536 = vpop.f32.mrb[0].mxu0
        %v3537 = vpop.f32.mrb[0].mxu0
        %v3538 = vadd.f32 %v3218, %v3537
        %v3539 = vpop.f32.mrb[0].mxu0
        %3540 = vmatprep.mubr.bf16.mxu0 %v3124
        %3541 = vmatmul.mubr.bf16.gmra.mrb[0].mxu0 %v3123
        %v3542 = vpop.f32.mrb[0].mxu0
        %v3543 = vadd.f32 %v3218, %v3542
        %v3544 = vpop.f32.mrb[0].mxu0
        %v3545 = vpop.f32.mrb[0].mxu0
        %v3546 = vadd.f32 %v3218, %v3545
        %v3547 = vpop.f32.mrb[0].mxu0
        %3548 = vmatprep.mubr.bf16.mxu0 %v3129
        %3549 = vmatmul.mubr.bf16.gmra.mrb[0].mxu0 %v3128
        %v3550 = vpop.f32.mrb[0].mxu0
        %v3551 = vadd.f32 %v3218, %v3550
        %v3552 = vpop.f32.mrb[0].mxu0
        %v3553 = vpop.f32.mrb[0].mxu0
        %v3554 = vadd.f32 %v3218, %v3553
        %v3555 = vpop.f32.mrb[0].mxu0
        %3556 = vdwg.mxu0
        %3557 = vmatprep.subr.bf16.mxu0 0
        %3558 = vmatpush1.bf16.msra.mxu0 %v3396
        %3559 = vmatprep.subr.bf16.mxu0 0
        %3560 = vmatpush1.bf16.msra.mxu0 %v3397
        %3561 = vmatprep.subr.bf16.mxu0 0
        %3562 = vmatpush1.bf16.msra.mxu0 %v3398
        %3563 = vmatprep.subr.bf16.mxu0 0
        %3564 = vmatpush1.bf16.msra.mxu0 %v3399
        %3565 = vmatprep.subr.bf16.mxu0 0
        %3566 = vmatpush1.bf16.msra.mxu0 %v3400
        %3567 = vmatprep.subr.bf16.mxu0 0
        %3568 = vmatpush1.bf16.msra.mxu0 %v3401
        %3569 = vmatprep.subr.bf16.mxu0 0
        %3570 = vmatpush1.bf16.msra.mxu0 %v3402
        %3571 = vmatprep.subr.bf16.mxu0 0
        %3572 = vmatpush1.bf16.msra.mxu0 %v3403
        %3573 = vmatprep.subr.bf16.mxu0 0
        %3574 = vmatpush1.bf16.msra.mxu0 %v3404
        %3575 = vmatprep.subr.bf16.mxu0 0
        %3576 = vmatpush1.bf16.msra.mxu0 %v3405
        %3577 = vmatprep.subr.bf16.mxu0 0
        %3578 = vmatpush1.bf16.msra.mxu0 %v3406
        %3579 = vmatprep.subr.bf16.mxu0 0
        %3580 = vmatpush1.bf16.msra.mxu0 %v3407
        %3581 = vmatprep.subr.bf16.mxu0 0
        %3582 = vmatpush1.bf16.msra.mxu0 %v3408
        %3583 = vmatprep.subr.bf16.mxu0 0
        %3584 = vmatpush1.bf16.msra.mxu0 %v3409
        %3585 = vmatprep.subr.bf16.mxu0 0
        %3586 = vmatpush1.bf16.msra.mxu0 %v3410
        %3587 = vmatprep.subr.bf16.mxu0 0
        %3588 = vmatpush1.bf16.msra.mxu0 %v3411
        %3589 = vmatprep.mubr.bf16.mxu0 %v3096
        %3590 = vmatmul.mubr.bf16.gmra.mrb[0].mxu0 %v3095
        %v3591 = vpop.f32.mrb[0].mxu0
        %v3592 = vadd.f32 %v3495, %v3591
        %v3593 = vpop.f32.mrb[0].mxu0
        %v3594 = vpop.f32.mrb[0].mxu0
        %v3595 = vadd.f32 %v3498, %v3594
        %v3596 = vpop.f32.mrb[0].mxu0
        %3597 = vmatprep.mubr.bf16.mxu0 %v3101
        %3598 = vmatmul.mubr.bf16.gmra.mrb[0].mxu0 %v3100
        %v3599 = vpop.f32.mrb[0].mxu0
        %v3600 = vadd.f32 %v3503, %v3599
        %v3601 = vpop.f32.mrb[0].mxu0
        %v3602 = vpop.f32.mrb[0].mxu0
        %v3603 = vadd.f32 %v3506, %v3602
        %v3604 = vpop.f32.mrb[0].mxu0
        %3605 = vmatprep.mubr.bf16.mxu0 %v3106
        %3606 = vmatmul.mubr.bf16.gmra.mrb[0].mxu0 %v3105
        %v3607 = vpop.f32.mrb[0].mxu0
        %v3608 = vadd.f32 %v3511, %v3607
        %v3609 = vpop.f32.mrb[0].mxu0
        %v3610 = vpop.f32.mrb[0].mxu0
        %v3611 = vadd.f32 %v3514, %v3610
        %v3612 = vpop.f32.mrb[0].mxu0
        %3613 = vmatprep.mubr.bf16.mxu0 %v3111
        %3614 = vmatmul.mubr.bf16.gmra.mrb[0].mxu0 %v3110
        %v3615 = vpop.f32.mrb[0].mxu0
        %v3616 = vadd.f32 %v3519, %v3615
        %v3617 = vpop.f32.mrb[0].mxu0
        %v3618 = vpop.f32.mrb[0].mxu0
        %v3619 = vadd.f32 %v3522, %v3618
        %v3620 = vpop.f32.mrb[0].mxu0
        %3621 = vmatprep.mubr.bf16.mxu0 %v3116
        %3622 = vmatmul.mubr.bf16.gmra.mrb[0].mxu0 %v3115
        %v3623 = vpop.f32.mrb[0].mxu0
        %v3624 = vadd.f32 %v3527, %v3623
        %v3625 = vpop.f32.mrb[0].mxu0
        %v3626 = vpop.f32.mrb[0].mxu0
        %v3627 = vadd.f32 %v3530, %v3626
        %v3628 = vpop.f32.mrb[0].mxu0
        %3629 = vmatprep.mubr.bf16.mxu0 %v3121
        %3630 = vmatmul.mubr.bf16.gmra.mrb[0].mxu0 %v3120
        %v3631 = vpop.f32.mrb[0].mxu0
        %v3632 = vadd.f32 %v3535, %v3631
        %v3633 = vpop.f32.mrb[0].mxu0
        %v3634 = vpop.f32.mrb[0].mxu0
        %v3635 = vadd.f32 %v3538, %v3634
        %v3636 = vpop.f32.mrb[0].mxu0
        %3637 = vmatprep.mubr.bf16.mxu0 %v3126
        %3638 = vmatmul.mubr.bf16.gmra.mrb[0].mxu0 %v3125
        %v3639 = vpop.f32.mrb[0].mxu0
        %v3640 = vadd.f32 %v3543, %v3639
        %v3641 = vpop.f32.mrb[0].mxu0
        %v3642 = vpop.f32.mrb[0].mxu0
        %v3643 = vadd.f32 %v3546, %v3642
        %v3644 = vpop.f32.mrb[0].mxu0
        %3645 = vmatprep.mubr.bf16.mxu0 %v3131
        %3646 = vmatmul.mubr.bf16.gmra.mrb[0].mxu0 %v3130
        %v3647 = vpop.f32.mrb[0].mxu0
        %v3648 = vadd.f32 %v3551, %v3647
        %v3649 = vpop.f32.mrb[0].mxu0
        %v3650 = vpop.f32.mrb[0].mxu0
        %v3651 = vadd.f32 %v3554, %v3650
        %v3652 = vpop.f32.mrb[0].mxu0
        %3653 = vdwg.mxu0
        %3654 = vmatprep.subr.bf16.mxu0 0
        %3655 = vmatpush1.bf16.msra.mxu0 %v3412
        %3656 = vmatprep.subr.bf16.mxu0 0
        %3657 = vmatpush1.bf16.msra.mxu0 %v3413
        %3658 = vmatprep.subr.bf16.mxu0 0
        %3659 = vmatpush1.bf16.msra.mxu0 %v3414
        %3660 = vmatprep.subr.bf16.mxu0 0
        %3661 = vmatpush1.bf16.msra.mxu0 %v3415
        %3662 = vmatprep.subr.bf16.mxu0 0
        %3663 = vmatpush1.bf16.msra.mxu0 %v3416
        %3664 = vmatprep.subr.bf16.mxu0 0
        %3665 = vmatpush1.bf16.msra.mxu0 %v3417
        %3666 = vmatprep.subr.bf16.mxu0 0
        %3667 = vmatpush1.bf16.msra.mxu0 %v3418
        %3668 = vmatprep.subr.bf16.mxu0 0
        %3669 = vmatpush1.bf16.msra.mxu0 %v3419
        %3670 = vmatprep.subr.bf16.mxu0 0
        %3671 = vmatpush1.bf16.msra.mxu0 0
        %3672 = vmatprep.subr.bf16.mxu0 0
        %3673 = vmatpush1.bf16.msra.mxu0 0
        %3674 = vmatprep.subr.bf16.mxu0 0
        %3675 = vmatpush1.bf16.msra.mxu0 0
        %3676 = vmatprep.subr.bf16.mxu0 0
        %3677 = vmatpush1.bf16.msra.mxu0 0
        %3678 = vmatprep.subr.bf16.mxu0 0
        %3679 = vmatpush1.bf16.msra.mxu0 0
        %3680 = vmatprep.subr.bf16.mxu0 0
        %3681 = vmatpush1.bf16.msra.mxu0 0
        %3682 = vmatprep.subr.bf16.mxu0 0
        %3683 = vmatpush1.bf16.msra.mxu0 0
        %3684 = vmatprep.subr.bf16.mxu0 0
        %3685 = vmatpush1.bf16.msra.mxu0 0
        %3686 = vmatprep.mubr.bf16.mxu0 0
        %3687 = vmatmul.mubr.bf16.gmra.mrb[0].mxu0 %v3097
        %v3688 = vpop.f32.mrb[0].mxu0
        %v3689 = vadd.f32 %v3592, %v3688
        %v3690 = vpop.f32.mrb[0].mxu0
        %v3691 = vpop.f32.mrb[0].mxu0
        %v3692 = vadd.f32 %v3595, %v3691
        %v3693 = vpop.f32.mrb[0].mxu0
        %3694 = vmatprep.mubr.bf16.mxu0 0
        %3695 = vmatmul.mubr.bf16.gmra.mrb[0].mxu0 %v3102
        %v3696 = vpop.f32.mrb[0].mxu0
        %v3697 = vadd.f32 %v3600, %v3696
        %v3698 = vpop.f32.mrb[0].mxu0
        %v3699 = vpop.f32.mrb[0].mxu0
        %v3700 = vadd.f32 %v3603, %v3699
        %v3701 = vpop.f32.mrb[0].mxu0
        %3702 = vmatprep.mubr.bf16.mxu0 0
        %3703 = vmatmul.mubr.bf16.gmra.mrb[0].mxu0 %v3107
        %v3704 = vpop.f32.mrb[0].mxu0
        %v3705 = vadd.f32 %v3608, %v3704
        %v3706 = vpop.f32.mrb[0].mxu0
        %v3707 = vpop.f32.mrb[0].mxu0
        %v3708 = vadd.f32 %v3611, %v3707
        %v3709 = vpop.f32.mrb[0].mxu0
        %3710 = vmatprep.mubr.bf16.mxu0 0
        %3711 = vmatmul.mubr.bf16.gmra.mrb[0].mxu0 %v3112
        %v3712 = vpop.f32.mrb[0].mxu0
        %v3713 = vadd.f32 %v3616, %v3712
        %v3714 = vpop.f32.mrb[0].mxu0
        %v3715 = vpop.f32.mrb[0].mxu0
        %v3716 = vadd.f32 %v3619, %v3715
        %v3717 = vpop.f32.mrb[0].mxu0
        %3718 = vmatprep.mubr.bf16.mxu0 0
        %3719 = vmatmul.mubr.bf16.gmra.mrb[0].mxu0 %v3117
        %v3720 = vpop.f32.mrb[0].mxu0
        %v3721 = vadd.f32 %v3624, %v3720
        %v3722 = vpop.f32.mrb[0].mxu0
        %v3723 = vpop.f32.mrb[0].mxu0
        %v3724 = vadd.f32 %v3627, %v3723
        %v3725 = vpop.f32.mrb[0].mxu0
        %3726 = vmatprep.mubr.bf16.mxu0 0
        %3727 = vmatmul.mubr.bf16.gmra.mrb[0].mxu0 %v3122
        %v3728 = vpop.f32.mrb[0].mxu0
        %v3729 = vadd.f32 %v3632, %v3728
        %v3730 = vpop.f32.mrb[0].mxu0
        %v3731 = vpop.f32.mrb[0].mxu0
        %v3732 = vadd.f32 %v3635, %v3731
        %v3733 = vpop.f32.mrb[0].mxu0
        %3734 = vmatprep.mubr.bf16.mxu0 0
        %3735 = vmatmul.mubr.bf16.gmra.mrb[0].mxu0 %v3127
        %v3736 = vpop.f32.mrb[0].mxu0
        %v3737 = vadd.f32 %v3640, %v3736
        %v3738 = vpop.f32.mrb[0].mxu0
        %v3739 = vpop.f32.mrb[0].mxu0
        %v3740 = vadd.f32 %v3643, %v3739
        %v3741 = vpop.f32.mrb[0].mxu0
        %3742 = vmatprep.mubr.bf16.mxu0 0
        %3743 = vmatmul.mubr.bf16.gmra.mrb[0].mxu0 %v3132
        %v3744 = vpop.f32.mrb[0].mxu0
        %v3745 = vadd.f32 %v3648, %v3744
        %v3746 = vpop.f32.mrb[0].mxu0
        %v3747 = vpop.f32.mrb[0].mxu0
        %v3748 = vadd.f32 %v3651, %v3747
        %v3749 = vpop.f32.mrb[0].mxu0
        %3750 = vdwg.mxu0
        %v3751 = vmax.f32 %v3689, 0.0
        %v3752 = vmax.f32 %v3692, 0.0
        %v3753 = vmax.f32 %v3697, 0.0
        %v3754 = vmax.f32 %v3700, 0.0
        %v3755 = vmax.f32 %v3705, 0.0
        %v3756 = vmax.f32 %v3708, 0.0
        %v3757 = vmax.f32 %v3713, 0.0
        %v3758 = vmax.f32 %v3716, 0.0
        %v3759 = vmax.f32 %v3721, 0.0
        %v3760 = vmax.f32 %v3724, 0.0
        %v3761 = vmax.f32 %v3729, 0.0
        %v3762 = vmax.f32 %v3732, 0.0
        %v3763 = vmax.f32 %v3737, 0.0
        %v3764 = vmax.f32 %v3740, 0.0
        %v3765 = vmax.f32 %v3745, 0.0
        %v3766 = vmax.f32 %v3748, 0.0
        %3767 = vst [vmem:[%s329] sm:$0xff] %v3751
        %3768 = vst [vmem:[%s329 + $0x8] sm:$0xff] %v3752
        %3769 = vst [vmem:[%s329 + $0x10] sm:$0xff] %v3753
        %3770 = vst [vmem:[%s329 + $0x18] sm:$0xff] %v3754
        %3771 = vst [vmem:[%s329 + $0x20] sm:$0xff] %v3755
        %3772 = vst [vmem:[%s329 + $0x28] sm:$0xff] %v3756
        %3773 = vst [vmem:[%s329 + $0x30] sm:$0xff] %v3757
        %3774 = vst [vmem:[%s329 + $0x38] sm:$0xff] %v3758
        %3775 = vst [vmem:[%s329 + $0x40] sm:$0xff] %v3759
        %3776 = vst [vmem:[%s329 + $0x48] sm:$0xff] %v3760
        %3777 = vst [vmem:[%s329 + $0x50] sm:$0xff] %v3761
        %3778 = vst [vmem:[%s329 + $0x58] sm:$0xff] %v3762
        %3779 = vst [vmem:[%s329 + $0x60] sm:$0xff] %v3763
        %3780 = vst [vmem:[%s329 + $0x68] sm:$0xff] %v3764
        %3781 = vst [vmem:[%s329 + $0x70] sm:$0xff] %v3765
        %3782 = vst [vmem:[%s329 + $0x78] sm:$0xff] %v3766
        %v3783 = vadd.f32 %v3751, %v3752
        %v3784 = vrot.slane %v3783, 4
        %v3785 = vadd.f32 %v3783, %v3784
        %v3786 = vrot.slane %v3785, 2
        %v3787 = vadd.f32 %v3785, %v3786
        %v3788 = vrot.slane %v3787, 1
        %v3789 = vadd.f32 %v3787, %v3788
        %v3790 = vadd.f32 %v3753, %v3754
        %v3791 = vrot.slane %v3790, 4
        %v3792 = vadd.f32 %v3790, %v3791
        %v3793 = vrot.slane %v3792, 2
        %v3794 = vadd.f32 %v3792, %v3793
        %v3795 = vrot.slane %v3794, 1
        %v3796 = vadd.f32 %v3794, %v3795
        %v3797 = vadd.f32 %v3755, %v3756
        %v3798 = vrot.slane %v3797, 4
        %v3799 = vadd.f32 %v3797, %v3798
        %v3800 = vrot.slane %v3799, 2
        %v3801 = vadd.f32 %v3799, %v3800
        %v3802 = vrot.slane %v3801, 1
        %v3803 = vadd.f32 %v3801, %v3802
        %v3804 = vadd.f32 %v3757, %v3758
        %v3805 = vrot.slane %v3804, 4
        %v3806 = vadd.f32 %v3804, %v3805
        %v3807 = vrot.slane %v3806, 2
        %v3808 = vadd.f32 %v3806, %v3807
        %v3809 = vrot.slane %v3808, 1
        %v3810 = vadd.f32 %v3808, %v3809
        %v3811 = vadd.f32 %v3759, %v3760
        %v3812 = vrot.slane %v3811, 4
        %v3813 = vadd.f32 %v3811, %v3812
        %v3814 = vrot.slane %v3813, 2
        %v3815 = vadd.f32 %v3813, %v3814
        %v3816 = vrot.slane %v3815, 1
        %v3817 = vadd.f32 %v3815, %v3816
        %v3818 = vadd.f32 %v3761, %v3762
        %v3819 = vrot.slane %v3818, 4
        %v3820 = vadd.f32 %v3818, %v3819
        %v3821 = vrot.slane %v3820, 2
        %v3822 = vadd.f32 %v3820, %v3821
        %v3823 = vrot.slane %v3822, 1
        %v3824 = vadd.f32 %v3822, %v3823
        %v3825 = vadd.f32 %v3763, %v3764
        %v3826 = vrot.slane %v3825, 4
        %v3827 = vadd.f32 %v3825, %v3826
        %v3828 = vrot.slane %v3827, 2
        %v3829 = vadd.f32 %v3827, %v3828
        %v3830 = vrot.slane %v3829, 1
        %v3831 = vadd.f32 %v3829, %v3830
        %v3832 = vadd.f32 %v3765, %v3766
        %v3833 = vrot.slane %v3832, 4
        %v3834 = vadd.f32 %v3832, %v3833
        %v3835 = vrot.slane %v3834, 2
        %v3836 = vadd.f32 %v3834, %v3835
        %v3837 = vrot.slane %v3836, 1
        %v3838 = vadd.f32 %v3836, %v3837
        %v3839 = vrcp.pop 16.0
        %v3840 = vmul.f32 %v3789, %v3839
        %v3841 = vmul.f32 %v3796, %v3839
        %v3842 = vmul.f32 %v3803, %v3839
        %v3843 = vmul.f32 %v3810, %v3839
        %v3844 = vmul.f32 %v3817, %v3839
        %v3845 = vmul.f32 %v3824, %v3839
        %v3846 = vmul.f32 %v3831, %v3839
        %v3847 = vmul.f32 %v3838, %v3839
        %vm3856 = vcmask 1041409
        %v3857 = vsel %vm3856, %v3841, %v3840
        %vm3858 = vcmask 1042434
        %v3859 = vsel %vm3858, %v3842, %v3857
        %vm3860 = vcmask 1043459
        %v3861 = vsel %vm3860, %v3843, %v3859
        %vm3862 = vcmask 1044484
        %v3863 = vsel %vm3862, %v3844, %v3861
        %vm3864 = vcmask 1045509
        %v3865 = vsel %vm3864, %v3845, %v3863
        %vm3866 = vcmask 1046534
        %v3867 = vsel %vm3866, %v3846, %v3865
        %vm3868 = vcmask 1047559
        %v3869 = vsel %vm3868, %v3847, %v3867
        %3871 = vst [vmem:[%s353] sm:$0xff] %v3869
        %v3872 = vpack.c.bf16 %v2160, %v2158
        %v3873 = vpack.c.bf16 %v2164, %v2162
        %v3874 = vpack.c.bf16 %v2168, %v2166
        %v3875 = vpack.c.bf16 %v2172, %v2170
        %v3876 = vpack.c.bf16 %v2176, %v2174
        %v3877 = vpack.c.bf16 %v2180, %v2178
        %v3878 = vpack.c.bf16 %v2184, %v2182
        %v3879 = vpack.c.bf16 %v2188, %v2186
        %v3888 = vunpack.c.l.b16 %v3872
        %v3889 = vunpack.c.h.b16 %v3872
        %v3890 = vunpack.c.l.b16 %v3873
        %v3891 = vunpack.c.h.b16 %v3873
        %v3892 = vunpack.c.l.b16 %v3874
        %v3893 = vunpack.c.h.b16 %v3874
        %v3894 = vunpack.c.l.b16 %v3875
        %v3895 = vunpack.c.h.b16 %v3875
        %v3896 = vunpack.c.l.b16 %v3876
        %v3897 = vunpack.c.h.b16 %v3876
        %v3898 = vunpack.c.l.b16 %v3877
        %v3899 = vunpack.c.h.b16 %v3877
        %v3900 = vunpack.c.l.b16 %v3878
        %v3901 = vunpack.c.h.b16 %v3878
        %v3902 = vunpack.c.l.b16 %v3879
        %v3903 = vunpack.c.h.b16 %v3879
        %v3904 = vpack.c.b16 %v3888, %v3888
        %v3905 = vpack.c.b16 %v3889, %v3889
        %v3906 = vpack.c.b16 %v3890, %v3890
        %v3907 = vpack.c.b16 %v3891, %v3891
        %v3908 = vpack.c.b16 %v3892, %v3892
        %v3909 = vpack.c.b16 %v3893, %v3893
        %v3910 = vpack.c.b16 %v3894, %v3894
        %v3911 = vpack.c.b16 %v3895, %v3895
        %v3912 = vpack.c.b16 %v3896, %v3896
        %v3913 = vpack.c.b16 %v3897, %v3897
        %v3914 = vpack.c.b16 %v3898, %v3898
        %v3915 = vpack.c.b16 %v3899, %v3899
        %v3916 = vpack.c.b16 %v3900, %v3900
        %v3917 = vpack.c.b16 %v3901, %v3901
        %v3918 = vpack.c.b16 %v3902, %v3902
        %v3919 = vpack.c.b16 %v3903, %v3903
        %v3920 = vrot.slane %v3904, 7
        %v3921 = vrot.slane %v3920, 4
        %v3922 = vrot.slane %v3905, 7
        %v3923 = vsel %vm425, %v3921, %v3922
        %v3924 = vrot.slane %v3922, 4
        %v3925 = vrot.slane %v3906, 7
        %v3926 = vrot.slane %v3925, 4
        %v3927 = vrot.slane %v3907, 7
        %v3928 = vsel %vm425, %v3926, %v3927
        %v3929 = vrot.slane %v3927, 4
        %v3930 = vrot.slane %v3908, 7
        %v3931 = vrot.slane %v3930, 4
        %v3932 = vrot.slane %v3909, 7
        %v3933 = vsel %vm425, %v3931, %v3932
        %v3934 = vrot.slane %v3932, 4
        %v3935 = vrot.slane %v3910, 7
        %v3936 = vrot.slane %v3935, 4
        %v3937 = vrot.slane %v3911, 7
        %v3938 = vsel %vm425, %v3936, %v3937
        %v3939 = vrot.slane %v3937, 4
        %v3940 = vrot.slane %v3912, 7
        %v3941 = vrot.slane %v3940, 4
        %v3942 = vrot.slane %v3913, 7
        %v3943 = vsel %vm425, %v3941, %v3942
        %v3944 = vrot.slane %v3942, 4
        %v3945 = vrot.slane %v3914, 7
        %v3946 = vrot.slane %v3945, 4
        %v3947 = vrot.slane %v3915, 7
        %v3948 = vsel %vm425, %v3946, %v3947
        %v3949 = vrot.slane %v3947, 4
        %v3950 = vrot.slane %v3916, 7
        %v3951 = vrot.slane %v3950, 4
        %v3952 = vrot.slane %v3917, 7
        %v3953 = vsel %vm425, %v3951, %v3952
        %v3954 = vrot.slane %v3952, 4
        %v3955 = vrot.slane %v3918, 7
        %v3956 = vrot.slane %v3955, 4
        %v3957 = vrot.slane %v3919, 7
        %v3958 = vsel %vm425, %v3956, %v3957
        %v3959 = vrot.slane %v3957, 4
        %3984 = vst [vmem:[#allocation4] sm:$0xe] %v3920
        %3985 = vst [vmem:[#allocation4 + $0x4] sm:$0xf] %v3923
        %3986 = vst [vmem:[#allocation4 + $0x8] sm:$0x1] %v3924
        %3987 = vst [vmem:[#allocation4 + $0xc] sm:$0xe] %v3925
        %3988 = vst [vmem:[#allocation4 + $0x10] sm:$0xf] %v3928
        %3989 = vst [vmem:[#allocation4 + $0x14] sm:$0x1] %v3929
        %3990 = vst [vmem:[#allocation4 + $0x18] sm:$0xe] %v3930
        %3991 = vst [vmem:[#allocation4 + $0x1c] sm:$0xf] %v3933
        %3992 = vst [vmem:[#allocation4 + $0x20] sm:$0x1] %v3934
        %3993 = vst [vmem:[#allocation4 + $0x24] sm:$0xe] %v3935
        %3994 = vst [vmem:[#allocation4 + $0x28] sm:$0xf] %v3938
        %3995 = vst [vmem:[#allocation4 + $0x2c] sm:$0x1] %v3939
        %3996 = vst [vmem:[#allocation4 + $0x30] sm:$0xe] %v3940
        %3997 = vst [vmem:[#allocation4 + $0x34] sm:$0xf] %v3943
        %3998 = vst [vmem:[#allocation4 + $0x38] sm:$0x1] %v3944
        %3999 = vst [vmem:[#allocation4 + $0x3c] sm:$0xe] %v3945
        %4000 = vst [vmem:[#allocation4 + $0x40] sm:$0xf] %v3948
        %4001 = vst [vmem:[#allocation4 + $0x44] sm:$0x1] %v3949
        %4002 = vst [vmem:[#allocation4 + $0x48] sm:$0xe] %v3950
        %4003 = vst [vmem:[#allocation4 + $0x4c] sm:$0xf] %v3953
        %4004 = vst [vmem:[#allocation4 + $0x50] sm:$0x1] %v3954
        %4005 = vst [vmem:[#allocation4 + $0x54] sm:$0xe] %v3955
        %4006 = vst [vmem:[#allocation4 + $0x58] sm:$0xf] %v3958
        %4007 = vst [vmem:[#allocation4 + $0x5c] sm:$0x1] %v3959
        %v4008 = vld [vmem:[#allocation4] sm:$0xf]
        %v4009 = vld [vmem:[#allocation4 + $0x4] sm:$0xf]
        %v4010 = vld [vmem:[#allocation4 + $0xc] sm:$0xf]
        %v4011 = vld [vmem:[#allocation4 + $0x10] sm:$0xf]
        %v4012 = vld [vmem:[#allocation4 + $0x18] sm:$0xf]
        %v4013 = vld [vmem:[#allocation4 + $0x1c] sm:$0xf]
        %v4014 = vld [vmem:[#allocation4 + $0x24] sm:$0xf]
        %v4015 = vld [vmem:[#allocation4 + $0x28] sm:$0xf]
        %v4016 = vld [vmem:[#allocation4 + $0x30] sm:$0xf]
        %v4017 = vld [vmem:[#allocation4 + $0x34] sm:$0xf]
        %v4018 = vld [vmem:[#allocation4 + $0x3c] sm:$0xf]
        %v4019 = vld [vmem:[#allocation4 + $0x40] sm:$0xf]
        %v4020 = vld [vmem:[#allocation4 + $0x48] sm:$0xf]
        %v4021 = vld [vmem:[#allocation4 + $0x4c] sm:$0xf]
        %v4022 = vld [vmem:[#allocation4 + $0x54] sm:$0xf]
        %v4023 = vld [vmem:[#allocation4 + $0x58] sm:$0xf]
        %v4040 = vunpack.c.l.b16 %v4008
        %v4041 = vunpack.c.l.b16 %v4009
        %v4042 = vunpack.c.l.b16 %v4010
        %v4043 = vunpack.c.l.b16 %v4011
        %v4044 = vunpack.c.l.b16 %v4012
        %v4045 = vunpack.c.l.b16 %v4013
        %v4046 = vunpack.c.l.b16 %v4014
        %v4047 = vunpack.c.l.b16 %v4015
        %v4048 = vunpack.c.l.b16 %v4016
        %v4049 = vunpack.c.l.b16 %v4017
        %v4050 = vunpack.c.l.b16 %v4018
        %v4051 = vunpack.c.l.b16 %v4019
        %v4052 = vunpack.c.l.b16 %v4020
        %v4053 = vunpack.c.l.b16 %v4021
        %v4054 = vunpack.c.l.b16 %v4022
        %v4055 = vunpack.c.l.b16 %v4023
        %v4056 = vpack.c.b16 %v4041, %v4040
        %v4057 = vpack.c.b16 %v4043, %v4042
        %v4058 = vpack.c.b16 %v4045, %v4044
        %v4059 = vpack.c.b16 %v4047, %v4046
        %v4060 = vpack.c.b16 %v4049, %v4048
        %v4061 = vpack.c.b16 %v4051, %v4050
        %v4062 = vpack.c.b16 %v4053, %v4052
        %v4063 = vpack.c.b16 %v4055, %v4054
        %4072 = vst [vmem:[#allocation5] sm:$0xff] %v4056
        %4073 = vst [vmem:[#allocation5 + $0x28] sm:$0xff] %v4057
        %4074 = vst [vmem:[#allocation5 + $0x50] sm:$0xff] %v4058
        %4075 = vst [vmem:[#allocation5 + $0x78] sm:$0xff] %v4059
        %4076 = vst [vmem:[#allocation5 + $0xa0] sm:$0xff] %v4060
        %4077 = vst [vmem:[#allocation5 + $0xc8] sm:$0xff] %v4061
        %4078 = vst [vmem:[#allocation5 + $0xf0] sm:$0xff] %v4062
        %4079 = vst [vmem:[#allocation5 + $0x118] sm:$0xff] %v4063
        %v4080 = vld [vmem:[#allocation4] sm:$0xf]
        %v4081 = vld [vmem:[#allocation4 + $0x4] sm:$0xf]
        %v4082 = vld [vmem:[#allocation4 + $0x8] sm:$0x1]
        %v4083 = vld [vmem:[#allocation4 + $0xc] sm:$0xf]
        %v4084 = vld [vmem:[#allocation4 + $0x10] sm:$0xf]
        %v4085 = vld [vmem:[#allocation4 + $0x14] sm:$0x1]
        %v4086 = vld [vmem:[#allocation4 + $0x18] sm:$0xf]
        %v4087 = vld [vmem:[#allocation4 + $0x1c] sm:$0xf]
        %v4088 = vld [vmem:[#allocation4 + $0x20] sm:$0x1]
        %v4089 = vld [vmem:[#allocation4 + $0x24] sm:$0xf]
        %v4090 = vld [vmem:[#allocation4 + $0x28] sm:$0xf]
        %v4091 = vld [vmem:[#allocation4 + $0x2c] sm:$0x1]
        %v4092 = vld [vmem:[#allocation4 + $0x30] sm:$0xf]
        %v4093 = vld [vmem:[#allocation4 + $0x34] sm:$0xf]
        %v4094 = vld [vmem:[#allocation4 + $0x38] sm:$0x1]
        %v4095 = vld [vmem:[#allocation4 + $0x3c] sm:$0xf]
        %v4096 = vld [vmem:[#allocation4 + $0x40] sm:$0xf]
        %v4097 = vld [vmem:[#allocation4 + $0x44] sm:$0x1]
        %v4098 = vld [vmem:[#allocation4 + $0x48] sm:$0xf]
        %v4099 = vld [vmem:[#allocation4 + $0x4c] sm:$0xf]
        %v4100 = vld [vmem:[#allocation4 + $0x50] sm:$0x1]
        %v4101 = vld [vmem:[#allocation4 + $0x54] sm:$0xf]
        %v4102 = vld [vmem:[#allocation4 + $0x58] sm:$0xf]
        %v4103 = vld [vmem:[#allocation4 + $0x5c] sm:$0x1]
        %v4128 = vunpack.c.l.b16 %v4080
        %v4129 = vunpack.c.l.b16 %v4081
        %v4130 = vunpack.c.l.b16 %v4082
        %v4131 = vunpack.c.l.b16 %v4083
        %v4132 = vunpack.c.l.b16 %v4084
        %v4133 = vunpack.c.l.b16 %v4085
        %v4134 = vunpack.c.l.b16 %v4086
        %v4135 = vunpack.c.l.b16 %v4087
        %v4136 = vunpack.c.l.b16 %v4088
        %v4137 = vunpack.c.l.b16 %v4089
        %v4138 = vunpack.c.l.b16 %v4090
        %v4139 = vunpack.c.l.b16 %v4091
        %v4140 = vunpack.c.l.b16 %v4092
        %v4141 = vunpack.c.l.b16 %v4093
        %v4142 = vunpack.c.l.b16 %v4094
        %v4143 = vunpack.c.l.b16 %v4095
        %v4144 = vunpack.c.l.b16 %v4096
        %v4145 = vunpack.c.l.b16 %v4097
        %v4146 = vunpack.c.l.b16 %v4098
        %v4147 = vunpack.c.l.b16 %v4099
        %v4148 = vunpack.c.l.b16 %v4100
        %v4149 = vunpack.c.l.b16 %v4101
        %v4150 = vunpack.c.l.b16 %v4102
        %v4151 = vunpack.c.l.b16 %v4103
        %v4152 = vpack.c.b16 %v4129, %v4128
        %v4153 = vpack.c.b16 %v4130, %v4130
        %v4154 = vpack.c.b16 %v4132, %v4131
        %v4155 = vpack.c.b16 %v4133, %v4133
        %v4156 = vpack.c.b16 %v4135, %v4134
        %v4157 = vpack.c.b16 %v4136, %v4136
        %v4158 = vpack.c.b16 %v4138, %v4137
        %v4159 = vpack.c.b16 %v4139, %v4139
        %v4160 = vpack.c.b16 %v4141, %v4140
        %v4161 = vpack.c.b16 %v4142, %v4142
        %v4162 = vpack.c.b16 %v4144, %v4143
        %v4163 = vpack.c.b16 %v4145, %v4145
        %v4164 = vpack.c.b16 %v4147, %v4146
        %v4165 = vpack.c.b16 %v4148, %v4148
        %v4166 = vpack.c.b16 %v4150, %v4149
        %v4167 = vpack.c.b16 %v4151, %v4151
        %v4169 = vshrl.u32 %v4152, 16
        %v4171 = vshll.u32 %v4152, 16
        %v4173 = vrot.slane %v4171, 1
        %v4174 = vor.u32 %v4169, %v4173
        %v4176 = vshll.u32 %v4153, 16
        %v4178 = vrot.slane %v4176, 1
        %v4179 = vsel %vm674, %v4174, %v4178
        %v4181 = vshrl.u32 %v4154, 16
        %v4183 = vshll.u32 %v4154, 16
        %v4185 = vrot.slane %v4183, 1
        %v4186 = vor.u32 %v4181, %v4185
        %v4188 = vshll.u32 %v4155, 16
        %v4190 = vrot.slane %v4188, 1
        %v4191 = vsel %vm674, %v4186, %v4190
        %v4193 = vshrl.u32 %v4156, 16
        %v4195 = vshll.u32 %v4156, 16
        %v4197 = vrot.slane %v4195, 1
        %v4198 = vor.u32 %v4193, %v4197
        %v4200 = vshll.u32 %v4157, 16
        %v4202 = vrot.slane %v4200, 1
        %v4203 = vsel %vm674, %v4198, %v4202
        %v4205 = vshrl.u32 %v4158, 16
        %v4207 = vshll.u32 %v4158, 16
        %v4209 = vrot.slane %v4207, 1
        %v4210 = vor.u32 %v4205, %v4209
        %v4212 = vshll.u32 %v4159, 16
        %v4214 = vrot.slane %v4212, 1
        %v4215 = vsel %vm674, %v4210, %v4214
        %v4217 = vshrl.u32 %v4160, 16
        %v4219 = vshll.u32 %v4160, 16
        %v4221 = vrot.slane %v4219, 1
        %v4222 = vor.u32 %v4217, %v4221
        %v4224 = vshll.u32 %v4161, 16
        %v4226 = vrot.slane %v4224, 1
        %v4227 = vsel %vm674, %v4222, %v4226
        %v4229 = vshrl.u32 %v4162, 16
        %v4231 = vshll.u32 %v4162, 16
        %v4233 = vrot.slane %v4231, 1
        %v4234 = vor.u32 %v4229, %v4233
        %v4236 = vshll.u32 %v4163, 16
        %v4238 = vrot.slane %v4236, 1
        %v4239 = vsel %vm674, %v4234, %v4238
        %v4241 = vshrl.u32 %v4164, 16
        %v4243 = vshll.u32 %v4164, 16
        %v4245 = vrot.slane %v4243, 1
        %v4246 = vor.u32 %v4241, %v4245
        %v4248 = vshll.u32 %v4165, 16
        %v4250 = vrot.slane %v4248, 1
        %v4251 = vsel %vm674, %v4246, %v4250
        %v4253 = vshrl.u32 %v4166, 16
        %v4255 = vshll.u32 %v4166, 16
        %v4257 = vrot.slane %v4255, 1
        %v4258 = vor.u32 %v4253, %v4257
        %v4260 = vshll.u32 %v4167, 16
        %v4262 = vrot.slane %v4260, 1
        %v4263 = vsel %vm674, %v4258, %v4262
        %4272 = vst [vmem:[#allocation5 + $0x8] sm:$0xff] %v4179
        %4273 = vst [vmem:[#allocation5 + $0x30] sm:$0xff] %v4191
        %4274 = vst [vmem:[#allocation5 + $0x58] sm:$0xff] %v4203
        %4275 = vst [vmem:[#allocation5 + $0x80] sm:$0xff] %v4215
        %4276 = vst [vmem:[#allocation5 + $0xa8] sm:$0xff] %v4227
        %4277 = vst [vmem:[#allocation5 + $0xd0] sm:$0xff] %v4239
        %4278 = vst [vmem:[#allocation5 + $0xf8] sm:$0xff] %v4251
        %4279 = vst [vmem:[#allocation5 + $0x120] sm:$0xff] %v4263
        %v4280 = vld [vmem:[#allocation4] sm:$0xe]
        %v4281 = vld [vmem:[#allocation4 + $0x4] sm:$0xf]
        %v4282 = vld [vmem:[#allocation4 + $0x8] sm:$0x1]
        %v4283 = vld [vmem:[#allocation4 + $0xc] sm:$0xe]
        %v4284 = vld [vmem:[#allocation4 + $0x10] sm:$0xf]
        %v4285 = vld [vmem:[#allocation4 + $0x14] sm:$0x1]
        %v4286 = vld [vmem:[#allocation4 + $0x18] sm:$0xe]
        %v4287 = vld [vmem:[#allocation4 + $0x1c] sm:$0xf]
        %v4288 = vld [vmem:[#allocation4 + $0x20] sm:$0x1]
        %v4289 = vld [vmem:[#allocation4 + $0x24] sm:$0xe]
        %v4290 = vld [vmem:[#allocation4 + $0x28] sm:$0xf]
        %v4291 = vld [vmem:[#allocation4 + $0x2c] sm:$0x1]
        %v4292 = vld [vmem:[#allocation4 + $0x30] sm:$0xe]
        %v4293 = vld [vmem:[#allocation4 + $0x34] sm:$0xf]
        %v4294 = vld [vmem:[#allocation4 + $0x38] sm:$0x1]
        %v4295 = vld [vmem:[#allocation4 + $0x3c] sm:$0xe]
        %v4296 = vld [vmem:[#allocation4 + $0x40] sm:$0xf]
        %v4297 = vld [vmem:[#allocation4 + $0x44] sm:$0x1]
        %v4298 = vld [vmem:[#allocation4 + $0x48] sm:$0xe]
        %v4299 = vld [vmem:[#allocation4 + $0x4c] sm:$0xf]
        %v4300 = vld [vmem:[#allocation4 + $0x50] sm:$0x1]
        %v4301 = vld [vmem:[#allocation4 + $0x54] sm:$0xe]
        %v4302 = vld [vmem:[#allocation4 + $0x58] sm:$0xf]
        %v4303 = vld [vmem:[#allocation4 + $0x5c] sm:$0x1]
        %v4328 = vunpack.c.l.b16 %v4280
        %v4329 = vunpack.c.l.b16 %v4281
        %v4330 = vunpack.c.l.b16 %v4282
        %v4331 = vunpack.c.l.b16 %v4283
        %v4332 = vunpack.c.l.b16 %v4284
        %v4333 = vunpack.c.l.b16 %v4285
        %v4334 = vunpack.c.l.b16 %v4286
        %v4335 = vunpack.c.l.b16 %v4287
        %v4336 = vunpack.c.l.b16 %v4288
        %v4337 = vunpack.c.l.b16 %v4289
        %v4338 = vunpack.c.l.b16 %v4290
        %v4339 = vunpack.c.l.b16 %v4291
        %v4340 = vunpack.c.l.b16 %v4292
        %v4341 = vunpack.c.l.b16 %v4293
        %v4342 = vunpack.c.l.b16 %v4294
        %v4343 = vunpack.c.l.b16 %v4295
        %v4344 = vunpack.c.l.b16 %v4296
        %v4345 = vunpack.c.l.b16 %v4297
        %v4346 = vunpack.c.l.b16 %v4298
        %v4347 = vunpack.c.l.b16 %v4299
        %v4348 = vunpack.c.l.b16 %v4300
        %v4349 = vunpack.c.l.b16 %v4301
        %v4350 = vunpack.c.l.b16 %v4302
        %v4351 = vunpack.c.l.b16 %v4303
        %v4352 = vpack.c.b16 %v4329, %v4328
        %v4353 = vpack.c.b16 %v4330, %v4330
        %v4354 = vpack.c.b16 %v4332, %v4331
        %v4355 = vpack.c.b16 %v4333, %v4333
        %v4356 = vpack.c.b16 %v4335, %v4334
        %v4357 = vpack.c.b16 %v4336, %v4336
        %v4358 = vpack.c.b16 %v4338, %v4337
        %v4359 = vpack.c.b16 %v4339, %v4339
        %v4360 = vpack.c.b16 %v4341, %v4340
        %v4361 = vpack.c.b16 %v4342, %v4342
        %v4362 = vpack.c.b16 %v4344, %v4343
        %v4363 = vpack.c.b16 %v4345, %v4345
        %v4364 = vpack.c.b16 %v4347, %v4346
        %v4365 = vpack.c.b16 %v4348, %v4348
        %v4366 = vpack.c.b16 %v4350, %v4349
        %v4367 = vpack.c.b16 %v4351, %v4351
        %v4368 = vrot.slane %v4352, 1
        %v4369 = vrot.slane %v4353, 1
        %v4370 = vsel %vm875, %v4368, %v4369
        %v4371 = vrot.slane %v4354, 1
        %v4372 = vrot.slane %v4355, 1
        %v4373 = vsel %vm875, %v4371, %v4372
        %v4374 = vrot.slane %v4356, 1
        %v4375 = vrot.slane %v4357, 1
        %v4376 = vsel %vm875, %v4374, %v4375
        %v4377 = vrot.slane %v4358, 1
        %v4378 = vrot.slane %v4359, 1
        %v4379 = vsel %vm875, %v4377, %v4378
        %v4380 = vrot.slane %v4360, 1
        %v4381 = vrot.slane %v4361, 1
        %v4382 = vsel %vm875, %v4380, %v4381
        %v4383 = vrot.slane %v4362, 1
        %v4384 = vrot.slane %v4363, 1
        %v4385 = vsel %vm875, %v4383, %v4384
        %v4386 = vrot.slane %v4364, 1
        %v4387 = vrot.slane %v4365, 1
        %v4388 = vsel %vm875, %v4386, %v4387
        %v4389 = vrot.slane %v4366, 1
        %v4390 = vrot.slane %v4367, 1
        %v4391 = vsel %vm875, %v4389, %v4390
        %4400 = vst [vmem:[#allocation5 + $0x10] sm:$0xff] %v4370
        %4401 = vst [vmem:[#allocation5 + $0x38] sm:$0xff] %v4373
        %4402 = vst [vmem:[#allocation5 + $0x60] sm:$0xff] %v4376
        %4403 = vst [vmem:[#allocation5 + $0x88] sm:$0xff] %v4379
        %4404 = vst [vmem:[#allocation5 + $0xb0] sm:$0xff] %v4382
        %4405 = vst [vmem:[#allocation5 + $0xd8] sm:$0xff] %v4385
        %4406 = vst [vmem:[#allocation5 + $0x100] sm:$0xff] %v4388
        %4407 = vst [vmem:[#allocation5 + $0x128] sm:$0xff] %v4391
        %v4408 = vld [vmem:[#allocation4] sm:$0xe]
        %v4409 = vld [vmem:[#allocation4 + $0x4] sm:$0xf]
        %v4410 = vld [vmem:[#allocation4 + $0x8] sm:$0x3]
        %v4411 = vld [vmem:[#allocation4 + $0xc] sm:$0xe]
        %v4412 = vld [vmem:[#allocation4 + $0x10] sm:$0xf]
        %v4413 = vld [vmem:[#allocation4 + $0x14] sm:$0x3]
        %v4414 = vld [vmem:[#allocation4 + $0x18] sm:$0xe]
        %v4415 = vld [vmem:[#allocation4 + $0x1c] sm:$0xf]
        %v4416 = vld [vmem:[#allocation4 + $0x20] sm:$0x3]
        %v4417 = vld [vmem:[#allocation4 + $0x24] sm:$0xe]
        %v4418 = vld [vmem:[#allocation4 + $0x28] sm:$0xf]
        %v4419 = vld [vmem:[#allocation4 + $0x2c] sm:$0x3]
        %v4420 = vld [vmem:[#allocation4 + $0x30] sm:$0xe]
        %v4421 = vld [vmem:[#allocation4 + $0x34] sm:$0xf]
        %v4422 = vld [vmem:[#allocation4 + $0x38] sm:$0x3]
        %v4423 = vld [vmem:[#allocation4 + $0x3c] sm:$0xe]
        %v4424 = vld [vmem:[#allocation4 + $0x40] sm:$0xf]
        %v4425 = vld [vmem:[#allocation4 + $0x44] sm:$0x3]
        %v4426 = vld [vmem:[#allocation4 + $0x48] sm:$0xe]
        %v4427 = vld [vmem:[#allocation4 + $0x4c] sm:$0xf]
        %v4428 = vld [vmem:[#allocation4 + $0x50] sm:$0x3]
        %v4429 = vld [vmem:[#allocation4 + $0x54] sm:$0xe]
        %v4430 = vld [vmem:[#allocation4 + $0x58] sm:$0xf]
        %v4431 = vld [vmem:[#allocation4 + $0x5c] sm:$0x3]
        %v4456 = vunpack.c.l.b16 %v4408
        %v4457 = vunpack.c.l.b16 %v4409
        %v4458 = vunpack.c.l.b16 %v4410
        %v4459 = vunpack.c.l.b16 %v4411
        %v4460 = vunpack.c.l.b16 %v4412
        %v4461 = vunpack.c.l.b16 %v4413
        %v4462 = vunpack.c.l.b16 %v4414
        %v4463 = vunpack.c.l.b16 %v4415
        %v4464 = vunpack.c.l.b16 %v4416
        %v4465 = vunpack.c.l.b16 %v4417
        %v4466 = vunpack.c.l.b16 %v4418
        %v4467 = vunpack.c.l.b16 %v4419
        %v4468 = vunpack.c.l.b16 %v4420
        %v4469 = vunpack.c.l.b16 %v4421
        %v4470 = vunpack.c.l.b16 %v4422
        %v4471 = vunpack.c.l.b16 %v4423
        %v4472 = vunpack.c.l.b16 %v4424
        %v4473 = vunpack.c.l.b16 %v4425
        %v4474 = vunpack.c.l.b16 %v4426
        %v4475 = vunpack.c.l.b16 %v4427
        %v4476 = vunpack.c.l.b16 %v4428
        %v4477 = vunpack.c.l.b16 %v4429
        %v4478 = vunpack.c.l.b16 %v4430
        %v4479 = vunpack.c.l.b16 %v4431
        %v4480 = vpack.c.b16 %v4457, %v4456
        %v4481 = vpack.c.b16 %v4458, %v4458
        %v4482 = vpack.c.b16 %v4460, %v4459
        %v4483 = vpack.c.b16 %v4461, %v4461
        %v4484 = vpack.c.b16 %v4463, %v4462
        %v4485 = vpack.c.b16 %v4464, %v4464
        %v4486 = vpack.c.b16 %v4466, %v4465
        %v4487 = vpack.c.b16 %v4467, %v4467
        %v4488 = vpack.c.b16 %v4469, %v4468
        %v4489 = vpack.c.b16 %v4470, %v4470
        %v4490 = vpack.c.b16 %v4472, %v4471
        %v4491 = vpack.c.b16 %v4473, %v4473
        %v4492 = vpack.c.b16 %v4475, %v4474
        %v4493 = vpack.c.b16 %v4476, %v4476
        %v4494 = vpack.c.b16 %v4478, %v4477
        %v4495 = vpack.c.b16 %v4479, %v4479
        %v4497 = vshrl.u32 %v4480, 16
        %v4499 = vrot.slane %v4497, 1
        %v4500 = vshll.u32 %v4480, 16
        %v4502 = vrot.slane %v4500, 2
        %v4503 = vor.u32 %v4499, %v4502
        %v4505 = vshrl.u32 %v4481, 16
        %v4507 = vrot.slane %v4505, 1
        %v4508 = vshll.u32 %v4481, 16
        %v4510 = vrot.slane %v4508, 2
        %v4511 = vor.u32 %v4507, %v4510
        %v4512 = vsel %vm1004, %v4503, %v4511
        %v4514 = vshrl.u32 %v4482, 16
        %v4516 = vrot.slane %v4514, 1
        %v4517 = vshll.u32 %v4482, 16
        %v4519 = vrot.slane %v4517, 2
        %v4520 = vor.u32 %v4516, %v4519
        %v4522 = vshrl.u32 %v4483, 16
        %v4524 = vrot.slane %v4522, 1
        %v4525 = vshll.u32 %v4483, 16
        %v4527 = vrot.slane %v4525, 2
        %v4528 = vor.u32 %v4524, %v4527
        %v4529 = vsel %vm1004, %v4520, %v4528
        %v4531 = vshrl.u32 %v4484, 16
        %v4533 = vrot.slane %v4531, 1
        %v4534 = vshll.u32 %v4484, 16
        %v4536 = vrot.slane %v4534, 2
        %v4537 = vor.u32 %v4533, %v4536
        %v4539 = vshrl.u32 %v4485, 16
        %v4541 = vrot.slane %v4539, 1
        %v4542 = vshll.u32 %v4485, 16
        %v4544 = vrot.slane %v4542, 2
        %v4545 = vor.u32 %v4541, %v4544
        %v4546 = vsel %vm1004, %v4537, %v4545
        %v4548 = vshrl.u32 %v4486, 16
        %v4550 = vrot.slane %v4548, 1
        %v4551 = vshll.u32 %v4486, 16
        %v4553 = vrot.slane %v4551, 2
        %v4554 = vor.u32 %v4550, %v4553
        %v4556 = vshrl.u32 %v4487, 16
        %v4558 = vrot.slane %v4556, 1
        %v4559 = vshll.u32 %v4487, 16
        %v4561 = vrot.slane %v4559, 2
        %v4562 = vor.u32 %v4558, %v4561
        %v4563 = vsel %vm1004, %v4554, %v4562
        %v4565 = vshrl.u32 %v4488, 16
        %v4567 = vrot.slane %v4565, 1
        %v4568 = vshll.u32 %v4488, 16
        %v4570 = vrot.slane %v4568, 2
        %v4571 = vor.u32 %v4567, %v4570
        %v4573 = vshrl.u32 %v4489, 16
        %v4575 = vrot.slane %v4573, 1
        %v4576 = vshll.u32 %v4489, 16
        %v4578 = vrot.slane %v4576, 2
        %v4579 = vor.u32 %v4575, %v4578
        %v4580 = vsel %vm1004, %v4571, %v4579
        %v4582 = vshrl.u32 %v4490, 16
        %v4584 = vrot.slane %v4582, 1
        %v4585 = vshll.u32 %v4490, 16
        %v4587 = vrot.slane %v4585, 2
        %v4588 = vor.u32 %v4584, %v4587
        %v4590 = vshrl.u32 %v4491, 16
        %v4592 = vrot.slane %v4590, 1
        %v4593 = vshll.u32 %v4491, 16
        %v4595 = vrot.slane %v4593, 2
        %v4596 = vor.u32 %v4592, %v4595
        %v4597 = vsel %vm1004, %v4588, %v4596
        %v4599 = vshrl.u32 %v4492, 16
        %v4601 = vrot.slane %v4599, 1
        %v4602 = vshll.u32 %v4492, 16
        %v4604 = vrot.slane %v4602, 2
        %v4605 = vor.u32 %v4601, %v4604
        %v4607 = vshrl.u32 %v4493, 16
        %v4609 = vrot.slane %v4607, 1
        %v4610 = vshll.u32 %v4493, 16
        %v4612 = vrot.slane %v4610, 2
        %v4613 = vor.u32 %v4609, %v4612
        %v4614 = vsel %vm1004, %v4605, %v4613
        %v4616 = vshrl.u32 %v4494, 16
        %v4618 = vrot.slane %v4616, 1
        %v4619 = vshll.u32 %v4494, 16
        %v4621 = vrot.slane %v4619, 2
        %v4622 = vor.u32 %v4618, %v4621
        %v4624 = vshrl.u32 %v4495, 16
        %v4626 = vrot.slane %v4624, 1
        %v4627 = vshll.u32 %v4495, 16
        %v4629 = vrot.slane %v4627, 2
        %v4630 = vor.u32 %v4626, %v4629
        %v4631 = vsel %vm1004, %v4622, %v4630
        %4640 = vst [vmem:[#allocation5 + $0x18] sm:$0xff] %v4512
        %4641 = vst [vmem:[#allocation5 + $0x40] sm:$0xff] %v4529
        %4642 = vst [vmem:[#allocation5 + $0x68] sm:$0xff] %v4546
        %4643 = vst [vmem:[#allocation5 + $0x90] sm:$0xff] %v4563
        %4644 = vst [vmem:[#allocation5 + $0xb8] sm:$0xff] %v4580
        %4645 = vst [vmem:[#allocation5 + $0xe0] sm:$0xff] %v4597
        %4646 = vst [vmem:[#allocation5 + $0x108] sm:$0xff] %v4614
        %4647 = vst [vmem:[#allocation5 + $0x130] sm:$0xff] %v4631
        %v4648 = vld [vmem:[#allocation4] sm:$0xc]
        %v4649 = vld [vmem:[#allocation4 + $0x4] sm:$0xf]
        %v4650 = vld [vmem:[#allocation4 + $0x8] sm:$0x3]
        %v4651 = vld [vmem:[#allocation4 + $0xc] sm:$0xc]
        %v4652 = vld [vmem:[#allocation4 + $0x10] sm:$0xf]
        %v4653 = vld [vmem:[#allocation4 + $0x14] sm:$0x3]
        %v4654 = vld [vmem:[#allocation4 + $0x18] sm:$0xc]
        %v4655 = vld [vmem:[#allocation4 + $0x1c] sm:$0xf]
        %v4656 = vld [vmem:[#allocation4 + $0x20] sm:$0x3]
        %v4657 = vld [vmem:[#allocation4 + $0x24] sm:$0xc]
        %v4658 = vld [vmem:[#allocation4 + $0x28] sm:$0xf]
        %v4659 = vld [vmem:[#allocation4 + $0x2c] sm:$0x3]
        %v4660 = vld [vmem:[#allocation4 + $0x30] sm:$0xc]
        %v4661 = vld [vmem:[#allocation4 + $0x34] sm:$0xf]
        %v4662 = vld [vmem:[#allocation4 + $0x38] sm:$0x3]
        %v4663 = vld [vmem:[#allocation4 + $0x3c] sm:$0xc]
        %v4664 = vld [vmem:[#allocation4 + $0x40] sm:$0xf]
        %v4665 = vld [vmem:[#allocation4 + $0x44] sm:$0x3]
        %v4666 = vld [vmem:[#allocation4 + $0x48] sm:$0xc]
        %v4667 = vld [vmem:[#allocation4 + $0x4c] sm:$0xf]
        %v4668 = vld [vmem:[#allocation4 + $0x50] sm:$0x3]
        %v4669 = vld [vmem:[#allocation4 + $0x54] sm:$0xc]
        %v4670 = vld [vmem:[#allocation4 + $0x58] sm:$0xf]
        %v4671 = vld [vmem:[#allocation4 + $0x5c] sm:$0x3]
        %v4696 = vunpack.c.l.b16 %v4648
        %v4697 = vunpack.c.l.b16 %v4649
        %v4698 = vunpack.c.l.b16 %v4650
        %v4699 = vunpack.c.l.b16 %v4651
        %v4700 = vunpack.c.l.b16 %v4652
        %v4701 = vunpack.c.l.b16 %v4653
        %v4702 = vunpack.c.l.b16 %v4654
        %v4703 = vunpack.c.l.b16 %v4655
        %v4704 = vunpack.c.l.b16 %v4656
        %v4705 = vunpack.c.l.b16 %v4657
        %v4706 = vunpack.c.l.b16 %v4658
        %v4707 = vunpack.c.l.b16 %v4659
        %v4708 = vunpack.c.l.b16 %v4660
        %v4709 = vunpack.c.l.b16 %v4661
        %v4710 = vunpack.c.l.b16 %v4662
        %v4711 = vunpack.c.l.b16 %v4663
        %v4712 = vunpack.c.l.b16 %v4664
        %v4713 = vunpack.c.l.b16 %v4665
        %v4714 = vunpack.c.l.b16 %v4666
        %v4715 = vunpack.c.l.b16 %v4667
        %v4716 = vunpack.c.l.b16 %v4668
        %v4717 = vunpack.c.l.b16 %v4669
        %v4718 = vunpack.c.l.b16 %v4670
        %v4719 = vunpack.c.l.b16 %v4671
        %v4720 = vpack.c.b16 %v4697, %v4696
        %v4721 = vpack.c.b16 %v4698, %v4698
        %v4722 = vpack.c.b16 %v4700, %v4699
        %v4723 = vpack.c.b16 %v4701, %v4701
        %v4724 = vpack.c.b16 %v4703, %v4702
        %v4725 = vpack.c.b16 %v4704, %v4704
        %v4726 = vpack.c.b16 %v4706, %v4705
        %v4727 = vpack.c.b16 %v4707, %v4707
        %v4728 = vpack.c.b16 %v4709, %v4708
        %v4729 = vpack.c.b16 %v4710, %v4710
        %v4730 = vpack.c.b16 %v4712, %v4711
        %v4731 = vpack.c.b16 %v4713, %v4713
        %v4732 = vpack.c.b16 %v4715, %v4714
        %v4733 = vpack.c.b16 %v4716, %v4716
        %v4734 = vpack.c.b16 %v4718, %v4717
        %v4735 = vpack.c.b16 %v4719, %v4719
        %v4736 = vrot.slane %v4720, 2
        %v4737 = vrot.slane %v4721, 2
        %v4738 = vsel %vm1245, %v4736, %v4737
        %v4739 = vrot.slane %v4722, 2
        %v4740 = vrot.slane %v4723, 2
        %v4741 = vsel %vm1245, %v4739, %v4740
        %v4742 = vrot.slane %v4724, 2
        %v4743 = vrot.slane %v4725, 2
        %v4744 = vsel %vm1245, %v4742, %v4743
        %v4745 = vrot.slane %v4726, 2
        %v4746 = vrot.slane %v4727, 2
        %v4747 = vsel %vm1245, %v4745, %v4746
        %v4748 = vrot.slane %v4728, 2
        %v4749 = vrot.slane %v4729, 2
        %v4750 = vsel %vm1245, %v4748, %v4749
        %v4751 = vrot.slane %v4730, 2
        %v4752 = vrot.slane %v4731, 2
        %v4753 = vsel %vm1245, %v4751, %v4752
        %v4754 = vrot.slane %v4732, 2
        %v4755 = vrot.slane %v4733, 2
        %v4756 = vsel %vm1245, %v4754, %v4755
        %v4757 = vrot.slane %v4734, 2
        %v4758 = vrot.slane %v4735, 2
        %v4759 = vsel %vm1245, %v4757, %v4758
        %4768 = vst [vmem:[#allocation5 + $0x20] sm:$0xff] %v4738
        %4769 = vst [vmem:[#allocation5 + $0x48] sm:$0xff] %v4741
        %4770 = vst [vmem:[#allocation5 + $0x70] sm:$0xff] %v4744
        %4771 = vst [vmem:[#allocation5 + $0x98] sm:$0xff] %v4747
        %4772 = vst [vmem:[#allocation5 + $0xc0] sm:$0xff] %v4750
        %4773 = vst [vmem:[#allocation5 + $0xe8] sm:$0xff] %v4753
        %4774 = vst [vmem:[#allocation5 + $0x110] sm:$0xff] %v4756
        %4775 = vst [vmem:[#allocation5 + $0x138] sm:$0xff] %v4759
        %v4776 = vld [vmem:[#allocation5] sm:$0xff]
        %v4777 = vld [vmem:[#allocation5 + $0x8] sm:$0xff]
        %v4778 = vld [vmem:[#allocation5 + $0x10] sm:$0xff]
        %v4779 = vld [vmem:[#allocation5 + $0x18] sm:$0xff]
        %v4780 = vld [vmem:[#allocation5 + $0x20] sm:$0xff]
        %v4781 = vld [vmem:[#allocation5 + $0x28] sm:$0xff]
        %v4782 = vld [vmem:[#allocation5 + $0x30] sm:$0xff]
        %v4783 = vld [vmem:[#allocation5 + $0x38] sm:$0xff]
        %v4784 = vld [vmem:[#allocation5 + $0x40] sm:$0xff]
        %v4785 = vld [vmem:[#allocation5 + $0x48] sm:$0xff]
        %v4786 = vld [vmem:[#allocation5 + $0x50] sm:$0xff]
        %v4787 = vld [vmem:[#allocation5 + $0x58] sm:$0xff]
        %v4788 = vld [vmem:[#allocation5 + $0x60] sm:$0xff]
        %v4789 = vld [vmem:[#allocation5 + $0x68] sm:$0xff]
        %v4790 = vld [vmem:[#allocation5 + $0x70] sm:$0xff]
        %v4791 = vld [vmem:[#allocation5 + $0x78] sm:$0xff]
        %v4792 = vld [vmem:[#allocation5 + $0x80] sm:$0xff]
        %v4793 = vld [vmem:[#allocation5 + $0x88] sm:$0xff]
        %v4794 = vld [vmem:[#allocation5 + $0x90] sm:$0xff]
        %v4795 = vld [vmem:[#allocation5 + $0x98] sm:$0xff]
        %v4796 = vld [vmem:[#allocation5 + $0xa0] sm:$0xff]
        %v4797 = vld [vmem:[#allocation5 + $0xa8] sm:$0xff]
        %v4798 = vld [vmem:[#allocation5 + $0xb0] sm:$0xff]
        %v4799 = vld [vmem:[#allocation5 + $0xb8] sm:$0xff]
        %v4800 = vld [vmem:[#allocation5 + $0xc0] sm:$0xff]
        %v4801 = vld [vmem:[#allocation5 + $0xc8] sm:$0xff]
        %v4802 = vld [vmem:[#allocation5 + $0xd0] sm:$0xff]
        %v4803 = vld [vmem:[#allocation5 + $0xd8] sm:$0xff]
        %v4804 = vld [vmem:[#allocation5 + $0xe0] sm:$0xff]
        %v4805 = vld [vmem:[#allocation5 + $0xe8] sm:$0xff]
        %v4806 = vld [vmem:[#allocation5 + $0xf0] sm:$0xff]
        %v4807 = vld [vmem:[#allocation5 + $0xf8] sm:$0xff]
        %v4808 = vld [vmem:[#allocation5 + $0x100] sm:$0xff]
        %v4809 = vld [vmem:[#allocation5 + $0x108] sm:$0xff]
        %v4810 = vld [vmem:[#allocation5 + $0x110] sm:$0xff]
        %v4811 = vld [vmem:[#allocation5 + $0x118] sm:$0xff]
        %v4812 = vld [vmem:[#allocation5 + $0x120] sm:$0xff]
        %v4813 = vld [vmem:[#allocation5 + $0x128] sm:$0xff]
        %v4814 = vld [vmem:[#allocation5 + $0x130] sm:$0xff]
        %v4815 = vld [vmem:[#allocation5 + $0x138] sm:$0xff]
        %v4816 = vld [vmem:[%s5] sm:$0xf]
        %v4817 = vld [vmem:[%s5 + $0x4] sm:$0xf]
        %v4818 = vld [vmem:[%s5 + $0x8] sm:$0xf]
        %v4819 = vld [vmem:[%s5 + $0xc] sm:$0xf]
        %v4820 = vld [vmem:[%s5 + $0x10] sm:$0xf]
        %v4821 = vld [vmem:[%s5 + $0x14] sm:$0xf]
        %v4822 = vld [vmem:[%s5 + $0x18] sm:$0xf]
        %v4823 = vld [vmem:[%s5 + $0x1c] sm:$0xf]
        %v4824 = vld [vmem:[%s5 + $0x20] sm:$0xf]
        %v4825 = vld [vmem:[%s5 + $0x24] sm:$0xf]
        %v4826 = vld [vmem:[%s5 + $0x28] sm:$0xf]
        %v4827 = vld [vmem:[%s5 + $0x2c] sm:$0xf]
        %v4828 = vld [vmem:[%s5 + $0x30] sm:$0xf]
        %v4829 = vld [vmem:[%s5 + $0x34] sm:$0xf]
        %v4830 = vld [vmem:[%s5 + $0x38] sm:$0xf]
        %v4831 = vld [vmem:[%s5 + $0x3c] sm:$0xf]
        %v4832 = vld [vmem:[%s5 + $0x40] sm:$0xf]
        %v4833 = vld [vmem:[%s5 + $0x44] sm:$0xf]
        %v4834 = vld [vmem:[%s5 + $0x48] sm:$0xf]
        %v4835 = vld [vmem:[%s5 + $0x4c] sm:$0xf]
        %v4836 = vld [vmem:[%s5 + $0x50] sm:$0xf]
        %v4837 = vld [vmem:[%s5 + $0x54] sm:$0xf]
        %v4838 = vld [vmem:[%s5 + $0x58] sm:$0xf]
        %v4839 = vld [vmem:[%s5 + $0x5c] sm:$0xf]
        %v4840 = vld [vmem:[%s5 + $0x60] sm:$0xf]
        %v4841 = vld [vmem:[%s5 + $0x64] sm:$0xf]
        %v4842 = vld [vmem:[%s5 + $0x68] sm:$0xf]
        %v4843 = vld [vmem:[%s5 + $0x6c] sm:$0xf]
        %v4844 = vld [vmem:[%s5 + $0x70] sm:$0xf]
        %v4845 = vld [vmem:[%s5 + $0x74] sm:$0xf]
        %v4846 = vld [vmem:[%s5 + $0x78] sm:$0xf]
        %v4847 = vld [vmem:[%s5 + $0x7c] sm:$0xf]
        %v4848 = vld [vmem:[%s5 + $0x80] sm:$0xf]
        %v4849 = vld [vmem:[%s5 + $0x84] sm:$0xf]
        %v4850 = vld [vmem:[%s5 + $0x88] sm:$0xf]
        %v4851 = vld [vmem:[%s5 + $0x8c] sm:$0xf]
        %v4852 = vld [vmem:[%s5 + $0x90] sm:$0xf]
        %v4853 = vld [vmem:[%s5 + $0x94] sm:$0xf]
        %v4854 = vld [vmem:[%s5 + $0x98] sm:$0xf]
        %v4855 = vld [vmem:[%s5 + $0x9c] sm:$0xf]
        %v4856 = vld [vmem:[%s5 + $0xa0] sm:$0xf]
        %v4857 = vld [vmem:[%s5 + $0xa4] sm:$0xf]
        %v4858 = vld [vmem:[%s5 + $0xa8] sm:$0xf]
        %v4859 = vld [vmem:[%s5 + $0xac] sm:$0xf]
        %v4860 = vld [vmem:[%s5 + $0xb0] sm:$0xf]
        %v4861 = vld [vmem:[%s5 + $0xb4] sm:$0xf]
        %v4862 = vld [vmem:[%s5 + $0xb8] sm:$0xf]
        %v4863 = vld [vmem:[%s5 + $0xbc] sm:$0xf]
        %v4864 = vld [vmem:[%s5 + $0xc0] sm:$0xf]
        %v4865 = vld [vmem:[%s5 + $0xc4] sm:$0xf]
        %v4866 = vld [vmem:[%s5 + $0xc8] sm:$0xf]
        %v4867 = vld [vmem:[%s5 + $0xcc] sm:$0xf]
        %v4868 = vld [vmem:[%s5 + $0xd0] sm:$0xf]
        %v4869 = vld [vmem:[%s5 + $0xd4] sm:$0xf]
        %v4870 = vld [vmem:[%s5 + $0xd8] sm:$0xf]
        %v4871 = vld [vmem:[%s5 + $0xdc] sm:$0xf]
        %v4872 = vld [vmem:[%s5 + $0xe0] sm:$0xf]
        %v4873 = vld [vmem:[%s5 + $0xe4] sm:$0xf]
        %v4874 = vld [vmem:[%s5 + $0xe8] sm:$0xf]
        %v4875 = vld [vmem:[%s5 + $0xec] sm:$0xf]
        %v4876 = vld [vmem:[%s5 + $0xf0] sm:$0xf]
        %v4877 = vld [vmem:[%s5 + $0xf4] sm:$0xf]
        %v4878 = vld [vmem:[%s5 + $0xf8] sm:$0xf]
        %v4879 = vld [vmem:[%s5 + $0xfc] sm:$0xf]
        %v4880 = vld [vmem:[%s5 + $0x100] sm:$0xf]
        %v4881 = vld [vmem:[%s5 + $0x104] sm:$0xf]
        %v4882 = vld [vmem:[%s5 + $0x108] sm:$0xf]
        %v4883 = vld [vmem:[%s5 + $0x10c] sm:$0xf]
        %v4884 = vld [vmem:[%s5 + $0x110] sm:$0xf]
        %v4885 = vld [vmem:[%s5 + $0x114] sm:$0xf]
        %v4886 = vld [vmem:[%s5 + $0x118] sm:$0xf]
        %v4887 = vld [vmem:[%s5 + $0x11c] sm:$0xf]
        %v4888 = vld [vmem:[%s5 + $0x120] sm:$0xf]
        %v4889 = vld [vmem:[%s5 + $0x124] sm:$0xf]
        %v4890 = vld [vmem:[%s5 + $0x128] sm:$0xf]
        %v4891 = vld [vmem:[%s5 + $0x12c] sm:$0xf]
        %v4892 = vld [vmem:[%s5 + $0x130] sm:$0xf]
        %v4893 = vld [vmem:[%s5 + $0x134] sm:$0xf]
        %v4894 = vld [vmem:[%s5 + $0x138] sm:$0xf]
        %v4895 = vld [vmem:[%s5 + $0x13c] sm:$0xf]
        %v4896 = vld [vmem:[%s6] sm:$0x1]
        %v4898 = vlaneseq
        %v4899 = vshrl.u32 %v4898, 7
        %v4900 = vsub.s32 0, %v4899
        %v4901 = vrot.slane %v4896, %v4900
        %v4983 = vunpack.c.l.b16 %v4816
        %v4984 = vunpack.c.l.b16 %v4817
        %v4985 = vunpack.c.l.b16 %v4818
        %v4986 = vunpack.c.l.b16 %v4819
        %v4987 = vunpack.c.l.b16 %v4820
        %v4988 = vunpack.c.l.b16 %v4821
        %v4989 = vunpack.c.l.b16 %v4822
        %v4990 = vunpack.c.l.b16 %v4823
        %v4991 = vunpack.c.l.b16 %v4824
        %v4992 = vunpack.c.l.b16 %v4825
        %v4993 = vunpack.c.l.b16 %v4826
        %v4994 = vunpack.c.l.b16 %v4827
        %v4995 = vunpack.c.l.b16 %v4828
        %v4996 = vunpack.c.l.b16 %v4829
        %v4997 = vunpack.c.l.b16 %v4830
        %v4998 = vunpack.c.l.b16 %v4831
        %v4999 = vunpack.c.l.b16 %v4832
        %v5000 = vunpack.c.l.b16 %v4833
        %v5001 = vunpack.c.l.b16 %v4834
        %v5002 = vunpack.c.l.b16 %v4835
        %v5003 = vunpack.c.l.b16 %v4836
        %v5004 = vunpack.c.l.b16 %v4837
        %v5005 = vunpack.c.l.b16 %v4838
        %v5006 = vunpack.c.l.b16 %v4839
        %v5007 = vunpack.c.l.b16 %v4840
        %v5008 = vunpack.c.l.b16 %v4841
        %v5009 = vunpack.c.l.b16 %v4842
        %v5010 = vunpack.c.l.b16 %v4843
        %v5011 = vunpack.c.l.b16 %v4844
        %v5012 = vunpack.c.l.b16 %v4845
        %v5013 = vunpack.c.l.b16 %v4846
        %v5014 = vunpack.c.l.b16 %v4847
        %v5015 = vunpack.c.l.b16 %v4848
        %v5016 = vunpack.c.l.b16 %v4849
        %v5017 = vunpack.c.l.b16 %v4850
        %v5018 = vunpack.c.l.b16 %v4851
        %v5019 = vunpack.c.l.b16 %v4852
        %v5020 = vunpack.c.l.b16 %v4853
        %v5021 = vunpack.c.l.b16 %v4854
        %v5022 = vunpack.c.l.b16 %v4855
        %v5023 = vunpack.c.l.b16 %v4856
        %v5024 = vunpack.c.l.b16 %v4857
        %v5025 = vunpack.c.l.b16 %v4858
        %v5026 = vunpack.c.l.b16 %v4859
        %v5027 = vunpack.c.l.b16 %v4860
        %v5028 = vunpack.c.l.b16 %v4861
        %v5029 = vunpack.c.l.b16 %v4862
        %v5030 = vunpack.c.l.b16 %v4863
        %v5031 = vunpack.c.l.b16 %v4864
        %v5032 = vunpack.c.l.b16 %v4865
        %v5033 = vunpack.c.l.b16 %v4866
        %v5034 = vunpack.c.l.b16 %v4867
        %v5035 = vunpack.c.l.b16 %v4868
        %v5036 = vunpack.c.l.b16 %v4869
        %v5037 = vunpack.c.l.b16 %v4870
        %v5038 = vunpack.c.l.b16 %v4871
        %v5039 = vunpack.c.l.b16 %v4872
        %v5040 = vunpack.c.l.b16 %v4873
        %v5041 = vunpack.c.l.b16 %v4874
        %v5042 = vunpack.c.l.b16 %v4875
        %v5043 = vunpack.c.l.b16 %v4876
        %v5044 = vunpack.c.l.b16 %v4877
        %v5045 = vunpack.c.l.b16 %v4878
        %v5046 = vunpack.c.l.b16 %v4879
        %v5047 = vunpack.c.l.b16 %v4880
        %v5048 = vunpack.c.l.b16 %v4881
        %v5049 = vunpack.c.l.b16 %v4882
        %v5050 = vunpack.c.l.b16 %v4883
        %v5051 = vunpack.c.l.b16 %v4884
        %v5052 = vunpack.c.l.b16 %v4885
        %v5053 = vunpack.c.l.b16 %v4886
        %v5054 = vunpack.c.l.b16 %v4887
        %v5055 = vunpack.c.l.b16 %v4888
        %v5056 = vunpack.c.l.b16 %v4889
        %v5057 = vunpack.c.l.b16 %v4890
        %v5058 = vunpack.c.l.b16 %v4891
        %v5059 = vunpack.c.l.b16 %v4892
        %v5060 = vunpack.c.l.b16 %v4893
        %v5061 = vunpack.c.l.b16 %v4894
        %v5062 = vunpack.c.l.b16 %v4895
        %v5063 = vpack.c.b16 %v4984, %v4983
        %v5064 = vpack.c.b16 %v4986, %v4985
        %v5065 = vpack.c.b16 %v4988, %v4987
        %v5066 = vpack.c.b16 %v4990, %v4989
        %v5067 = vpack.c.b16 %v4992, %v4991
        %v5068 = vpack.c.b16 %v4994, %v4993
        %v5069 = vpack.c.b16 %v4996, %v4995
        %v5070 = vpack.c.b16 %v4998, %v4997
        %v5071 = vpack.c.b16 %v5000, %v4999
        %v5072 = vpack.c.b16 %v5002, %v5001
        %v5073 = vpack.c.b16 %v5004, %v5003
        %v5074 = vpack.c.b16 %v5006, %v5005
        %v5075 = vpack.c.b16 %v5008, %v5007
        %v5076 = vpack.c.b16 %v5010, %v5009
        %v5077 = vpack.c.b16 %v5012, %v5011
        %v5078 = vpack.c.b16 %v5014, %v5013
        %v5079 = vpack.c.b16 %v5016, %v5015
        %v5080 = vpack.c.b16 %v5018, %v5017
        %v5081 = vpack.c.b16 %v5020, %v5019
        %v5082 = vpack.c.b16 %v5022, %v5021
        %v5083 = vpack.c.b16 %v5024, %v5023
        %v5084 = vpack.c.b16 %v5026, %v5025
        %v5085 = vpack.c.b16 %v5028, %v5027
        %v5086 = vpack.c.b16 %v5030, %v5029
        %v5087 = vpack.c.b16 %v5032, %v5031
        %v5088 = vpack.c.b16 %v5034, %v5033
        %v5089 = vpack.c.b16 %v5036, %v5035
        %v5090 = vpack.c.b16 %v5038, %v5037
        %v5091 = vpack.c.b16 %v5040, %v5039
        %v5092 = vpack.c.b16 %v5042, %v5041
        %v5093 = vpack.c.b16 %v5044, %v5043
        %v5094 = vpack.c.b16 %v5046, %v5045
        %v5095 = vpack.c.b16 %v5048, %v5047
        %v5096 = vpack.c.b16 %v5050, %v5049
        %v5097 = vpack.c.b16 %v5052, %v5051
        %v5098 = vpack.c.b16 %v5054, %v5053
        %v5099 = vpack.c.b16 %v5056, %v5055
        %v5100 = vpack.c.b16 %v5058, %v5057
        %v5101 = vpack.c.b16 %v5060, %v5059
        %v5102 = vpack.c.b16 %v5062, %v5061
        %5143 = vmatprep.subr.bf16.mxu0 0
        %5144 = vmatpush1.bf16.msra.mxu0 %v5063
        %5145 = vmatprep.subr.bf16.mxu0 0
        %5146 = vmatpush1.bf16.msra.mxu0 %v5064
        %5147 = vmatprep.subr.bf16.mxu0 0
        %5148 = vmatpush1.bf16.msra.mxu0 %v5065
        %5149 = vmatprep.subr.bf16.mxu0 0
        %5150 = vmatpush1.bf16.msra.mxu0 %v5066
        %5151 = vmatprep.subr.bf16.mxu0 0
        %5152 = vmatpush1.bf16.msra.mxu0 %v5067
        %5153 = vmatprep.subr.bf16.mxu0 0
        %5154 = vmatpush1.bf16.msra.mxu0 %v5068
        %5155 = vmatprep.subr.bf16.mxu0 0
        %5156 = vmatpush1.bf16.msra.mxu0 %v5069
        %5157 = vmatprep.subr.bf16.mxu0 0
        %5158 = vmatpush1.bf16.msra.mxu0 %v5070
        %5159 = vmatprep.subr.bf16.mxu0 0
        %5160 = vmatpush1.bf16.msra.mxu0 %v5071
        %5161 = vmatprep.subr.bf16.mxu0 0
        %5162 = vmatpush1.bf16.msra.mxu0 %v5072
        %5163 = vmatprep.subr.bf16.mxu0 0
        %5164 = vmatpush1.bf16.msra.mxu0 %v5073
        %5165 = vmatprep.subr.bf16.mxu0 0
        %5166 = vmatpush1.bf16.msra.mxu0 %v5074
        %5167 = vmatprep.subr.bf16.mxu0 0
        %5168 = vmatpush1.bf16.msra.mxu0 %v5075
        %5169 = vmatprep.subr.bf16.mxu0 0
        %5170 = vmatpush1.bf16.msra.mxu0 %v5076
        %5171 = vmatprep.subr.bf16.mxu0 0
        %5172 = vmatpush1.bf16.msra.mxu0 %v5077
        %5173 = vmatprep.subr.bf16.mxu0 0
        %5174 = vmatpush1.bf16.msra.mxu0 %v5078
        %5175 = vmatprep.mubr.bf16.mxu0 %v4777
        %5176 = vmatmul.mubr.bf16.gmra.mrb[0].mxu0 %v4776
        %v5177 = vpop.f32.mrb[0].mxu0
        %v5178 = vadd.f32 %v4901, %v5177
        %v5179 = vpop.f32.mrb[0].mxu0
        %v5180 = vpop.f32.mrb[0].mxu0
        %v5181 = vadd.f32 %v4901, %v5180
        %v5182 = vpop.f32.mrb[0].mxu0
        %5183 = vmatprep.mubr.bf16.mxu0 %v4782
        %5184 = vmatmul.mubr.bf16.gmra.mrb[0].mxu0 %v4781
        %v5185 = vpop.f32.mrb[0].mxu0
        %v5186 = vadd.f32 %v4901, %v5185
        %v5187 = vpop.f32.mrb[0].mxu0
        %v5188 = vpop.f32.mrb[0].mxu0
        %v5189 = vadd.f32 %v4901, %v5188
        %v5190 = vpop.f32.mrb[0].mxu0
        %5191 = vmatprep.mubr.bf16.mxu0 %v4787
        %5192 = vmatmul.mubr.bf16.gmra.mrb[0].mxu0 %v4786
        %v5193 = vpop.f32.mrb[0].mxu0
        %v5194 = vadd.f32 %v4901, %v5193
        %v5195 = vpop.f32.mrb[0].mxu0
        %v5196 = vpop.f32.mrb[0].mxu0
        %v5197 = vadd.f32 %v4901, %v5196
        %v5198 = vpop.f32.mrb[0].mxu0
        %5199 = vmatprep.mubr.bf16.mxu0 %v4792
        %5200 = vmatmul.mubr.bf16.gmra.mrb[0].mxu0 %v4791
        %v5201 = vpop.f32.mrb[0].mxu0
        %v5202 = vadd.f32 %v4901, %v5201
        %v5203 = vpop.f32.mrb[0].mxu0
        %v5204 = vpop.f32.mrb[0].mxu0
        %v5205 = vadd.f32 %v4901, %v5204
        %v5206 = vpop.f32.mrb[0].mxu0
        %5207 = vmatprep.mubr.bf16.mxu0 %v4797
        %5208 = vmatmul.mubr.bf16.gmra.mrb[0].mxu0 %v4796
        %v5209 = vpop.f32.mrb[0].mxu0
        %v5210 = vadd.f32 %v4901, %v5209
        %v5211 = vpop.f32.mrb[0].mxu0
        %v5212 = vpop.f32.mrb[0].mxu0
        %v5213 = vadd.f32 %v4901, %v5212
        %v5214 = vpop.f32.mrb[0].mxu0
        %5215 = vmatprep.mubr.bf16.mxu0 %v4802
        %5216 = vmatmul.mubr.bf16.gmra.mrb[0].mxu0 %v4801
        %v5217 = vpop.f32.mrb[0].mxu0
        %v5218 = vadd.f32 %v4901, %v5217
        %v5219 = vpop.f32.mrb[0].mxu0
        %v5220 = vpop.f32.mrb[0].mxu0
        %v5221 = vadd.f32 %v4901, %v5220
        %v5222 = vpop.f32.mrb[0].mxu0
        %5223 = vmatprep.mubr.bf16.mxu0 %v4807
        %5224 = vmatmul.mubr.bf16.gmra.mrb[0].mxu0 %v4806
        %v5225 = vpop.f32.mrb[0].mxu0
        %v5226 = vadd.f32 %v4901, %v5225
        %v5227 = vpop.f32.mrb[0].mxu0
        %v5228 = vpop.f32.mrb[0].mxu0
        %v5229 = vadd.f32 %v4901, %v5228
        %v5230 = vpop.f32.mrb[0].mxu0
        %5231 = vmatprep.mubr.bf16.mxu0 %v4812
        %5232 = vmatmul.mubr.bf16.gmra.mrb[0].mxu0 %v4811
        %v5233 = vpop.f32.mrb[0].mxu0
        %v5234 = vadd.f32 %v4901, %v5233
        %v5235 = vpop.f32.mrb[0].mxu0
        %v5236 = vpop.f32.mrb[0].mxu0
        %v5237 = vadd.f32 %v4901, %v5236
        %v5238 = vpop.f32.mrb[0].mxu0
        %5239 = vdwg.mxu0
        %5240 = vmatprep.subr.bf16.mxu0 0
        %5241 = vmatpush1.bf16.msra.mxu0 %v5079
        %5242 = vmatprep.subr.bf16.mxu0 0
        %5243 = vmatpush1.bf16.msra.mxu0 %v5080
        %5244 = vmatprep.subr.bf16.mxu0 0
        %5245 = vmatpush1.bf16.msra.mxu0 %v5081
        %5246 = vmatprep.subr.bf16.mxu0 0
        %5247 = vmatpush1.bf16.msra.mxu0 %v5082
        %5248 = vmatprep.subr.bf16.mxu0 0
        %5249 = vmatpush1.bf16.msra.mxu0 %v5083
        %5250 = vmatprep.subr.bf16.mxu0 0
        %5251 = vmatpush1.bf16.msra.mxu0 %v5084
        %5252 = vmatprep.subr.bf16.mxu0 0
        %5253 = vmatpush1.bf16.msra.mxu0 %v5085
        %5254 = vmatprep.subr.bf16.mxu0 0
        %5255 = vmatpush1.bf16.msra.mxu0 %v5086
        %5256 = vmatprep.subr.bf16.mxu0 0
        %5257 = vmatpush1.bf16.msra.mxu0 %v5087
        %5258 = vmatprep.subr.bf16.mxu0 0
        %5259 = vmatpush1.bf16.msra.mxu0 %v5088
        %5260 = vmatprep.subr.bf16.mxu0 0
        %5261 = vmatpush1.bf16.msra.mxu0 %v5089
        %5262 = vmatprep.subr.bf16.mxu0 0
        %5263 = vmatpush1.bf16.msra.mxu0 %v5090
        %5264 = vmatprep.subr.bf16.mxu0 0
        %5265 = vmatpush1.bf16.msra.mxu0 %v5091
        %5266 = vmatprep.subr.bf16.mxu0 0
        %5267 = vmatpush1.bf16.msra.mxu0 %v5092
        %5268 = vmatprep.subr.bf16.mxu0 0
        %5269 = vmatpush1.bf16.msra.mxu0 %v5093
        %5270 = vmatprep.subr.bf16.mxu0 0
        %5271 = vmatpush1.bf16.msra.mxu0 %v5094
        %5272 = vmatprep.mubr.bf16.mxu0 %v4779
        %5273 = vmatmul.mubr.bf16.gmra.mrb[0].mxu0 %v4778
        %v5274 = vpop.f32.mrb[0].mxu0
        %v5275 = vadd.f32 %v5178, %v5274
        %v5276 = vpop.f32.mrb[0].mxu0
        %v5277 = vpop.f32.mrb[0].mxu0
        %v5278 = vadd.f32 %v5181, %v5277
        %v5279 = vpop.f32.mrb[0].mxu0
        %5280 = vmatprep.mubr.bf16.mxu0 %v4784
        %5281 = vmatmul.mubr.bf16.gmra.mrb[0].mxu0 %v4783
        %v5282 = vpop.f32.mrb[0].mxu0
        %v5283 = vadd.f32 %v5186, %v5282
        %v5284 = vpop.f32.mrb[0].mxu0
        %v5285 = vpop.f32.mrb[0].mxu0
        %v5286 = vadd.f32 %v5189, %v5285
        %v5287 = vpop.f32.mrb[0].mxu0
        %5288 = vmatprep.mubr.bf16.mxu0 %v4789
        %5289 = vmatmul.mubr.bf16.gmra.mrb[0].mxu0 %v4788
        %v5290 = vpop.f32.mrb[0].mxu0
        %v5291 = vadd.f32 %v5194, %v5290
        %v5292 = vpop.f32.mrb[0].mxu0
        %v5293 = vpop.f32.mrb[0].mxu0
        %v5294 = vadd.f32 %v5197, %v5293
        %v5295 = vpop.f32.mrb[0].mxu0
        %5296 = vmatprep.mubr.bf16.mxu0 %v4794
        %5297 = vmatmul.mubr.bf16.gmra.mrb[0].mxu0 %v4793
        %v5298 = vpop.f32.mrb[0].mxu0
        %v5299 = vadd.f32 %v5202, %v5298
        %v5300 = vpop.f32.mrb[0].mxu0
        %v5301 = vpop.f32.mrb[0].mxu0
        %v5302 = vadd.f32 %v5205, %v5301
        %v5303 = vpop.f32.mrb[0].mxu0
        %5304 = vmatprep.mubr.bf16.mxu0 %v4799
        %5305 = vmatmul.mubr.bf16.gmra.mrb[0].mxu0 %v4798
        %v5306 = vpop.f32.mrb[0].mxu0
        %v5307 = vadd.f32 %v5210, %v5306
        %v5308 = vpop.f32.mrb[0].mxu0
        %v5309 = vpop.f32.mrb[0].mxu0
        %v5310 = vadd.f32 %v5213, %v5309
        %v5311 = vpop.f32.mrb[0].mxu0
        %5312 = vmatprep.mubr.bf16.mxu0 %v4804
        %5313 = vmatmul.mubr.bf16.gmra.mrb[0].mxu0 %v4803
        %v5314 = vpop.f32.mrb[0].mxu0
        %v5315 = vadd.f32 %v5218, %v5314
        %v5316 = vpop.f32.mrb[0].mxu0
        %v5317 = vpop.f32.mrb[0].mxu0
        %v5318 = vadd.f32 %v5221, %v5317
        %v5319 = vpop.f32.mrb[0].mxu0
        %5320 = vmatprep.mubr.bf16.mxu0 %v4809
        %5321 = vmatmul.mubr.bf16.gmra.mrb[0].mxu0 %v4808
        %v5322 = vpop.f32.mrb[0].mxu0
        %v5323 = vadd.f32 %v5226, %v5322
        %v5324 = vpop.f32.mrb[0].mxu0
        %v5325 = vpop.f32.mrb[0].mxu0
        %v5326 = vadd.f32 %v5229, %v5325
        %v5327 = vpop.f32.mrb[0].mxu0
        %5328 = vmatprep.mubr.bf16.mxu0 %v4814
        %5329 = vmatmul.mubr.bf16.gmra.mrb[0].mxu0 %v4813
        %v5330 = vpop.f32.mrb[0].mxu0
        %v5331 = vadd.f32 %v5234, %v5330
        %v5332 = vpop.f32.mrb[0].mxu0
        %v5333 = vpop.f32.mrb[0].mxu0
        %v5334 = vadd.f32 %v5237, %v5333
        %v5335 = vpop.f32.mrb[0].mxu0
        %5336 = vdwg.mxu0
        %5337 = vmatprep.subr.bf16.mxu0 0
        %5338 = vmatpush1.bf16.msra.mxu0 %v5095
        %5339 = vmatprep.subr.bf16.mxu0 0
        %5340 = vmatpush1.bf16.msra.mxu0 %v5096
        %5341 = vmatprep.subr.bf16.mxu0 0
        %5342 = vmatpush1.bf16.msra.mxu0 %v5097
        %5343 = vmatprep.subr.bf16.mxu0 0
        %5344 = vmatpush1.bf16.msra.mxu0 %v5098
        %5345 = vmatprep.subr.bf16.mxu0 0
        %5346 = vmatpush1.bf16.msra.mxu0 %v5099
        %5347 = vmatprep.subr.bf16.mxu0 0
        %5348 = vmatpush1.bf16.msra.mxu0 %v5100
        %5349 = vmatprep.subr.bf16.mxu0 0
        %5350 = vmatpush1.bf16.msra.mxu0 %v5101
        %5351 = vmatprep.subr.bf16.mxu0 0
        %5352 = vmatpush1.bf16.msra.mxu0 %v5102
        %5353 = vmatprep.subr.bf16.mxu0 0
        %5354 = vmatpush1.bf16.msra.mxu0 0
        %5355 = vmatprep.subr.bf16.mxu0 0
        %5356 = vmatpush1.bf16.msra.mxu0 0
        %5357 = vmatprep.subr.bf16.mxu0 0
        %5358 = vmatpush1.bf16.msra.mxu0 0
        %5359 = vmatprep.subr.bf16.mxu0 0
        %5360 = vmatpush1.bf16.msra.mxu0 0
        %5361 = vmatprep.subr.bf16.mxu0 0
        %5362 = vmatpush1.bf16.msra.mxu0 0
        %5363 = vmatprep.subr.bf16.mxu0 0
        %5364 = vmatpush1.bf16.msra.mxu0 0
        %5365 = vmatprep.subr.bf16.mxu0 0
        %5366 = vmatpush1.bf16.msra.mxu0 0
        %5367 = vmatprep.subr.bf16.mxu0 0
        %5368 = vmatpush1.bf16.msra.mxu0 0
        %5369 = vmatprep.mubr.bf16.mxu0 0
        %5370 = vmatmul.mubr.bf16.gmra.mrb[0].mxu0 %v4780
        %v5371 = vpop.f32.mrb[0].mxu0
        %v5372 = vadd.f32 %v5275, %v5371
        %v5373 = vpop.f32.mrb[0].mxu0
        %v5374 = vpop.f32.mrb[0].mxu0
        %v5375 = vadd.f32 %v5278, %v5374
        %v5376 = vpop.f32.mrb[0].mxu0
        %5377 = vmatprep.mubr.bf16.mxu0 0
        %5378 = vmatmul.mubr.bf16.gmra.mrb[0].mxu0 %v4785
        %v5379 = vpop.f32.mrb[0].mxu0
        %v5380 = vadd.f32 %v5283, %v5379
        %v5381 = vpop.f32.mrb[0].mxu0
        %v5382 = vpop.f32.mrb[0].mxu0
        %v5383 = vadd.f32 %v5286, %v5382
        %v5384 = vpop.f32.mrb[0].mxu0
        %5385 = vmatprep.mubr.bf16.mxu0 0
        %5386 = vmatmul.mubr.bf16.gmra.mrb[0].mxu0 %v4790
        %v5387 = vpop.f32.mrb[0].mxu0
        %v5388 = vadd.f32 %v5291, %v5387
        %v5389 = vpop.f32.mrb[0].mxu0
        %v5390 = vpop.f32.mrb[0].mxu0
        %v5391 = vadd.f32 %v5294, %v5390
        %v5392 = vpop.f32.mrb[0].mxu0
        %5393 = vmatprep.mubr.bf16.mxu0 0
        %5394 = vmatmul.mubr.bf16.gmra.mrb[0].mxu0 %v4795
        %v5395 = vpop.f32.mrb[0].mxu0
        %v5396 = vadd.f32 %v5299, %v5395
        %v5397 = vpop.f32.mrb[0].mxu0
        %v5398 = vpop.f32.mrb[0].mxu0
        %v5399 = vadd.f32 %v5302, %v5398
        %v5400 = vpop.f32.mrb[0].mxu0
        %5401 = vmatprep.mubr.bf16.mxu0 0
        %5402 = vmatmul.mubr.bf16.gmra.mrb[0].mxu0 %v4800
        %v5403 = vpop.f32.mrb[0].mxu0
        %v5404 = vadd.f32 %v5307, %v5403
        %v5405 = vpop.f32.mrb[0].mxu0
        %v5406 = vpop.f32.mrb[0].mxu0
        %v5407 = vadd.f32 %v5310, %v5406
        %v5408 = vpop.f32.mrb[0].mxu0
        %5409 = vmatprep.mubr.bf16.mxu0 0
        %5410 = vmatmul.mubr.bf16.gmra.mrb[0].mxu0 %v4805
        %v5411 = vpop.f32.mrb[0].mxu0
        %v5412 = vadd.f32 %v5315, %v5411
        %v5413 = vpop.f32.mrb[0].mxu0
        %v5414 = vpop.f32.mrb[0].mxu0
        %v5415 = vadd.f32 %v5318, %v5414
        %v5416 = vpop.f32.mrb[0].mxu0
        %5417 = vmatprep.mubr.bf16.mxu0 0
        %5418 = vmatmul.mubr.bf16.gmra.mrb[0].mxu0 %v4810
        %v5419 = vpop.f32.mrb[0].mxu0
        %v5420 = vadd.f32 %v5323, %v5419
        %v5421 = vpop.f32.mrb[0].mxu0
        %v5422 = vpop.f32.mrb[0].mxu0
        %v5423 = vadd.f32 %v5326, %v5422
        %v5424 = vpop.f32.mrb[0].mxu0
        %5425 = vmatprep.mubr.bf16.mxu0 0
        %5426 = vmatmul.mubr.bf16.gmra.mrb[0].mxu0 %v4815
        %v5427 = vpop.f32.mrb[0].mxu0
        %v5428 = vadd.f32 %v5331, %v5427
        %v5429 = vpop.f32.mrb[0].mxu0
        %v5430 = vpop.f32.mrb[0].mxu0
        %v5431 = vadd.f32 %v5334, %v5430
        %v5432 = vpop.f32.mrb[0].mxu0
        %5433 = vdwg.mxu0
        %v5434 = vmax.f32 %v5372, 0.0
        %v5435 = vmax.f32 %v5375, 0.0
        %v5436 = vmax.f32 %v5380, 0.0
        %v5437 = vmax.f32 %v5383, 0.0
        %v5438 = vmax.f32 %v5388, 0.0
        %v5439 = vmax.f32 %v5391, 0.0
        %v5440 = vmax.f32 %v5396, 0.0
        %v5441 = vmax.f32 %v5399, 0.0
        %v5442 = vmax.f32 %v5404, 0.0
        %v5443 = vmax.f32 %v5407, 0.0
        %v5444 = vmax.f32 %v5412, 0.0
        %v5445 = vmax.f32 %v5415, 0.0
        %v5446 = vmax.f32 %v5420, 0.0
        %v5447 = vmax.f32 %v5423, 0.0
        %v5448 = vmax.f32 %v5428, 0.0
        %v5449 = vmax.f32 %v5431, 0.0
        %v5450 = vadd.f32 %v5434, %v5435
        %v5451 = vrot.slane %v5450, 4
        %v5452 = vadd.f32 %v5450, %v5451
        %v5453 = vrot.slane %v5452, 2
        %v5454 = vadd.f32 %v5452, %v5453
        %v5455 = vrot.slane %v5454, 1
        %v5456 = vadd.f32 %v5454, %v5455
        %v5457 = vadd.f32 %v5436, %v5437
        %v5458 = vrot.slane %v5457, 4
        %v5459 = vadd.f32 %v5457, %v5458
        %v5460 = vrot.slane %v5459, 2
        %v5461 = vadd.f32 %v5459, %v5460
        %v5462 = vrot.slane %v5461, 1
        %v5463 = vadd.f32 %v5461, %v5462
        %v5464 = vadd.f32 %v5438, %v5439
        %v5465 = vrot.slane %v5464, 4
        %v5466 = vadd.f32 %v5464, %v5465
        %v5467 = vrot.slane %v5466, 2
        %v5468 = vadd.f32 %v5466, %v5467
        %v5469 = vrot.slane %v5468, 1
        %v5470 = vadd.f32 %v5468, %v5469
        %v5471 = vadd.f32 %v5440, %v5441
        %v5472 = vrot.slane %v5471, 4
        %v5473 = vadd.f32 %v5471, %v5472
        %v5474 = vrot.slane %v5473, 2
        %v5475 = vadd.f32 %v5473, %v5474
        %v5476 = vrot.slane %v5475, 1
        %v5477 = vadd.f32 %v5475, %v5476
        %v5478 = vadd.f32 %v5442, %v5443
        %v5479 = vrot.slane %v5478, 4
        %v5480 = vadd.f32 %v5478, %v5479
        %v5481 = vrot.slane %v5480, 2
        %v5482 = vadd.f32 %v5480, %v5481
        %v5483 = vrot.slane %v5482, 1
        %v5484 = vadd.f32 %v5482, %v5483
        %v5485 = vadd.f32 %v5444, %v5445
        %v5486 = vrot.slane %v5485, 4
        %v5487 = vadd.f32 %v5485, %v5486
        %v5488 = vrot.slane %v5487, 2
        %v5489 = vadd.f32 %v5487, %v5488
        %v5490 = vrot.slane %v5489, 1
        %v5491 = vadd.f32 %v5489, %v5490
        %v5492 = vadd.f32 %v5446, %v5447
        %v5493 = vrot.slane %v5492, 4
        %v5494 = vadd.f32 %v5492, %v5493
        %v5495 = vrot.slane %v5494, 2
        %v5496 = vadd.f32 %v5494, %v5495
        %v5497 = vrot.slane %v5496, 1
        %v5498 = vadd.f32 %v5496, %v5497
        %v5499 = vadd.f32 %v5448, %v5449
        %v5500 = vrot.slane %v5499, 4
        %v5501 = vadd.f32 %v5499, %v5500
        %v5502 = vrot.slane %v5501, 2
        %v5503 = vadd.f32 %v5501, %v5502
        %v5504 = vrot.slane %v5503, 1
        %v5505 = vadd.f32 %v5503, %v5504
        %v5506 = vmul.f32 %v5456, %v3839
        %v5507 = vmul.f32 %v5463, %v3839
        %v5508 = vmul.f32 %v5470, %v3839
        %v5509 = vmul.f32 %v5477, %v3839
        %v5510 = vmul.f32 %v5484, %v3839
        %v5511 = vmul.f32 %v5491, %v3839
        %v5512 = vmul.f32 %v5498, %v3839
        %v5513 = vmul.f32 %v5505, %v3839
        %v5522 = vsel %vm3856, %v5507, %v5506
        %v5523 = vsel %vm3858, %v5508, %v5522
        %v5524 = vsel %vm3860, %v5509, %v5523
        %v5525 = vsel %vm3862, %v5510, %v5524
        %v5526 = vsel %vm3864, %v5511, %v5525
        %v5527 = vsel %vm3866, %v5512, %v5526
        %v5528 = vsel %vm3868, %v5513, %v5527
        %5530 = vst [vmem:[%s357] sm:$0xff] %v5528
        %s5531 = sand.u32 %s184, 1
        %s5532 = scalar_lea.sflag [#allocation7], %s5531
        %s5533 = sand.u32 %s184, 1
        %s5534 = smul.addr %s5533, 128
        %s5535 = scalar_lea.vmem [#allocation6], %s5534
        %p5536 = scmp.lt.s32.totalorder %s24, 1
        %s5537 = scalar_select %p5536, %s24, 1
        %s5538 = smul.addr %s5537, 8
        %s5539 = scalar_lea.vmem %s8, %s5538
        %p5540 = scmp.lt.s32.totalorder %s24, 1
        %s5541 = scalar_select %p5540, %s24, 1
        %s5542 = smul.addr %s5541, 8
        %s5543 = scalar_lea.vmem %s9, %s5542
        // Predicated region
        $region49: #{wav2vec_model_pallas.1} parent=47 // pred_check
          %p5544 = pneg %p194
        $region50: #{wav2vec_model_pallas.1} parent=47 // pred_check_branch
          %5546 = sbr.rel (%p5544) target = $region52
        $region51: #{wav2vec_model_pallas.1} parent=47 // pred_region
          %s5547 = smul.u32 8, %s24
          %s5549 = ssub.s32 2048, 2048
          %5550 = vsyncadd %s5532, %s5549
          %s5551 = smul.addr %s5547, 2
          %s5552 = smul.addr %s5551, 128
          %s5553 = scalar_lea.hbm %s7, %s5552
          %s5554 = sshll.u32 %s5535, 4
          %s5555 = int_to_ptr.vmem [resolvable:$true] %s5554
          %5560 = dma.vmem_to_hbm [thread:$0]  %s5555, 2048, %s5553, %s5532, 128, 128, 8
        $region52: #{wav2vec_model_pallas.1} parent=47 // pred_fallthru
          _
        // Predicated region
        $region53: #{wav2vec_model_pallas.1} parent=47 // pred_check
          %p5561 = pneg %p220
        $region54: #{wav2vec_model_pallas.1} parent=47 // pred_check_branch
          %5563 = sbr.rel (%p5561) target = $region56
        $region55: #{wav2vec_model_pallas.1} parent=47 // pred_region
          _
        $region56: #{wav2vec_model_pallas.1} parent=47 // pred_fallthru
          _
        // Predicated region
        $region57: #{wav2vec_model_pallas.1} parent=47 // pred_check
          %p5564 = pneg %p246
        $region58: #{wav2vec_model_pallas.1} parent=47 // pred_check_branch
          %5566 = sbr.rel (%p5564) target = $region60
        $region59: #{wav2vec_model_pallas.1} parent=47 // pred_region
          _
        $region60: #{wav2vec_model_pallas.1} parent=47 // pred_fallthru
          _
      $region48: #{wav2vec_model_pallas.1} parent=5 // pred_fallthru
        _
      %p5567 = scmp.le.s32.totalorder 2, %s19
      // Predicated region
      $region61: #{wav2vec_model_pallas.1} parent=5 // pred_check
        %p5568 = pneg %p5567
      $region62: #{wav2vec_model_pallas.1} parent=5 // pred_check_branch
        %5570 = sbr.rel (%p5568) target = $region64
      $region63: #{wav2vec_model_pallas.1} parent=5 // pred_region
        %s5571 = ssub.s32 %s19, 2
        // Predicated region
        $region65: #{wav2vec_model_pallas.1} parent=63 // pred_check
          %p5572 = pneg %p200
        $region66: #{wav2vec_model_pallas.1} parent=63 // pred_check_branch
          %5574 = sbr.rel (%p5572) target = $region68
        $region67: #{wav2vec_model_pallas.1} parent=63 // pred_region
          %s5575 = sand.u32 %s185, 1
          %s5576 = scalar_lea.sflag [#allocation7], %s5575
          %s5577 = sand.u32 %s185, 1
          %s5578 = smul.addr %s5577, 128
          %s5579 = scalar_lea.vmem [#allocation6], %s5578
          %5580 = dma.done %s5576, 2048
        $region68: #{wav2vec_model_pallas.1} parent=63 // pred_fallthru
          _
        // Predicated region
        $region69: #{wav2vec_model_pallas.1} parent=63 // pred_check
          %p5581 = pneg %p226
        $region70: #{wav2vec_model_pallas.1} parent=63 // pred_check_branch
          %5583 = sbr.rel (%p5581) target = $region72
        $region71: #{wav2vec_model_pallas.1} parent=63 // pred_region
          %p5584 = scmp.lt.s32.totalorder %s25, 1
          %s5585 = scalar_select %p5584, %s25, 1
          %s5586 = smul.addr %s5585, 8
          %s5587 = scalar_lea.vmem %s8, %s5586
        $region72: #{wav2vec_model_pallas.1} parent=63 // pred_fallthru
          _
        // Predicated region
        $region73: #{wav2vec_model_pallas.1} parent=63 // pred_check
          %p5588 = pneg %p252
        $region74: #{wav2vec_model_pallas.1} parent=63 // pred_check_branch
          %5590 = sbr.rel (%p5588) target = $region76
        $region75: #{wav2vec_model_pallas.1} parent=63 // pred_region
          %p5591 = scmp.lt.s32.totalorder %s25, 1
          %s5592 = scalar_select %p5591, %s25, 1
          %s5593 = smul.addr %s5592, 8
          %s5594 = scalar_lea.vmem %s9, %s5593
        $region76: #{wav2vec_model_pallas.1} parent=63 // pred_fallthru
          _
      $region64: #{wav2vec_model_pallas.1} parent=5 // pred_fallthru
        _
    $region6: #{wav2vec_model_pallas.1} parent=1 // loop_footer
      %s23 = sadd.s32 1, %s19
    $region7: #{wav2vec_model_pallas.1} parent=1 // loop_footer_branch
      %18 = sbr.rel target = $region3
    $region8: #{wav2vec_model_pallas.1} parent=1 // loop_exit
      _
    %5595 = vsyncpa [#allocation7], 1
    %s5596 = scalar_lea.sflag [#allocation7], 1
    %5597 = vsyncpa %s5596, 1

</llo_original>
